<compile_context>
chip_gen: v6e
topology: v6e:2x2x1
jax: 0.10.0
libtpu: 0.0.40
codegen_flags: <defaults>
</compile_context>

<pallas_src>
import jax
import jax.numpy as jnp
import numpy as np
from jax.experimental import pallas as pl
from jax.experimental.pallas import tpu as pltpu

EPS = 1e-5  # nn.InstanceNorm2d default eps, affine=False


def _round_up(v, m):
    return (v + m - 1) // m * m


def _make_cresbloc_kernel(H, W, Wp, C):
    """Kernel body with static geometry baked in (flat zero-extended frame)."""
    P_ext = (H + 2) * Wp        # extended frame: 1 top + H data + 1 bottom rows
    P = H * Wp                  # compute/output frame: data rows only
    inv_hw = 1.0 / float(H * W)

    def conv3x3(ext, w_flat):
        # ext:    (P_ext, C) f32 extended frame, zeros at every pad position.
        # w_flat: (9C, C)    bf16, rows ordered (ky, kx, cin) row-major (HWIO).
        # dx = -1/0/+1 column shifts: XLU rolls on the flat sublane axis; the
        # wrap-around only ever reads from / lands in zero padding.
        v_m1 = pltpu.roll(ext, 1, axis=0).astype(jnp.bfloat16)            # E[q-1]
        v_0 = ext.astype(jnp.bfloat16)
        v_p1 = pltpu.roll(ext, P_ext - 1, axis=0).astype(jnp.bfloat16)    # E[q+1]
        dx3 = jnp.concatenate([v_m1, v_0, v_p1], axis=1)     # (P_ext, 3C) bf16
        # dy = -1/0/+1 row shifts: tile-aligned static slices (offsets are
        # multiples of Wp, itself a multiple of 16).
        patches = jnp.concatenate(
            [dx3[0:P], dx3[Wp:Wp + P], dx3[2 * Wp:2 * Wp + P]],
            axis=1)                                           # (P, 9C) bf16
        # single long-K MXU dot, f32 accumulation
        return jnp.dot(patches, w_flat, preferred_element_type=jnp.float32)

    def kernel(xp_ref, g_ref, w1_ref, w2_ref, o_ref):
        # xp_ref : (1, P_ext, C) f32  zero-extended flat frame of the image
        # g_ref  : (1, 1, C)     f32  per-batch gamma(s) row
        # w1/w2  : (9C, C)       bf16 im2col-flattened 3x3 conv weights
        # o_ref  : (1, P, C)     f32  output (data rows of the flat frame)
        xp = xp_ref[0]                                        # (P_ext, C)

        # interior (real-pixel) mask over the compute frame; only the column
        # condition matters because the compute frame holds exactly the H
        # data rows (no top/bottom pad rows).
        col = jax.lax.broadcasted_iota(jnp.int32, (H, Wp, C), 1)
        mask = (col < W).astype(jnp.float32).reshape(P, C)    # (P, C)

        x_win = xp[Wp:Wp + P, :]                              # residual (f32)

        def inst_norm(h):
            # masked two-pass stats over the H*W real pixels, in f32
            m = jnp.sum(h * mask, axis=0, keepdims=True) * inv_hw     # (1, C)
            c = (h - m) * mask
            var = jnp.sum(c * c, axis=0, keepdims=True) * inv_hw
            return (h - m) * jax.lax.rsqrt(var + EPS)

        # conv1 -> InstanceNorm -> ReLU; mask re-zeroes the pad columns so h
        # can be re-embedded into the extended frame as conv2's input.
        h = jnp.maximum(inst_norm(conv3x3(xp, w1_ref[...])), 0.0) * mask

        # re-embed h into the extended frame (zero halo rows) for conv2
        zrow = jnp.zeros((Wp, C), jnp.float32)
        h_ext = jnp.concatenate([zrow, h, zrow], axis=0)      # (P_ext, C)

        out = conv3x3(h_ext, w2_ref[...]) + x_win             # residual add

        g = g_ref[0]                                          # (1, C)
        # pad columns of o hold finite garbage; the wrapper slices them off.
        o_ref[0] = jnp.maximum(inst_norm(out) * g, 0.0)

    return kernel


def cresbloc_forward(x_nchw, s_nchw, w1_hwio, w2_hwio, wg):
    """x_nchw: (N, C, H, W) f32; s_nchw: (N, S, 1, 1) f32; conv weights HWIO."""
    N, C, H, W = x_nchw.shape
    S = s_nchw.shape[1]
    Wp = _round_up(W + 2, 16)      # flat row width: multiple of 16 (bf16 tiles)
    P_ext = (H + 2) * Wp
    P = H * Wp

    x = jnp.transpose(x_nchw, (0, 2, 3, 1)).astype(jnp.float32)       # NHWC
    # extended flat frame: 1 zero row top, 1 bottom, right pad cols, flatten.
    xp = jnp.pad(x, ((0, 0), (1, 1), (0, Wp - W), (0, 0))).reshape(N, P_ext, C)

    # gamma(s): tiny (N,S)@(S,C) matmul hoisted out of the kernel
    g = (s_nchw.reshape(N, S).astype(jnp.float32)
         @ wg.astype(jnp.float32)).reshape(N, 1, C)

    # (3,3,Cin,Cout) -> (9C, C), rows = (ky, kx, cin) row-major, bf16 weights
    w1r = w1_hwio.reshape(9 * C, C).astype(jnp.bfloat16)
    w2r = w2_hwio.reshape(9 * C, C).astype(jnp.bfloat16)

    # per-generation VMEM limit (~40 MiB on v7x, ~80-96 MiB on v5e/v6e)
    try:
        cap = pltpu.get_tpu_info().vmem_capacity_bytes
        vmem_limit = int(min(cap * 5 // 8, 96 * 1024 * 1024))
    except Exception:
        vmem_limit = 48 * 1024 * 1024

    out_flat = pl.pallas_call(
        _make_cresbloc_kernel(H, W, Wp, C),
        out_shape=jax.ShapeDtypeStruct((N, P, C), jnp.float32),
        grid_spec=pltpu.PrefetchScalarGridSpec(
            num_scalar_prefetch=0,
            grid=(N,),
            in_specs=[
                pl.BlockSpec((1, P_ext, C), lambda n: (n, 0, 0)),  # image frame
                pl.BlockSpec((1, 1, C), lambda n: (n, 0, 0)),      # gamma row
                pl.BlockSpec((9 * C, C), lambda n: (0, 0),         # conv1 wts
                             pipeline_mode=pl.Buffered(1)),
                pl.BlockSpec((9 * C, C), lambda n: (0, 0),         # conv2 wts
                             pipeline_mode=pl.Buffered(1)),
            ],
            out_specs=pl.BlockSpec((1, P, C), lambda n: (n, 0, 0)),
        ),
        compiler_params=pltpu.CompilerParams(
            dimension_semantics=("parallel",),
            vmem_limit_bytes=vmem_limit),
    )(xp, g, w1r, w2r)

    out = out_flat.reshape(N, H, Wp, C)[:, :, :W, :]
    return jnp.transpose(out, (0, 3, 1, 2))                   # back to NCHW


def ref_forward(x_nchw, s_nchw, w1_hwio, w2_hwio, wg):
    """Pure-JAX reference matching the PyTorch forward."""
    x = jnp.transpose(x_nchw, (0, 2, 3, 1))

    def conv3(h, w):
        return jax.lax.conv_general_dilated(
            h, w, (1, 1), 'SAME', dimension_numbers=('NHWC', 'HWIO', 'NHWC'))

    def inorm(h):
        m = jnp.mean(h, axis=(1, 2), keepdims=True)
        v = jnp.mean((h - m) ** 2, axis=(1, 2), keepdims=True)
        return (h - m) * jax.lax.rsqrt(v + EPS)

    h = jnp.maximum(inorm(conv3(x, w1_hwio)), 0.0)
    out = conv3(h, w2_hwio) + x
    g = s_nchw[:, :, 0, 0] @ wg  # (N, C)
    y = jnp.maximum(inorm(out) * g[:, None, None, :], 0.0)
    return jnp.transpose(y, (0, 3, 1, 2))


if __name__ == "__main__":
    # nf=128, ns=10 match the module defaults (review: benchmark at full lane
    # width, not a C=32 stand-in); spatial kept small for the demo.
    N, NF, NS, H, W = 2, 128, 10, 16, 16

    key = jax.random.PRNGKey(0)
    k1, k2, k3, k4, k5 = jax.random.split(key, 5)
    x = jax.random.normal(k1, (N, NF, H, W), jnp.float32)
    s = jax.random.normal(k2, (N, NS, 1, 1), jnp.float32)
    # deterministic synthetic weights (conv weights in HWIO layout)
    w1 = jax.random.normal(k3, (3, 3, NF, NF), jnp.float32) * 0.05
    w2 = jax.random.normal(k4, (3, 3, NF, NF), jnp.float32) * 0.05
    wg = jax.random.normal(k5, (NS, NF), jnp.float32) * 0.1

    fwd = jax.jit(cresbloc_forward)
    y = jax.block_until_ready(fwd(x, s, w1, w2, wg))
    y_ref = jax.block_until_ready(ref_forward(x, s, w1, w2, wg))
    # bf16 MXU operands (K = 9*128) vs f32 reference -> loose tolerance
    np.testing.assert_allclose(np.asarray(y), np.asarray(y_ref),
                               rtol=3e-2, atol=3e-2)
    print("KERNEL_OK")
</pallas_src>

<mosaic_0001>
module attributes {stable_mosaic.version = 11 : i64} {
  func.func @kernel(%arg0: i32, %arg1: memref<1x576x128xf32, #tpu.memory_space<vmem>>, %arg2: memref<1x1x128xf32, #tpu.memory_space<vmem>>, %arg3: memref<1152x128xbf16, #tpu.memory_space<vmem>>, %arg4: memref<1152x128xbf16, #tpu.memory_space<vmem>>, %arg5: memref<1x512x128xf32, #tpu.memory_space<vmem>>) attributes {dimension_semantics = [#tpu.dimension_semantics<parallel>], iteration_bounds = array<i64: 2>, scalar_prefetch = 0 : i64, scratch_operands = 0 : i64, tpu.core_type = #tpu.core_type<tc>, window_params = [{transform_indices = @transform_0, window_bounds = array<i64: 1, 576, 128>}, {transform_indices = @transform_1, window_bounds = array<i64: 1, 1, 128>}, {pipeline_mode = #tpu.pipeline_mode<synchronous>, transform_indices = @transform_2, window_bounds = array<i64: 1152, 128>}, {pipeline_mode = #tpu.pipeline_mode<synchronous>, transform_indices = @transform_3, window_bounds = array<i64: 1152, 128>}, {transform_indices = @transform_4, window_bounds = array<i64: 1, 512, 128>}]} {
    %c0 = arith.constant 0 : index
    %c0_0 = arith.constant 0 : index
    %c0_1 = arith.constant 0 : index
    %0 = vector.load %arg1[%c0, %c0_0, %c0_1] : memref<1x576x128xf32, #tpu.memory_space<vmem>>, vector<1x576x128xf32>
    %1 = vector.shape_cast %0 : vector<1x576x128xf32> to vector<576x128xf32>
    %2 = tpu.iota {dimensions = array<i32: 1>} : vector<16x32x128xi32>
    %c16_i32 = arith.constant 16 : i32
    %3 = vector.broadcast %c16_i32 : i32 to vector<16x32x128xi32>
    %4 = arith.cmpi slt, %2, %3 : vector<16x32x128xi32>
    %5 = arith.extui %4 : vector<16x32x128xi1> to vector<16x32x128xi32>
    %6 = arith.sitofp %5 : vector<16x32x128xi32> to vector<16x32x128xf32>
    %7 = vector.shape_cast %6 : vector<16x32x128xf32> to vector<512x128xf32>
    %8 = vector.extract_strided_slice %1 {offsets = [32, 0], sizes = [512, 128], strides = [1, 1]} : vector<576x128xf32> to vector<512x128xf32>
    %c0_2 = arith.constant 0 : index
    %c0_3 = arith.constant 0 : index
    %9 = vector.load %arg3[%c0_2, %c0_3] : memref<1152x128xbf16, #tpu.memory_space<vmem>>, vector<1152x128xbf16>
    %c1_i32 = arith.constant 1 : i32
    %10 = tpu.dynamic_rotate %1 by %c1_i32 dim 0 : vector<576x128xf32>, i32 -> vector<576x128xf32>
    %11 = arith.truncf %10 : vector<576x128xf32> to vector<576x128xbf16>
    %12 = arith.truncf %1 : vector<576x128xf32> to vector<576x128xbf16>
    %c575_i32 = arith.constant 575 : i32
    %13 = tpu.dynamic_rotate %1 by %c575_i32 dim 0 : vector<576x128xf32>, i32 -> vector<576x128xf32>
    %14 = arith.truncf %13 : vector<576x128xf32> to vector<576x128xbf16>
    %15 = tpu.concatenate %11, %12, %14 in 1 : vector<576x128xbf16>, vector<576x128xbf16>, vector<576x128xbf16> -> vector<576x384xbf16>
    %16 = vector.extract_strided_slice %15 {offsets = [0, 0], sizes = [512, 384], strides = [1, 1]} : vector<576x384xbf16> to vector<512x384xbf16>
    %17 = vector.extract_strided_slice %15 {offsets = [32, 0], sizes = [512, 384], strides = [1, 1]} : vector<576x384xbf16> to vector<512x384xbf16>
    %18 = vector.extract_strided_slice %15 {offsets = [64, 0], sizes = [512, 384], strides = [1, 1]} : vector<576x384xbf16> to vector<512x384xbf16>
    %19 = tpu.concatenate %16, %17, %18 in 1 : vector<512x384xbf16>, vector<512x384xbf16>, vector<512x384xbf16> -> vector<512x1152xbf16>
    %cst = arith.constant dense<0.000000e+00> : vector<512x128xf32>
    %20 = tpu.matmul %19, %9, %cst {dimension_numbers = #tpu.dot_dimension_numbers<[1], [0], [0], [1], [0, 0, 1, 1], [], []>} : vector<512x1152xbf16>, vector<1152x128xbf16>, vector<512x128xf32> -> vector<512x128xf32>
    %21 = arith.mulf %20, %7 : vector<512x128xf32>
    %cst_4 = arith.constant dense<0.000000e+00> : vector<128xf32>
    %22 = vector.multi_reduction <add>, %21, %cst_4 [0] : vector<512x128xf32> to vector<128xf32>
    %23 = vector.shape_cast %22 : vector<128xf32> to vector<1x128xf32>
    %cst_5 = arith.constant 3.906250e-03 : f32
    %24 = vector.broadcast %cst_5 : f32 to vector<1x128xf32>
    %25 = arith.mulf %23, %24 : vector<1x128xf32>
    %26 = vector.broadcast %25 : vector<1x128xf32> to vector<512x128xf32>
    %27 = arith.subf %20, %26 : vector<512x128xf32>
    %28 = arith.mulf %27, %7 : vector<512x128xf32>
    %29 = arith.mulf %28, %28 : vector<512x128xf32>
    %cst_6 = arith.constant dense<0.000000e+00> : vector<128xf32>
    %30 = vector.multi_reduction <add>, %29, %cst_6 [0] : vector<512x128xf32> to vector<128xf32>
    %31 = vector.shape_cast %30 : vector<128xf32> to vector<1x128xf32>
    %cst_7 = arith.constant 3.906250e-03 : f32
    %32 = vector.broadcast %cst_7 : f32 to vector<1x128xf32>
    %33 = arith.mulf %31, %32 : vector<1x128xf32>
    %34 = vector.broadcast %25 : vector<1x128xf32> to vector<512x128xf32>
    %35 = arith.subf %20, %34 : vector<512x128xf32>
    %cst_8 = arith.constant 9.99999974E-6 : f32
    %36 = vector.broadcast %cst_8 : f32 to vector<1x128xf32>
    %37 = arith.addf %33, %36 : vector<1x128xf32>
    %38 = math.rsqrt %37 : vector<1x128xf32>
    %39 = vector.broadcast %38 : vector<1x128xf32> to vector<512x128xf32>
    %40 = arith.mulf %35, %39 : vector<512x128xf32>
    %cst_9 = arith.constant 0.000000e+00 : f32
    %41 = vector.broadcast %cst_9 : f32 to vector<512x128xf32>
    %42 = arith.maximumf %40, %41 : vector<512x128xf32>
    %43 = arith.mulf %42, %7 : vector<512x128xf32>
    %cst_10 = arith.constant 0.000000e+00 : f32
    %44 = vector.broadcast %cst_10 : f32 to vector<32x128xf32>
    %45 = tpu.concatenate %44, %43, %44 in 0 : vector<32x128xf32>, vector<512x128xf32>, vector<32x128xf32> -> vector<576x128xf32>
    %c0_11 = arith.constant 0 : index
    %c0_12 = arith.constant 0 : index
    %46 = vector.load %arg4[%c0_11, %c0_12] : memref<1152x128xbf16, #tpu.memory_space<vmem>>, vector<1152x128xbf16>
    %c1_i32_13 = arith.constant 1 : i32
    %47 = tpu.dynamic_rotate %45 by %c1_i32_13 dim 0 : vector<576x128xf32>, i32 -> vector<576x128xf32>
    %48 = arith.truncf %47 : vector<576x128xf32> to vector<576x128xbf16>
    %49 = arith.truncf %45 : vector<576x128xf32> to vector<576x128xbf16>
    %c575_i32_14 = arith.constant 575 : i32
    %50 = tpu.dynamic_rotate %45 by %c575_i32_14 dim 0 : vector<576x128xf32>, i32 -> vector<576x128xf32>
    %51 = arith.truncf %50 : vector<576x128xf32> to vector<576x128xbf16>
    %52 = tpu.concatenate %48, %49, %51 in 1 : vector<576x128xbf16>, vector<576x128xbf16>, vector<576x128xbf16> -> vector<576x384xbf16>
    %53 = vector.extract_strided_slice %52 {offsets = [0, 0], sizes = [512, 384], strides = [1, 1]} : vector<576x384xbf16> to vector<512x384xbf16>
    %54 = vector.extract_strided_slice %52 {offsets = [32, 0], sizes = [512, 384], strides = [1, 1]} : vector<576x384xbf16> to vector<512x384xbf16>
    %55 = vector.extract_strided_slice %52 {offsets = [64, 0], sizes = [512, 384], strides = [1, 1]} : vector<576x384xbf16> to vector<512x384xbf16>
    %56 = tpu.concatenate %53, %54, %55 in 1 : vector<512x384xbf16>, vector<512x384xbf16>, vector<512x384xbf16> -> vector<512x1152xbf16>
    %cst_15 = arith.constant dense<0.000000e+00> : vector<512x128xf32>
    %57 = tpu.matmul %56, %46, %cst_15 {dimension_numbers = #tpu.dot_dimension_numbers<[1], [0], [0], [1], [0, 0, 1, 1], [], []>} : vector<512x1152xbf16>, vector<1152x128xbf16>, vector<512x128xf32> -> vector<512x128xf32>
    %58 = arith.addf %57, %8 : vector<512x128xf32>
    %c0_16 = arith.constant 0 : index
    %c0_17 = arith.constant 0 : index
    %c0_18 = arith.constant 0 : index
    %59 = vector.load %arg2[%c0_16, %c0_17, %c0_18] : memref<1x1x128xf32, #tpu.memory_space<vmem>>, vector<1x1x128xf32>
    %60 = vector.shape_cast %59 : vector<1x1x128xf32> to vector<1x128xf32>
    %61 = arith.mulf %58, %7 : vector<512x128xf32>
    %cst_19 = arith.constant dense<0.000000e+00> : vector<128xf32>
    %62 = vector.multi_reduction <add>, %61, %cst_19 [0] : vector<512x128xf32> to vector<128xf32>
    %63 = vector.shape_cast %62 : vector<128xf32> to vector<1x128xf32>
    %cst_20 = arith.constant 3.906250e-03 : f32
    %64 = vector.broadcast %cst_20 : f32 to vector<1x128xf32>
    %65 = arith.mulf %63, %64 : vector<1x128xf32>
    %66 = vector.broadcast %65 : vector<1x128xf32> to vector<512x128xf32>
    %67 = arith.subf %58, %66 : vector<512x128xf32>
    %68 = arith.mulf %67, %7 : vector<512x128xf32>
    %69 = arith.mulf %68, %68 : vector<512x128xf32>
    %cst_21 = arith.constant dense<0.000000e+00> : vector<128xf32>
    %70 = vector.multi_reduction <add>, %69, %cst_21 [0] : vector<512x128xf32> to vector<128xf32>
    %71 = vector.shape_cast %70 : vector<128xf32> to vector<1x128xf32>
    %cst_22 = arith.constant 3.906250e-03 : f32
    %72 = vector.broadcast %cst_22 : f32 to vector<1x128xf32>
    %73 = arith.mulf %71, %72 : vector<1x128xf32>
    %74 = vector.broadcast %65 : vector<1x128xf32> to vector<512x128xf32>
    %75 = arith.subf %58, %74 : vector<512x128xf32>
    %cst_23 = arith.constant 9.99999974E-6 : f32
    %76 = vector.broadcast %cst_23 : f32 to vector<1x128xf32>
    %77 = arith.addf %73, %76 : vector<1x128xf32>
    %78 = math.rsqrt %77 : vector<1x128xf32>
    %79 = vector.broadcast %78 : vector<1x128xf32> to vector<512x128xf32>
    %80 = arith.mulf %75, %79 : vector<512x128xf32>
    %81 = vector.broadcast %60 : vector<1x128xf32> to vector<512x128xf32>
    %82 = arith.mulf %80, %81 : vector<512x128xf32>
    %cst_24 = arith.constant 0.000000e+00 : f32
    %83 = vector.broadcast %cst_24 : f32 to vector<512x128xf32>
    %84 = arith.maximumf %82, %83 : vector<512x128xf32>
    %c0_25 = arith.constant 0 : index
    %c0_26 = arith.constant 0 : index
    %c0_27 = arith.constant 0 : index
    %85 = vector.load %arg5[%c0_25, %c0_26, %c0_27] : memref<1x512x128xf32, #tpu.memory_space<vmem>>, vector<1x512x128xf32>
    %86 = vector.shape_cast %85 : vector<1x512x128xf32> to vector<512x128xf32>
    %87 = vector.shape_cast %84 : vector<512x128xf32> to vector<1x512x128xf32>
    tpu.vector_store %arg5[%c0_25, %c0_26, %c0_27], %87 {strides = array<i32>} : memref<1x512x128xf32, #tpu.memory_space<vmem>>, vector<1x512x128xf32>,
    return
  }
  func.func @transform_0(%arg0: i32) -> (i32, i32, i32) {
    %c0_i32 = arith.constant 0 : i32
    %c0_i32_0 = arith.constant 0 : i32
    %c0_i32_1 = arith.constant 0 : i32
    return %arg0, %c0_i32, %c0_i32_0 : i32, i32, i32
  }
  func.func @transform_1(%arg0: i32) -> (i32, i32, i32) {
    %c0_i32 = arith.constant 0 : i32
    %c0_i32_0 = arith.constant 0 : i32
    %c0_i32_1 = arith.constant 0 : i32
    return %arg0, %c0_i32, %c0_i32_0 : i32, i32, i32
  }
  func.func @transform_2(%arg0: i32) -> (i32, i32) {
    %c0_i32 = arith.constant 0 : i32
    %c0_i32_0 = arith.constant 0 : i32
    %c0_i32_1 = arith.constant 0 : i32
    return %c0_i32, %c0_i32_0 : i32, i32
  }
  func.func @transform_3(%arg0: i32) -> (i32, i32) {
    %c0_i32 = arith.constant 0 : i32
    %c0_i32_0 = arith.constant 0 : i32
    %c0_i32_1 = arith.constant 0 : i32
    return %c0_i32, %c0_i32_0 : i32, i32
  }
  func.func @transform_4(%arg0: i32) -> (i32, i32, i32) {
    %c0_i32 = arith.constant 0 : i32
    %c0_i32_0 = arith.constant 0 : i32
    %c0_i32_1 = arith.constant 0 : i32
    return %arg0, %c0_i32, %c0_i32_0 : i32, i32, i32
  }
}

</mosaic_0001>

<llo_original>
// kernel: cresbloc_forward.1
$region0: #{cresbloc_forward.1}
  #allocation0 [shape = 'u32[]', space=smem, size = 0x4, offset = 0x4, fixed_abs, tag = 'smem constant byte address 0x4 - core index']
  #allocation1 [shape = 'u32[144,128]{1,0:T(1,128)}', space=vmem, size = 0x12000, scoped, tag = 'internal scratch']
  %s0 = inlined_call_operand.vmem [shape: f32[2,576,128], index: 0, kind: input, shape index: {}]
  %s1 = inlined_call_operand.vmem [shape: f32[2,1,128], index: 1, kind: input, shape index: {}]
  %s2 = inlined_call_operand.vmem [shape: bf16[1152,128], index: 2, kind: input, shape index: {}]
  %s3 = inlined_call_operand.vmem [shape: bf16[1152,128], index: 3, kind: input, shape index: {}]
  %s4 = inlined_call_operand.vmem [shape: f32[2,512,128], index: 4, kind: output, shape index: {}]
  %s5 = sld [smem:[#allocation0]]
  $region49: #{cresbloc_forward.1} parent=0
    _
  %s7 = ssub.s32 1, %s5
  %s8 = scalar_select 0, %s7, %s5
  loop: start=0, step=1, limit=4
  $region2: #{cresbloc_forward.1} parent=0 // loop_pre_header
    _
  $region3: #{cresbloc_forward.1} parent=0 // loop_header
    %s10 = sphi 0, %s14
    %p11 = scmp.ge.s32.totalorder %s10, 4
    %s20 = sphi 0, %s22
    %s23 = sphi 0, %s20
    %s24 = sphi 0, %s23
    %s40 = sphi 0, %s24
    %s46 = sphi 0, %s48
    %s49 = sphi 0, %s46
    %s50 = sphi 0, %s49
    %s66 = sphi 0, %s50
    %s70 = sphi 0, %s70
    %s72 = sphi 0, %s70
    %s73 = sphi 0, %s72
    %s87 = sphi 0, %s73
    %s91 = sphi 0, %s91
    %s93 = sphi 0, %s91
    %s94 = sphi 0, %s93
    %s108 = sphi 0, %s94
    %s114 = sphi 0, %s116
    %s117 = sphi 0, %s114
    %s118 = sphi 0, %s117
    %s134 = sphi 0, %s118
  $region4: #{cresbloc_forward.1} parent=0 // loop_header_branch
    %13 = sbr.rel (%p11) target = $region8
  $region5: #{cresbloc_forward.1} parent=0 // loop_body
    %s15 = ssub.s32 %s10, 1
    %s16 = ssub.s32 %s10, 2
    %s17 = sadd.s32 %s10, 1
    %s18 = ssub.s32 %s10, %s17
    %p19 = scmp.eq.s32.totalorder %s18, 0
    %s21 = sadd.s32 %s20, 1
    %s22 = scalar_select %p19, %s20, %s21
    %p25 = pneg %p19
    %p26 = scmp.eq.s32.totalorder %s10, 1
    %p27 = por %p25, %p26
    %p28 = scmp.ne.s32.totalorder %s20, %s23
    %p29 = scmp.eq.s32.totalorder %s10, 0
    %p30 = por %p28, %p29
    %p31 = scmp.ne.s32.totalorder %s20, %s23
    %p32 = scmp.eq.s32.totalorder %s15, 1
    %p33 = por %p31, %p32
    %p34 = scmp.ne.s32.totalorder %s23, %s24
    %p35 = scmp.eq.s32.totalorder %s15, 0
    %p36 = por %p34, %p35
    %p37 = scmp.ne.s32.totalorder %s23, %s24
    %p38 = scmp.eq.s32.totalorder %s16, 1
    %p39 = por %p37, %p38
    %p41 = scmp.ne.s32.totalorder %s24, %s40
    %p42 = scmp.eq.s32.totalorder %s16, 0
    %p43 = por %p41, %p42
    %s44 = ssub.s32 %s10, %s17
    %p45 = scmp.eq.s32.totalorder %s44, 0
    %s47 = sadd.s32 %s46, 1
    %s48 = scalar_select %p45, %s46, %s47
    %p51 = pneg %p45
    %p52 = scmp.eq.s32.totalorder %s10, 1
    %p53 = por %p51, %p52
    %p54 = scmp.ne.s32.totalorder %s46, %s49
    %p55 = scmp.eq.s32.totalorder %s10, 0
    %p56 = por %p54, %p55
    %p57 = scmp.ne.s32.totalorder %s46, %s49
    %p58 = scmp.eq.s32.totalorder %s15, 1
    %p59 = por %p57, %p58
    %p60 = scmp.ne.s32.totalorder %s49, %s50
    %p61 = scmp.eq.s32.totalorder %s15, 0
    %p62 = por %p60, %p61
    %p63 = scmp.ne.s32.totalorder %s49, %s50
    %p64 = scmp.eq.s32.totalorder %s16, 1
    %p65 = por %p63, %p64
    %p67 = scmp.ne.s32.totalorder %s50, %s66
    %p68 = scmp.eq.s32.totalorder %s16, 0
    %p69 = por %p67, %p68
    %s71 = sadd.s32 %s70, 1
    %p74 = scmp.eq.s32.totalorder %s10, 1
    %p75 = scmp.ne.s32.totalorder %s70, %s72
    %p76 = scmp.eq.s32.totalorder %s10, 0
    %p77 = por %p75, %p76
    %p78 = scmp.ne.s32.totalorder %s70, %s72
    %p79 = scmp.eq.s32.totalorder %s15, 1
    %p80 = por %p78, %p79
    %p81 = scmp.ne.s32.totalorder %s72, %s73
    %p82 = scmp.eq.s32.totalorder %s15, 0
    %p83 = por %p81, %p82
    %p84 = scmp.ne.s32.totalorder %s72, %s73
    %p85 = scmp.eq.s32.totalorder %s16, 1
    %p86 = por %p84, %p85
    %p88 = scmp.ne.s32.totalorder %s73, %s87
    %p89 = scmp.eq.s32.totalorder %s16, 0
    %p90 = por %p88, %p89
    %s92 = sadd.s32 %s91, 1
    %p95 = scmp.eq.s32.totalorder %s10, 1
    %p96 = scmp.ne.s32.totalorder %s91, %s93
    %p97 = scmp.eq.s32.totalorder %s10, 0
    %p98 = por %p96, %p97
    %p99 = scmp.ne.s32.totalorder %s91, %s93
    %p100 = scmp.eq.s32.totalorder %s15, 1
    %p101 = por %p99, %p100
    %p102 = scmp.ne.s32.totalorder %s93, %s94
    %p103 = scmp.eq.s32.totalorder %s15, 0
    %p104 = por %p102, %p103
    %p105 = scmp.ne.s32.totalorder %s93, %s94
    %p106 = scmp.eq.s32.totalorder %s16, 1
    %p107 = por %p105, %p106
    %p109 = scmp.ne.s32.totalorder %s94, %s108
    %p110 = scmp.eq.s32.totalorder %s16, 0
    %p111 = por %p109, %p110
    %s112 = ssub.s32 %s10, %s17
    %p113 = scmp.eq.s32.totalorder %s112, 0
    %s115 = sadd.s32 %s114, 1
    %s116 = scalar_select %p113, %s114, %s115
    %p119 = pneg %p113
    %p120 = scmp.eq.s32.totalorder %s10, 1
    %p121 = por %p119, %p120
    %p122 = scmp.ne.s32.totalorder %s114, %s117
    %p123 = scmp.eq.s32.totalorder %s10, 0
    %p124 = por %p122, %p123
    %p125 = scmp.ne.s32.totalorder %s114, %s117
    %p126 = scmp.eq.s32.totalorder %s15, 1
    %p127 = por %p125, %p126
    %p128 = scmp.ne.s32.totalorder %s117, %s118
    %p129 = scmp.eq.s32.totalorder %s15, 0
    %p130 = por %p128, %p129
    %p131 = scmp.ne.s32.totalorder %s117, %s118
    %p132 = scmp.eq.s32.totalorder %s16, 1
    %p133 = por %p131, %p132
    %p135 = scmp.ne.s32.totalorder %s118, %s134
    %p136 = scmp.eq.s32.totalorder %s16, 0
    %p137 = por %p135, %p136
    %p138 = scmp.le.s32.totalorder 1, %s10
    %p139 = scmp.lt.s32.totalorder %s10, 3
    %p140 = pnand %p138, %p139
    %p141 = pneg %p140
    // Predicated region
    $region9: #{cresbloc_forward.1} parent=5 // pred_check
      _
    $region10: #{cresbloc_forward.1} parent=5 // pred_check_branch
      %143 = sbr.rel (%p140) target = $region12
    $region11: #{cresbloc_forward.1} parent=5 // pred_region
      %s144 = ssub.s32 %s10, 1
      // Predicated region
      $region13: #{cresbloc_forward.1} parent=11 // pred_check
        %p145 = pneg %p83
      $region14: #{cresbloc_forward.1} parent=11 // pred_check_branch
        %147 = sbr.rel (%p145) target = $region16
      $region15: #{cresbloc_forward.1} parent=11 // pred_region
        _
      $region16: #{cresbloc_forward.1} parent=11 // pred_fallthru
        _
      // Predicated region
      $region17: #{cresbloc_forward.1} parent=11 // pred_check
        %p148 = pneg %p104
      $region18: #{cresbloc_forward.1} parent=11 // pred_check_branch
        %150 = sbr.rel (%p148) target = $region20
      $region19: #{cresbloc_forward.1} parent=11 // pred_region
        _
      $region20: #{cresbloc_forward.1} parent=11 // pred_fallthru
        _
    $region12: #{cresbloc_forward.1} parent=5 // pred_fallthru
      _
    %p151 = scmp.lt.s32.totalorder %s10, 2
    // Predicated region
    $region21: #{cresbloc_forward.1} parent=5 // pred_check
      %p152 = pneg %p151
    $region22: #{cresbloc_forward.1} parent=5 // pred_check_branch
      %154 = sbr.rel (%p152) target = $region24
    $region23: #{cresbloc_forward.1} parent=5 // pred_region
      // Predicated region
      $region25: #{cresbloc_forward.1} parent=23 // pred_check
        %p155 = pneg %p30
      $region26: #{cresbloc_forward.1} parent=23 // pred_check_branch
        %157 = sbr.rel (%p155) target = $region28
      $region27: #{cresbloc_forward.1} parent=23 // pred_region
        %p158 = scmp.lt.s32.totalorder %s10, 1
        %s159 = scalar_select %p158, %s10, 1
        %s160 = smul.addr %s159, 72
        %s161 = smul.addr %s160, 8
        %s162 = scalar_lea.vmem %s0, %s161
      $region28: #{cresbloc_forward.1} parent=23 // pred_fallthru
        _
      // Predicated region
      $region29: #{cresbloc_forward.1} parent=23 // pred_check
        %p163 = pneg %p56
      $region30: #{cresbloc_forward.1} parent=23 // pred_check_branch
        %165 = sbr.rel (%p163) target = $region32
      $region31: #{cresbloc_forward.1} parent=23 // pred_region
        %p166 = scmp.lt.s32.totalorder %s10, 1
        %s167 = scalar_select %p166, %s10, 1
        %s168 = scalar_lea.vmem %s1, %s167
      $region32: #{cresbloc_forward.1} parent=23 // pred_fallthru
        _
    $region24: #{cresbloc_forward.1} parent=5 // pred_fallthru
      _
    %p169 = scmp.le.s32.totalorder 1, %s10
    %p170 = scmp.lt.s32.totalorder %s10, 3
    %p171 = pnand %p169, %p170
    %p172 = pneg %p171
    // Predicated region
    $region33: #{cresbloc_forward.1} parent=5 // pred_check
      _
    $region34: #{cresbloc_forward.1} parent=5 // pred_check_branch
      %174 = sbr.rel (%p171) target = $region36
    $region35: #{cresbloc_forward.1} parent=5 // pred_region
      %s175 = ssub.s32 %s10, 1
      %p176 = scmp.lt.s32.totalorder %s15, 1
      %s177 = scalar_select %p176, %s15, 1
      %s178 = smul.addr %s177, 72
      %s179 = smul.addr %s178, 8
      %s180 = scalar_lea.vmem %s0, %s179
      %p181 = pneg %p36
      %p182 = pneg %p33
      %p183 = scmp.lt.s32.totalorder %s15, 1
      %s184 = scalar_select %p183, %s15, 1
      %s185 = scalar_lea.vmem %s1, %s184
      %p186 = pneg %p62
      %p187 = pneg %p59
      %p188 = pneg %p83
      %p189 = pneg %p80
      %p190 = pneg %p104
      %p191 = pneg %p101
      %p192 = pneg %p130
      %p193 = pneg %p127
      %p194 = scmp.lt.s32.totalorder %s15, 1
      %s195 = scalar_select %p194, %s15, 1
      %s196 = smul.addr %s195, 64
      %s197 = smul.addr %s196, 8
      %s198 = scalar_lea.vmem %s4, %s197
      %p199 = scmp.lt.s32.totalorder %s15, 1
      %s200 = scalar_select %p199, %s15, 1
      %s201 = smul.addr %s200, 72
      %s202 = smul.addr %s201, 8
      %s203 = scalar_lea.vmem %s0, %s202
      %p204 = scmp.lt.s32.totalorder %s15, 1
      %s205 = scalar_select %p204, %s15, 1
      %s206 = scalar_lea.vmem %s1, %s205
      %p207 = scmp.lt.s32.totalorder %s15, 1
      %s208 = scalar_select %p207, %s15, 1
      %s209 = smul.addr %s208, 64
      %s210 = smul.addr %s209, 8
      %s211 = scalar_lea.vmem %s4, %s210
      %v213 = vld [vmem:[%s203] sm:$0xff]
      %v214 = vld [vmem:[%s203 + $0x8] sm:$0xff]
      %v215 = vld [vmem:[%s203 + $0x10] sm:$0xff]
      %v216 = vld [vmem:[%s203 + $0x18] sm:$0xff]
      %v217 = vld [vmem:[%s203 + $0x20] sm:$0xff]
      %v218 = vld [vmem:[%s203 + $0x28] sm:$0xff]
      %v219 = vld [vmem:[%s203 + $0x30] sm:$0xff]
      %v220 = vld [vmem:[%s203 + $0x38] sm:$0xff]
      %v221 = vld [vmem:[%s203 + $0x40] sm:$0xff]
      %v222 = vld [vmem:[%s203 + $0x48] sm:$0xff]
      %v223 = vld [vmem:[%s203 + $0x50] sm:$0xff]
      %v224 = vld [vmem:[%s203 + $0x58] sm:$0xff]
      %v225 = vld [vmem:[%s203 + $0x60] sm:$0xff]
      %v226 = vld [vmem:[%s203 + $0x68] sm:$0xff]
      %v227 = vld [vmem:[%s203 + $0x70] sm:$0xff]
      %v228 = vld [vmem:[%s203 + $0x78] sm:$0xff]
      %v229 = vld [vmem:[%s203 + $0x80] sm:$0xff]
      %v230 = vld [vmem:[%s203 + $0x88] sm:$0xff]
      %v231 = vld [vmem:[%s203 + $0x90] sm:$0xff]
      %v232 = vld [vmem:[%s203 + $0x98] sm:$0xff]
      %v233 = vld [vmem:[%s203 + $0xa0] sm:$0xff]
      %v234 = vld [vmem:[%s203 + $0xa8] sm:$0xff]
      %v235 = vld [vmem:[%s203 + $0xb0] sm:$0xff]
      %v236 = vld [vmem:[%s203 + $0xb8] sm:$0xff]
      %v237 = vld [vmem:[%s203 + $0xc0] sm:$0xff]
      %v238 = vld [vmem:[%s203 + $0xc8] sm:$0xff]
      %v239 = vld [vmem:[%s203 + $0xd0] sm:$0xff]
      %v240 = vld [vmem:[%s203 + $0xd8] sm:$0xff]
      %v241 = vld [vmem:[%s203 + $0xe0] sm:$0xff]
      %v242 = vld [vmem:[%s203 + $0xe8] sm:$0xff]
      %v243 = vld [vmem:[%s203 + $0xf0] sm:$0xff]
      %v244 = vld [vmem:[%s203 + $0xf8] sm:$0xff]
      %v245 = vld [vmem:[%s203 + $0x100] sm:$0xff]
      %v246 = vld [vmem:[%s203 + $0x108] sm:$0xff]
      %v247 = vld [vmem:[%s203 + $0x110] sm:$0xff]
      %v248 = vld [vmem:[%s203 + $0x118] sm:$0xff]
      %v249 = vld [vmem:[%s203 + $0x120] sm:$0xff]
      %v250 = vld [vmem:[%s203 + $0x128] sm:$0xff]
      %v251 = vld [vmem:[%s203 + $0x130] sm:$0xff]
      %v252 = vld [vmem:[%s203 + $0x138] sm:$0xff]
      %v253 = vld [vmem:[%s203 + $0x140] sm:$0xff]
      %v254 = vld [vmem:[%s203 + $0x148] sm:$0xff]
      %v255 = vld [vmem:[%s203 + $0x150] sm:$0xff]
      %v256 = vld [vmem:[%s203 + $0x158] sm:$0xff]
      %v257 = vld [vmem:[%s203 + $0x160] sm:$0xff]
      %v258 = vld [vmem:[%s203 + $0x168] sm:$0xff]
      %v259 = vld [vmem:[%s203 + $0x170] sm:$0xff]
      %v260 = vld [vmem:[%s203 + $0x178] sm:$0xff]
      %v261 = vld [vmem:[%s203 + $0x180] sm:$0xff]
      %v262 = vld [vmem:[%s203 + $0x188] sm:$0xff]
      %v263 = vld [vmem:[%s203 + $0x190] sm:$0xff]
      %v264 = vld [vmem:[%s203 + $0x198] sm:$0xff]
      %v265 = vld [vmem:[%s203 + $0x1a0] sm:$0xff]
      %v266 = vld [vmem:[%s203 + $0x1a8] sm:$0xff]
      %v267 = vld [vmem:[%s203 + $0x1b0] sm:$0xff]
      %v268 = vld [vmem:[%s203 + $0x1b8] sm:$0xff]
      %v269 = vld [vmem:[%s203 + $0x1c0] sm:$0xff]
      %v270 = vld [vmem:[%s203 + $0x1c8] sm:$0xff]
      %v271 = vld [vmem:[%s203 + $0x1d0] sm:$0xff]
      %v272 = vld [vmem:[%s203 + $0x1d8] sm:$0xff]
      %v273 = vld [vmem:[%s203 + $0x1e0] sm:$0xff]
      %v274 = vld [vmem:[%s203 + $0x1e8] sm:$0xff]
      %v275 = vld [vmem:[%s203 + $0x1f0] sm:$0xff]
      %v276 = vld [vmem:[%s203 + $0x1f8] sm:$0xff]
      %v277 = vld [vmem:[%s203 + $0x200] sm:$0xff]
      %v278 = vld [vmem:[%s203 + $0x208] sm:$0xff]
      %v279 = vld [vmem:[%s203 + $0x210] sm:$0xff]
      %v280 = vld [vmem:[%s203 + $0x218] sm:$0xff]
      %v281 = vld [vmem:[%s203 + $0x220] sm:$0xff]
      %v282 = vld [vmem:[%s203 + $0x228] sm:$0xff]
      %v283 = vld [vmem:[%s203 + $0x230] sm:$0xff]
      %v284 = vld [vmem:[%s203 + $0x238] sm:$0xff]
      %v285 = vlaneseq
      %v286 = vshrl.u32 %v285, 7
      %v287 = vadd.s32 %v286, 8
      %v288 = vadd.s32 %v286, 16
      %v289 = vadd.s32 %v286, 24
      %vm290 = vcmp.lt.s32.totalorder %v286, 16
      %vm291 = vcmp.lt.s32.totalorder %v287, 16
      %vm292 = vcmp.lt.s32.totalorder %v288, 16
      %vm293 = vcmp.lt.s32.totalorder %v289, 16
      %v294 = vsel %vm290, 1, 0
      %v295 = vsel %vm291, 1, 0
      %v296 = vsel %vm292, 1, 0
      %v297 = vsel %vm293, 1, 0
      %v298 = vcvt.s32.f32 %v294
      %v299 = vcvt.s32.f32 %v295
      %v300 = vcvt.s32.f32 %v296
      %v301 = vcvt.s32.f32 %v297
      %v302 = vld [vmem:[%s2] sm:$0xf]
      %v303 = vld [vmem:[%s2 + $0x4] sm:$0xf]
      %v304 = vld [vmem:[%s2 + $0x8] sm:$0xf]
      %v305 = vld [vmem:[%s2 + $0xc] sm:$0xf]
      %v306 = vld [vmem:[%s2 + $0x10] sm:$0xf]
      %v307 = vld [vmem:[%s2 + $0x14] sm:$0xf]
      %v308 = vld [vmem:[%s2 + $0x18] sm:$0xf]
      %v309 = vld [vmem:[%s2 + $0x1c] sm:$0xf]
      %v310 = vld [vmem:[%s2 + $0x20] sm:$0xf]
      %v311 = vld [vmem:[%s2 + $0x24] sm:$0xf]
      %v312 = vld [vmem:[%s2 + $0x28] sm:$0xf]
      %v313 = vld [vmem:[%s2 + $0x2c] sm:$0xf]
      %v314 = vld [vmem:[%s2 + $0x30] sm:$0xf]
      %v315 = vld [vmem:[%s2 + $0x34] sm:$0xf]
      %v316 = vld [vmem:[%s2 + $0x38] sm:$0xf]
      %v317 = vld [vmem:[%s2 + $0x3c] sm:$0xf]
      %v318 = vld [vmem:[%s2 + $0x40] sm:$0xf]
      %v319 = vld [vmem:[%s2 + $0x44] sm:$0xf]
      %v320 = vld [vmem:[%s2 + $0x48] sm:$0xf]
      %v321 = vld [vmem:[%s2 + $0x4c] sm:$0xf]
      %v322 = vld [vmem:[%s2 + $0x50] sm:$0xf]
      %v323 = vld [vmem:[%s2 + $0x54] sm:$0xf]
      %v324 = vld [vmem:[%s2 + $0x58] sm:$0xf]
      %v325 = vld [vmem:[%s2 + $0x5c] sm:$0xf]
      %v326 = vld [vmem:[%s2 + $0x60] sm:$0xf]
      %v327 = vld [vmem:[%s2 + $0x64] sm:$0xf]
      %v328 = vld [vmem:[%s2 + $0x68] sm:$0xf]
      %v329 = vld [vmem:[%s2 + $0x6c] sm:$0xf]
      %v330 = vld [vmem:[%s2 + $0x70] sm:$0xf]
      %v331 = vld [vmem:[%s2 + $0x74] sm:$0xf]
      %v332 = vld [vmem:[%s2 + $0x78] sm:$0xf]
      %v333 = vld [vmem:[%s2 + $0x7c] sm:$0xf]
      %v334 = vld [vmem:[%s2 + $0x80] sm:$0xf]
      %v335 = vld [vmem:[%s2 + $0x84] sm:$0xf]
      %v336 = vld [vmem:[%s2 + $0x88] sm:$0xf]
      %v337 = vld [vmem:[%s2 + $0x8c] sm:$0xf]
      %v338 = vld [vmem:[%s2 + $0x90] sm:$0xf]
      %v339 = vld [vmem:[%s2 + $0x94] sm:$0xf]
      %v340 = vld [vmem:[%s2 + $0x98] sm:$0xf]
      %v341 = vld [vmem:[%s2 + $0x9c] sm:$0xf]
      %v342 = vld [vmem:[%s2 + $0xa0] sm:$0xf]
      %v343 = vld [vmem:[%s2 + $0xa4] sm:$0xf]
      %v344 = vld [vmem:[%s2 + $0xa8] sm:$0xf]
      %v345 = vld [vmem:[%s2 + $0xac] sm:$0xf]
      %v346 = vld [vmem:[%s2 + $0xb0] sm:$0xf]
      %v347 = vld [vmem:[%s2 + $0xb4] sm:$0xf]
      %v348 = vld [vmem:[%s2 + $0xb8] sm:$0xf]
      %v349 = vld [vmem:[%s2 + $0xbc] sm:$0xf]
      %v350 = vld [vmem:[%s2 + $0xc0] sm:$0xf]
      %v351 = vld [vmem:[%s2 + $0xc4] sm:$0xf]
      %v352 = vld [vmem:[%s2 + $0xc8] sm:$0xf]
      %v353 = vld [vmem:[%s2 + $0xcc] sm:$0xf]
      %v354 = vld [vmem:[%s2 + $0xd0] sm:$0xf]
      %v355 = vld [vmem:[%s2 + $0xd4] sm:$0xf]
      %v356 = vld [vmem:[%s2 + $0xd8] sm:$0xf]
      %v357 = vld [vmem:[%s2 + $0xdc] sm:$0xf]
      %v358 = vld [vmem:[%s2 + $0xe0] sm:$0xf]
      %v359 = vld [vmem:[%s2 + $0xe4] sm:$0xf]
      %v360 = vld [vmem:[%s2 + $0xe8] sm:$0xf]
      %v361 = vld [vmem:[%s2 + $0xec] sm:$0xf]
      %v362 = vld [vmem:[%s2 + $0xf0] sm:$0xf]
      %v363 = vld [vmem:[%s2 + $0xf4] sm:$0xf]
      %v364 = vld [vmem:[%s2 + $0xf8] sm:$0xf]
      %v365 = vld [vmem:[%s2 + $0xfc] sm:$0xf]
      %v366 = vld [vmem:[%s2 + $0x100] sm:$0xf]
      %v367 = vld [vmem:[%s2 + $0x104] sm:$0xf]
      %v368 = vld [vmem:[%s2 + $0x108] sm:$0xf]
      %v369 = vld [vmem:[%s2 + $0x10c] sm:$0xf]
      %v370 = vld [vmem:[%s2 + $0x110] sm:$0xf]
      %v371 = vld [vmem:[%s2 + $0x114] sm:$0xf]
      %v372 = vld [vmem:[%s2 + $0x118] sm:$0xf]
      %v373 = vld [vmem:[%s2 + $0x11c] sm:$0xf]
      %v374 = vld [vmem:[%s2 + $0x120] sm:$0xf]
      %v375 = vld [vmem:[%s2 + $0x124] sm:$0xf]
      %v376 = vld [vmem:[%s2 + $0x128] sm:$0xf]
      %v377 = vld [vmem:[%s2 + $0x12c] sm:$0xf]
      %v378 = vld [vmem:[%s2 + $0x130] sm:$0xf]
      %v379 = vld [vmem:[%s2 + $0x134] sm:$0xf]
      %v380 = vld [vmem:[%s2 + $0x138] sm:$0xf]
      %v381 = vld [vmem:[%s2 + $0x13c] sm:$0xf]
      %v382 = vld [vmem:[%s2 + $0x140] sm:$0xf]
      %v383 = vld [vmem:[%s2 + $0x144] sm:$0xf]
      %v384 = vld [vmem:[%s2 + $0x148] sm:$0xf]
      %v385 = vld [vmem:[%s2 + $0x14c] sm:$0xf]
      %v386 = vld [vmem:[%s2 + $0x150] sm:$0xf]
      %v387 = vld [vmem:[%s2 + $0x154] sm:$0xf]
      %v388 = vld [vmem:[%s2 + $0x158] sm:$0xf]
      %v389 = vld [vmem:[%s2 + $0x15c] sm:$0xf]
      %v390 = vld [vmem:[%s2 + $0x160] sm:$0xf]
      %v391 = vld [vmem:[%s2 + $0x164] sm:$0xf]
      %v392 = vld [vmem:[%s2 + $0x168] sm:$0xf]
      %v393 = vld [vmem:[%s2 + $0x16c] sm:$0xf]
      %v394 = vld [vmem:[%s2 + $0x170] sm:$0xf]
      %v395 = vld [vmem:[%s2 + $0x174] sm:$0xf]
      %v396 = vld [vmem:[%s2 + $0x178] sm:$0xf]
      %v397 = vld [vmem:[%s2 + $0x17c] sm:$0xf]
      %v398 = vld [vmem:[%s2 + $0x180] sm:$0xf]
      %v399 = vld [vmem:[%s2 + $0x184] sm:$0xf]
      %v400 = vld [vmem:[%s2 + $0x188] sm:$0xf]
      %v401 = vld [vmem:[%s2 + $0x18c] sm:$0xf]
      %v402 = vld [vmem:[%s2 + $0x190] sm:$0xf]
      %v403 = vld [vmem:[%s2 + $0x194] sm:$0xf]
      %v404 = vld [vmem:[%s2 + $0x198] sm:$0xf]
      %v405 = vld [vmem:[%s2 + $0x19c] sm:$0xf]
      %v406 = vld [vmem:[%s2 + $0x1a0] sm:$0xf]
      %v407 = vld [vmem:[%s2 + $0x1a4] sm:$0xf]
      %v408 = vld [vmem:[%s2 + $0x1a8] sm:$0xf]
      %v409 = vld [vmem:[%s2 + $0x1ac] sm:$0xf]
      %v410 = vld [vmem:[%s2 + $0x1b0] sm:$0xf]
      %v411 = vld [vmem:[%s2 + $0x1b4] sm:$0xf]
      %v412 = vld [vmem:[%s2 + $0x1b8] sm:$0xf]
      %v413 = vld [vmem:[%s2 + $0x1bc] sm:$0xf]
      %v414 = vld [vmem:[%s2 + $0x1c0] sm:$0xf]
      %v415 = vld [vmem:[%s2 + $0x1c4] sm:$0xf]
      %v416 = vld [vmem:[%s2 + $0x1c8] sm:$0xf]
      %v417 = vld [vmem:[%s2 + $0x1cc] sm:$0xf]
      %v418 = vld [vmem:[%s2 + $0x1d0] sm:$0xf]
      %v419 = vld [vmem:[%s2 + $0x1d4] sm:$0xf]
      %v420 = vld [vmem:[%s2 + $0x1d8] sm:$0xf]
      %v421 = vld [vmem:[%s2 + $0x1dc] sm:$0xf]
      %v422 = vld [vmem:[%s2 + $0x1e0] sm:$0xf]
      %v423 = vld [vmem:[%s2 + $0x1e4] sm:$0xf]
      %v424 = vld [vmem:[%s2 + $0x1e8] sm:$0xf]
      %v425 = vld [vmem:[%s2 + $0x1ec] sm:$0xf]
      %v426 = vld [vmem:[%s2 + $0x1f0] sm:$0xf]
      %v427 = vld [vmem:[%s2 + $0x1f4] sm:$0xf]
      %v428 = vld [vmem:[%s2 + $0x1f8] sm:$0xf]
      %v429 = vld [vmem:[%s2 + $0x1fc] sm:$0xf]
      %v430 = vld [vmem:[%s2 + $0x200] sm:$0xf]
      %v431 = vld [vmem:[%s2 + $0x204] sm:$0xf]
      %v432 = vld [vmem:[%s2 + $0x208] sm:$0xf]
      %v433 = vld [vmem:[%s2 + $0x20c] sm:$0xf]
      %v434 = vld [vmem:[%s2 + $0x210] sm:$0xf]
      %v435 = vld [vmem:[%s2 + $0x214] sm:$0xf]
      %v436 = vld [vmem:[%s2 + $0x218] sm:$0xf]
      %v437 = vld [vmem:[%s2 + $0x21c] sm:$0xf]
      %v438 = vld [vmem:[%s2 + $0x220] sm:$0xf]
      %v439 = vld [vmem:[%s2 + $0x224] sm:$0xf]
      %v440 = vld [vmem:[%s2 + $0x228] sm:$0xf]
      %v441 = vld [vmem:[%s2 + $0x22c] sm:$0xf]
      %v442 = vld [vmem:[%s2 + $0x230] sm:$0xf]
      %v443 = vld [vmem:[%s2 + $0x234] sm:$0xf]
      %v444 = vld [vmem:[%s2 + $0x238] sm:$0xf]
      %v445 = vld [vmem:[%s2 + $0x23c] sm:$0xf]
      %v446 = vrot.slane %v213, 7
      %v447 = vrot.slane %v214, 7
      %v448 = vrot.slane %v215, 7
      %v449 = vrot.slane %v216, 7
      %v450 = vrot.slane %v217, 7
      %v451 = vrot.slane %v218, 7
      %v452 = vrot.slane %v219, 7
      %v453 = vrot.slane %v220, 7
      %v454 = vrot.slane %v221, 7
      %v455 = vrot.slane %v222, 7
      %v456 = vrot.slane %v223, 7
      %v457 = vrot.slane %v224, 7
      %v458 = vrot.slane %v225, 7
      %v459 = vrot.slane %v226, 7
      %v460 = vrot.slane %v227, 7
      %v461 = vrot.slane %v228, 7
      %v462 = vrot.slane %v229, 7
      %v463 = vrot.slane %v230, 7
      %v464 = vrot.slane %v231, 7
      %v465 = vrot.slane %v232, 7
      %v466 = vrot.slane %v233, 7
      %v467 = vrot.slane %v234, 7
      %v468 = vrot.slane %v235, 7
      %v469 = vrot.slane %v236, 7
      %v470 = vrot.slane %v237, 7
      %v471 = vrot.slane %v238, 7
      %v472 = vrot.slane %v239, 7
      %v473 = vrot.slane %v240, 7
      %v474 = vrot.slane %v241, 7
      %v475 = vrot.slane %v242, 7
      %v476 = vrot.slane %v243, 7
      %v477 = vrot.slane %v244, 7
      %v478 = vrot.slane %v245, 7
      %v479 = vrot.slane %v246, 7
      %v480 = vrot.slane %v247, 7
      %v481 = vrot.slane %v248, 7
      %v482 = vrot.slane %v249, 7
      %v483 = vrot.slane %v250, 7
      %v484 = vrot.slane %v251, 7
      %v485 = vrot.slane %v252, 7
      %v486 = vrot.slane %v253, 7
      %v487 = vrot.slane %v254, 7
      %v488 = vrot.slane %v255, 7
      %v489 = vrot.slane %v256, 7
      %v490 = vrot.slane %v257, 7
      %v491 = vrot.slane %v258, 7
      %v492 = vrot.slane %v259, 7
      %v493 = vrot.slane %v260, 7
      %v494 = vrot.slane %v261, 7
      %v495 = vrot.slane %v262, 7
      %v496 = vrot.slane %v263, 7
      %v497 = vrot.slane %v264, 7
      %v498 = vrot.slane %v265, 7
      %v499 = vrot.slane %v266, 7
      %v500 = vrot.slane %v267, 7
      %v501 = vrot.slane %v268, 7
      %v502 = vrot.slane %v269, 7
      %v503 = vrot.slane %v270, 7
      %v504 = vrot.slane %v271, 7
      %v505 = vrot.slane %v272, 7
      %v506 = vrot.slane %v273, 7
      %v507 = vrot.slane %v274, 7
      %v508 = vrot.slane %v275, 7
      %v509 = vrot.slane %v276, 7
      %v510 = vrot.slane %v277, 7
      %v511 = vrot.slane %v278, 7
      %v512 = vrot.slane %v279, 7
      %v513 = vrot.slane %v280, 7
      %v514 = vrot.slane %v281, 7
      %v515 = vrot.slane %v282, 7
      %v516 = vrot.slane %v283, 7
      %v517 = vrot.slane %v284, 7
      %vm518 = vcmp.lt.s32.totalorder %v286, 1
      %v519 = vsel %vm518, %v516, %v517
      %v520 = vsel %vm518, %v515, %v516
      %v521 = vsel %vm518, %v514, %v515
      %v522 = vsel %vm518, %v513, %v514
      %v523 = vsel %vm518, %v512, %v513
      %v524 = vsel %vm518, %v511, %v512
      %v525 = vsel %vm518, %v510, %v511
      %v526 = vsel %vm518, %v509, %v510
      %v527 = vsel %vm518, %v508, %v509
      %v528 = vsel %vm518, %v507, %v508
      %v529 = vsel %vm518, %v506, %v507
      %v530 = vsel %vm518, %v505, %v506
      %v531 = vsel %vm518, %v504, %v505
      %v532 = vsel %vm518, %v503, %v504
      %v533 = vsel %vm518, %v502, %v503
      %v534 = vsel %vm518, %v501, %v502
      %v535 = vsel %vm518, %v500, %v501
      %v536 = vsel %vm518, %v499, %v500
      %v537 = vsel %vm518, %v498, %v499
      %v538 = vsel %vm518, %v497, %v498
      %v539 = vsel %vm518, %v496, %v497
      %v540 = vsel %vm518, %v495, %v496
      %v541 = vsel %vm518, %v494, %v495
      %v542 = vsel %vm518, %v493, %v494
      %v543 = vsel %vm518, %v492, %v493
      %v544 = vsel %vm518, %v491, %v492
      %v545 = vsel %vm518, %v490, %v491
      %v546 = vsel %vm518, %v489, %v490
      %v547 = vsel %vm518, %v488, %v489
      %v548 = vsel %vm518, %v487, %v488
      %v549 = vsel %vm518, %v486, %v487
      %v550 = vsel %vm518, %v485, %v486
      %v551 = vsel %vm518, %v484, %v485
      %v552 = vsel %vm518, %v483, %v484
      %v553 = vsel %vm518, %v482, %v483
      %v554 = vsel %vm518, %v481, %v482
      %v555 = vsel %vm518, %v480, %v481
      %v556 = vsel %vm518, %v479, %v480
      %v557 = vsel %vm518, %v478, %v479
      %v558 = vsel %vm518, %v477, %v478
      %v559 = vsel %vm518, %v476, %v477
      %v560 = vsel %vm518, %v475, %v476
      %v561 = vsel %vm518, %v474, %v475
      %v562 = vsel %vm518, %v473, %v474
      %v563 = vsel %vm518, %v472, %v473
      %v564 = vsel %vm518, %v471, %v472
      %v565 = vsel %vm518, %v470, %v471
      %v566 = vsel %vm518, %v469, %v470
      %v567 = vsel %vm518, %v468, %v469
      %v568 = vsel %vm518, %v467, %v468
      %v569 = vsel %vm518, %v466, %v467
      %v570 = vsel %vm518, %v465, %v466
      %v571 = vsel %vm518, %v464, %v465
      %v572 = vsel %vm518, %v463, %v464
      %v573 = vsel %vm518, %v462, %v463
      %v574 = vsel %vm518, %v461, %v462
      %v575 = vsel %vm518, %v460, %v461
      %v576 = vsel %vm518, %v459, %v460
      %v577 = vsel %vm518, %v458, %v459
      %v578 = vsel %vm518, %v457, %v458
      %v579 = vsel %vm518, %v456, %v457
      %v580 = vsel %vm518, %v455, %v456
      %v581 = vsel %vm518, %v454, %v455
      %v582 = vsel %vm518, %v453, %v454
      %v583 = vsel %vm518, %v452, %v453
      %v584 = vsel %vm518, %v451, %v452
      %v585 = vsel %vm518, %v450, %v451
      %v586 = vsel %vm518, %v449, %v450
      %v587 = vsel %vm518, %v448, %v449
      %v588 = vsel %vm518, %v447, %v448
      %v589 = vsel %vm518, %v446, %v447
      %v590 = vsel %vm518, %v517, %v446
      %v591 = vpack.c.bf16 %v589, %v590
      %v592 = vpack.c.bf16 %v587, %v588
      %v593 = vpack.c.bf16 %v585, %v586
      %v594 = vpack.c.bf16 %v583, %v584
      %v595 = vpack.c.bf16 %v581, %v582
      %v596 = vpack.c.bf16 %v579, %v580
      %v597 = vpack.c.bf16 %v577, %v578
      %v598 = vpack.c.bf16 %v575, %v576
      %v599 = vpack.c.bf16 %v573, %v574
      %v600 = vpack.c.bf16 %v571, %v572
      %v601 = vpack.c.bf16 %v569, %v570
      %v602 = vpack.c.bf16 %v567, %v568
      %v603 = vpack.c.bf16 %v565, %v566
      %v604 = vpack.c.bf16 %v563, %v564
      %v605 = vpack.c.bf16 %v561, %v562
      %v606 = vpack.c.bf16 %v559, %v560
      %v607 = vpack.c.bf16 %v557, %v558
      %v608 = vpack.c.bf16 %v555, %v556
      %v609 = vpack.c.bf16 %v553, %v554
      %v610 = vpack.c.bf16 %v551, %v552
      %v611 = vpack.c.bf16 %v549, %v550
      %v612 = vpack.c.bf16 %v547, %v548
      %v613 = vpack.c.bf16 %v545, %v546
      %v614 = vpack.c.bf16 %v543, %v544
      %v615 = vpack.c.bf16 %v541, %v542
      %v616 = vpack.c.bf16 %v539, %v540
      %v617 = vpack.c.bf16 %v537, %v538
      %v618 = vpack.c.bf16 %v535, %v536
      %v619 = vpack.c.bf16 %v533, %v534
      %v620 = vpack.c.bf16 %v531, %v532
      %v621 = vpack.c.bf16 %v529, %v530
      %v622 = vpack.c.bf16 %v527, %v528
      %v623 = vpack.c.bf16 %v525, %v526
      %v624 = vpack.c.bf16 %v523, %v524
      %v625 = vpack.c.bf16 %v521, %v522
      %v626 = vpack.c.bf16 %v519, %v520
      %v627 = vpack.c.bf16 %v214, %v213
      %v628 = vpack.c.bf16 %v216, %v215
      %v629 = vpack.c.bf16 %v218, %v217
      %v630 = vpack.c.bf16 %v220, %v219
      %v631 = vpack.c.bf16 %v222, %v221
      %v632 = vpack.c.bf16 %v224, %v223
      %v633 = vpack.c.bf16 %v226, %v225
      %v634 = vpack.c.bf16 %v228, %v227
      %v635 = vpack.c.bf16 %v230, %v229
      %v636 = vpack.c.bf16 %v232, %v231
      %v637 = vpack.c.bf16 %v234, %v233
      %v638 = vpack.c.bf16 %v236, %v235
      %v639 = vpack.c.bf16 %v238, %v237
      %v640 = vpack.c.bf16 %v240, %v239
      %v641 = vpack.c.bf16 %v242, %v241
      %v642 = vpack.c.bf16 %v244, %v243
      %v643 = vpack.c.bf16 %v246, %v245
      %v644 = vpack.c.bf16 %v248, %v247
      %v645 = vpack.c.bf16 %v250, %v249
      %v646 = vpack.c.bf16 %v252, %v251
      %v647 = vpack.c.bf16 %v254, %v253
      %v648 = vpack.c.bf16 %v256, %v255
      %v649 = vpack.c.bf16 %v258, %v257
      %v650 = vpack.c.bf16 %v260, %v259
      %v651 = vpack.c.bf16 %v262, %v261
      %v652 = vpack.c.bf16 %v264, %v263
      %v653 = vpack.c.bf16 %v266, %v265
      %v654 = vpack.c.bf16 %v268, %v267
      %v655 = vpack.c.bf16 %v270, %v269
      %v656 = vpack.c.bf16 %v272, %v271
      %v657 = vpack.c.bf16 %v274, %v273
      %v658 = vpack.c.bf16 %v276, %v275
      %v659 = vpack.c.bf16 %v278, %v277
      %v660 = vpack.c.bf16 %v280, %v279
      %v661 = vpack.c.bf16 %v282, %v281
      %v662 = vpack.c.bf16 %v284, %v283
      %v663 = vrot.slane %v213, 1
      %v664 = vrot.slane %v214, 1
      %v665 = vrot.slane %v215, 1
      %v666 = vrot.slane %v216, 1
      %v667 = vrot.slane %v217, 1
      %v668 = vrot.slane %v218, 1
      %v669 = vrot.slane %v219, 1
      %v670 = vrot.slane %v220, 1
      %v671 = vrot.slane %v221, 1
      %v672 = vrot.slane %v222, 1
      %v673 = vrot.slane %v223, 1
      %v674 = vrot.slane %v224, 1
      %v675 = vrot.slane %v225, 1
      %v676 = vrot.slane %v226, 1
      %v677 = vrot.slane %v227, 1
      %v678 = vrot.slane %v228, 1
      %v679 = vrot.slane %v229, 1
      %v680 = vrot.slane %v230, 1
      %v681 = vrot.slane %v231, 1
      %v682 = vrot.slane %v232, 1
      %v683 = vrot.slane %v233, 1
      %v684 = vrot.slane %v234, 1
      %v685 = vrot.slane %v235, 1
      %v686 = vrot.slane %v236, 1
      %v687 = vrot.slane %v237, 1
      %v688 = vrot.slane %v238, 1
      %v689 = vrot.slane %v239, 1
      %v690 = vrot.slane %v240, 1
      %v691 = vrot.slane %v241, 1
      %v692 = vrot.slane %v242, 1
      %v693 = vrot.slane %v243, 1
      %v694 = vrot.slane %v244, 1
      %v695 = vrot.slane %v245, 1
      %v696 = vrot.slane %v246, 1
      %v697 = vrot.slane %v247, 1
      %v698 = vrot.slane %v248, 1
      %v699 = vrot.slane %v249, 1
      %v700 = vrot.slane %v250, 1
      %v701 = vrot.slane %v251, 1
      %v702 = vrot.slane %v252, 1
      %v703 = vrot.slane %v253, 1
      %v704 = vrot.slane %v254, 1
      %v705 = vrot.slane %v255, 1
      %v706 = vrot.slane %v256, 1
      %v707 = vrot.slane %v257, 1
      %v708 = vrot.slane %v258, 1
      %v709 = vrot.slane %v259, 1
      %v710 = vrot.slane %v260, 1
      %v711 = vrot.slane %v261, 1
      %v712 = vrot.slane %v262, 1
      %v713 = vrot.slane %v263, 1
      %v714 = vrot.slane %v264, 1
      %v715 = vrot.slane %v265, 1
      %v716 = vrot.slane %v266, 1
      %v717 = vrot.slane %v267, 1
      %v718 = vrot.slane %v268, 1
      %v719 = vrot.slane %v269, 1
      %v720 = vrot.slane %v270, 1
      %v721 = vrot.slane %v271, 1
      %v722 = vrot.slane %v272, 1
      %v723 = vrot.slane %v273, 1
      %v724 = vrot.slane %v274, 1
      %v725 = vrot.slane %v275, 1
      %v726 = vrot.slane %v276, 1
      %v727 = vrot.slane %v277, 1
      %v728 = vrot.slane %v278, 1
      %v729 = vrot.slane %v279, 1
      %v730 = vrot.slane %v280, 1
      %v731 = vrot.slane %v281, 1
      %v732 = vrot.slane %v282, 1
      %v733 = vrot.slane %v283, 1
      %v734 = vrot.slane %v284, 1
      %vm735 = vcmp.lt.s32.totalorder %v286, 7
      %v736 = vsel %vm735, %v733, %v734
      %v737 = vsel %vm735, %v732, %v733
      %v738 = vsel %vm735, %v731, %v732
      %v739 = vsel %vm735, %v730, %v731
      %v740 = vsel %vm735, %v729, %v730
      %v741 = vsel %vm735, %v728, %v729
      %v742 = vsel %vm735, %v727, %v728
      %v743 = vsel %vm735, %v726, %v727
      %v744 = vsel %vm735, %v725, %v726
      %v745 = vsel %vm735, %v724, %v725
      %v746 = vsel %vm735, %v723, %v724
      %v747 = vsel %vm735, %v722, %v723
      %v748 = vsel %vm735, %v721, %v722
      %v749 = vsel %vm735, %v720, %v721
      %v750 = vsel %vm735, %v719, %v720
      %v751 = vsel %vm735, %v718, %v719
      %v752 = vsel %vm735, %v717, %v718
      %v753 = vsel %vm735, %v716, %v717
      %v754 = vsel %vm735, %v715, %v716
      %v755 = vsel %vm735, %v714, %v715
      %v756 = vsel %vm735, %v713, %v714
      %v757 = vsel %vm735, %v712, %v713
      %v758 = vsel %vm735, %v711, %v712
      %v759 = vsel %vm735, %v710, %v711
      %v760 = vsel %vm735, %v709, %v710
      %v761 = vsel %vm735, %v708, %v709
      %v762 = vsel %vm735, %v707, %v708
      %v763 = vsel %vm735, %v706, %v707
      %v764 = vsel %vm735, %v705, %v706
      %v765 = vsel %vm735, %v704, %v705
      %v766 = vsel %vm735, %v703, %v704
      %v767 = vsel %vm735, %v702, %v703
      %v768 = vsel %vm735, %v701, %v702
      %v769 = vsel %vm735, %v700, %v701
      %v770 = vsel %vm735, %v699, %v700
      %v771 = vsel %vm735, %v698, %v699
      %v772 = vsel %vm735, %v697, %v698
      %v773 = vsel %vm735, %v696, %v697
      %v774 = vsel %vm735, %v695, %v696
      %v775 = vsel %vm735, %v694, %v695
      %v776 = vsel %vm735, %v693, %v694
      %v777 = vsel %vm735, %v692, %v693
      %v778 = vsel %vm735, %v691, %v692
      %v779 = vsel %vm735, %v690, %v691
      %v780 = vsel %vm735, %v689, %v690
      %v781 = vsel %vm735, %v688, %v689
      %v782 = vsel %vm735, %v687, %v688
      %v783 = vsel %vm735, %v686, %v687
      %v784 = vsel %vm735, %v685, %v686
      %v785 = vsel %vm735, %v684, %v685
      %v786 = vsel %vm735, %v683, %v684
      %v787 = vsel %vm735, %v682, %v683
      %v788 = vsel %vm735, %v681, %v682
      %v789 = vsel %vm735, %v680, %v681
      %v790 = vsel %vm735, %v679, %v680
      %v791 = vsel %vm735, %v678, %v679
      %v792 = vsel %vm735, %v677, %v678
      %v793 = vsel %vm735, %v676, %v677
      %v794 = vsel %vm735, %v675, %v676
      %v795 = vsel %vm735, %v674, %v675
      %v796 = vsel %vm735, %v673, %v674
      %v797 = vsel %vm735, %v672, %v673
      %v798 = vsel %vm735, %v671, %v672
      %v799 = vsel %vm735, %v670, %v671
      %v800 = vsel %vm735, %v669, %v670
      %v801 = vsel %vm735, %v668, %v669
      %v802 = vsel %vm735, %v667, %v668
      %v803 = vsel %vm735, %v666, %v667
      %v804 = vsel %vm735, %v665, %v666
      %v805 = vsel %vm735, %v664, %v665
      %v806 = vsel %vm735, %v663, %v664
      %v807 = vsel %vm735, %v734, %v663
      %v808 = vpack.c.bf16 %v805, %v806
      %v809 = vpack.c.bf16 %v803, %v804
      %v810 = vpack.c.bf16 %v801, %v802
      %v811 = vpack.c.bf16 %v799, %v800
      %v812 = vpack.c.bf16 %v797, %v798
      %v813 = vpack.c.bf16 %v795, %v796
      %v814 = vpack.c.bf16 %v793, %v794
      %v815 = vpack.c.bf16 %v791, %v792
      %v816 = vpack.c.bf16 %v789, %v790
      %v817 = vpack.c.bf16 %v787, %v788
      %v818 = vpack.c.bf16 %v785, %v786
      %v819 = vpack.c.bf16 %v783, %v784
      %v820 = vpack.c.bf16 %v781, %v782
      %v821 = vpack.c.bf16 %v779, %v780
      %v822 = vpack.c.bf16 %v777, %v778
      %v823 = vpack.c.bf16 %v775, %v776
      %v824 = vpack.c.bf16 %v773, %v774
      %v825 = vpack.c.bf16 %v771, %v772
      %v826 = vpack.c.bf16 %v769, %v770
      %v827 = vpack.c.bf16 %v767, %v768
      %v828 = vpack.c.bf16 %v765, %v766
      %v829 = vpack.c.bf16 %v763, %v764
      %v830 = vpack.c.bf16 %v761, %v762
      %v831 = vpack.c.bf16 %v759, %v760
      %v832 = vpack.c.bf16 %v757, %v758
      %v833 = vpack.c.bf16 %v755, %v756
      %v834 = vpack.c.bf16 %v753, %v754
      %v835 = vpack.c.bf16 %v751, %v752
      %v836 = vpack.c.bf16 %v749, %v750
      %v837 = vpack.c.bf16 %v747, %v748
      %v838 = vpack.c.bf16 %v745, %v746
      %v839 = vpack.c.bf16 %v743, %v744
      %v840 = vpack.c.bf16 %v741, %v742
      %v841 = vpack.c.bf16 %v739, %v740
      %v842 = vpack.c.bf16 %v737, %v738
      %v843 = vpack.c.bf16 %v807, %v736
      %v988 = vunpack.c.l.b16 %v302
      %v989 = vunpack.c.l.b16 %v303
      %v990 = vunpack.c.l.b16 %v304
      %v991 = vunpack.c.l.b16 %v305
      %v992 = vunpack.c.l.b16 %v306
      %v993 = vunpack.c.l.b16 %v307
      %v994 = vunpack.c.l.b16 %v308
      %v995 = vunpack.c.l.b16 %v309
      %v996 = vunpack.c.l.b16 %v310
      %v997 = vunpack.c.l.b16 %v311
      %v998 = vunpack.c.l.b16 %v312
      %v999 = vunpack.c.l.b16 %v313
      %v1000 = vunpack.c.l.b16 %v314
      %v1001 = vunpack.c.l.b16 %v315
      %v1002 = vunpack.c.l.b16 %v316
      %v1003 = vunpack.c.l.b16 %v317
      %v1004 = vunpack.c.l.b16 %v318
      %v1005 = vunpack.c.l.b16 %v319
      %v1006 = vunpack.c.l.b16 %v320
      %v1007 = vunpack.c.l.b16 %v321
      %v1008 = vunpack.c.l.b16 %v322
      %v1009 = vunpack.c.l.b16 %v323
      %v1010 = vunpack.c.l.b16 %v324
      %v1011 = vunpack.c.l.b16 %v325
      %v1012 = vunpack.c.l.b16 %v326
      %v1013 = vunpack.c.l.b16 %v327
      %v1014 = vunpack.c.l.b16 %v328
      %v1015 = vunpack.c.l.b16 %v329
      %v1016 = vunpack.c.l.b16 %v330
      %v1017 = vunpack.c.l.b16 %v331
      %v1018 = vunpack.c.l.b16 %v332
      %v1019 = vunpack.c.l.b16 %v333
      %v1020 = vunpack.c.l.b16 %v334
      %v1021 = vunpack.c.l.b16 %v335
      %v1022 = vunpack.c.l.b16 %v336
      %v1023 = vunpack.c.l.b16 %v337
      %v1024 = vunpack.c.l.b16 %v338
      %v1025 = vunpack.c.l.b16 %v339
      %v1026 = vunpack.c.l.b16 %v340
      %v1027 = vunpack.c.l.b16 %v341
      %v1028 = vunpack.c.l.b16 %v342
      %v1029 = vunpack.c.l.b16 %v343
      %v1030 = vunpack.c.l.b16 %v344
      %v1031 = vunpack.c.l.b16 %v345
      %v1032 = vunpack.c.l.b16 %v346
      %v1033 = vunpack.c.l.b16 %v347
      %v1034 = vunpack.c.l.b16 %v348
      %v1035 = vunpack.c.l.b16 %v349
      %v1036 = vunpack.c.l.b16 %v350
      %v1037 = vunpack.c.l.b16 %v351
      %v1038 = vunpack.c.l.b16 %v352
      %v1039 = vunpack.c.l.b16 %v353
      %v1040 = vunpack.c.l.b16 %v354
      %v1041 = vunpack.c.l.b16 %v355
      %v1042 = vunpack.c.l.b16 %v356
      %v1043 = vunpack.c.l.b16 %v357
      %v1044 = vunpack.c.l.b16 %v358
      %v1045 = vunpack.c.l.b16 %v359
      %v1046 = vunpack.c.l.b16 %v360
      %v1047 = vunpack.c.l.b16 %v361
      %v1048 = vunpack.c.l.b16 %v362
      %v1049 = vunpack.c.l.b16 %v363
      %v1050 = vunpack.c.l.b16 %v364
      %v1051 = vunpack.c.l.b16 %v365
      %v1052 = vunpack.c.l.b16 %v366
      %v1053 = vunpack.c.l.b16 %v367
      %v1054 = vunpack.c.l.b16 %v368
      %v1055 = vunpack.c.l.b16 %v369
      %v1056 = vunpack.c.l.b16 %v370
      %v1057 = vunpack.c.l.b16 %v371
      %v1058 = vunpack.c.l.b16 %v372
      %v1059 = vunpack.c.l.b16 %v373
      %v1060 = vunpack.c.l.b16 %v374
      %v1061 = vunpack.c.l.b16 %v375
      %v1062 = vunpack.c.l.b16 %v376
      %v1063 = vunpack.c.l.b16 %v377
      %v1064 = vunpack.c.l.b16 %v378
      %v1065 = vunpack.c.l.b16 %v379
      %v1066 = vunpack.c.l.b16 %v380
      %v1067 = vunpack.c.l.b16 %v381
      %v1068 = vunpack.c.l.b16 %v382
      %v1069 = vunpack.c.l.b16 %v383
      %v1070 = vunpack.c.l.b16 %v384
      %v1071 = vunpack.c.l.b16 %v385
      %v1072 = vunpack.c.l.b16 %v386
      %v1073 = vunpack.c.l.b16 %v387
      %v1074 = vunpack.c.l.b16 %v388
      %v1075 = vunpack.c.l.b16 %v389
      %v1076 = vunpack.c.l.b16 %v390
      %v1077 = vunpack.c.l.b16 %v391
      %v1078 = vunpack.c.l.b16 %v392
      %v1079 = vunpack.c.l.b16 %v393
      %v1080 = vunpack.c.l.b16 %v394
      %v1081 = vunpack.c.l.b16 %v395
      %v1082 = vunpack.c.l.b16 %v396
      %v1083 = vunpack.c.l.b16 %v397
      %v1084 = vunpack.c.l.b16 %v398
      %v1085 = vunpack.c.l.b16 %v399
      %v1086 = vunpack.c.l.b16 %v400
      %v1087 = vunpack.c.l.b16 %v401
      %v1088 = vunpack.c.l.b16 %v402
      %v1089 = vunpack.c.l.b16 %v403
      %v1090 = vunpack.c.l.b16 %v404
      %v1091 = vunpack.c.l.b16 %v405
      %v1092 = vunpack.c.l.b16 %v406
      %v1093 = vunpack.c.l.b16 %v407
      %v1094 = vunpack.c.l.b16 %v408
      %v1095 = vunpack.c.l.b16 %v409
      %v1096 = vunpack.c.l.b16 %v410
      %v1097 = vunpack.c.l.b16 %v411
      %v1098 = vunpack.c.l.b16 %v412
      %v1099 = vunpack.c.l.b16 %v413
      %v1100 = vunpack.c.l.b16 %v414
      %v1101 = vunpack.c.l.b16 %v415
      %v1102 = vunpack.c.l.b16 %v416
      %v1103 = vunpack.c.l.b16 %v417
      %v1104 = vunpack.c.l.b16 %v418
      %v1105 = vunpack.c.l.b16 %v419
      %v1106 = vunpack.c.l.b16 %v420
      %v1107 = vunpack.c.l.b16 %v421
      %v1108 = vunpack.c.l.b16 %v422
      %v1109 = vunpack.c.l.b16 %v423
      %v1110 = vunpack.c.l.b16 %v424
      %v1111 = vunpack.c.l.b16 %v425
      %v1112 = vunpack.c.l.b16 %v426
      %v1113 = vunpack.c.l.b16 %v427
      %v1114 = vunpack.c.l.b16 %v428
      %v1115 = vunpack.c.l.b16 %v429
      %v1116 = vunpack.c.l.b16 %v430
      %v1117 = vunpack.c.l.b16 %v431
      %v1118 = vunpack.c.l.b16 %v432
      %v1119 = vunpack.c.l.b16 %v433
      %v1120 = vunpack.c.l.b16 %v434
      %v1121 = vunpack.c.l.b16 %v435
      %v1122 = vunpack.c.l.b16 %v436
      %v1123 = vunpack.c.l.b16 %v437
      %v1124 = vunpack.c.l.b16 %v438
      %v1125 = vunpack.c.l.b16 %v439
      %v1126 = vunpack.c.l.b16 %v440
      %v1127 = vunpack.c.l.b16 %v441
      %v1128 = vunpack.c.l.b16 %v442
      %v1129 = vunpack.c.l.b16 %v443
      %v1130 = vunpack.c.l.b16 %v444
      %v1131 = vunpack.c.l.b16 %v445
      %v1132 = vpack.c.b16 %v989, %v988
      %v1133 = vpack.c.b16 %v991, %v990
      %v1134 = vpack.c.b16 %v993, %v992
      %v1135 = vpack.c.b16 %v995, %v994
      %v1136 = vpack.c.b16 %v997, %v996
      %v1137 = vpack.c.b16 %v999, %v998
      %v1138 = vpack.c.b16 %v1001, %v1000
      %v1139 = vpack.c.b16 %v1003, %v1002
      %v1140 = vpack.c.b16 %v1005, %v1004
      %v1141 = vpack.c.b16 %v1007, %v1006
      %v1142 = vpack.c.b16 %v1009, %v1008
      %v1143 = vpack.c.b16 %v1011, %v1010
      %v1144 = vpack.c.b16 %v1013, %v1012
      %v1145 = vpack.c.b16 %v1015, %v1014
      %v1146 = vpack.c.b16 %v1017, %v1016
      %v1147 = vpack.c.b16 %v1019, %v1018
      %v1148 = vpack.c.b16 %v1021, %v1020
      %v1149 = vpack.c.b16 %v1023, %v1022
      %v1150 = vpack.c.b16 %v1025, %v1024
      %v1151 = vpack.c.b16 %v1027, %v1026
      %v1152 = vpack.c.b16 %v1029, %v1028
      %v1153 = vpack.c.b16 %v1031, %v1030
      %v1154 = vpack.c.b16 %v1033, %v1032
      %v1155 = vpack.c.b16 %v1035, %v1034
      %v1156 = vpack.c.b16 %v1037, %v1036
      %v1157 = vpack.c.b16 %v1039, %v1038
      %v1158 = vpack.c.b16 %v1041, %v1040
      %v1159 = vpack.c.b16 %v1043, %v1042
      %v1160 = vpack.c.b16 %v1045, %v1044
      %v1161 = vpack.c.b16 %v1047, %v1046
      %v1162 = vpack.c.b16 %v1049, %v1048
      %v1163 = vpack.c.b16 %v1051, %v1050
      %v1164 = vpack.c.b16 %v1053, %v1052
      %v1165 = vpack.c.b16 %v1055, %v1054
      %v1166 = vpack.c.b16 %v1057, %v1056
      %v1167 = vpack.c.b16 %v1059, %v1058
      %v1168 = vpack.c.b16 %v1061, %v1060
      %v1169 = vpack.c.b16 %v1063, %v1062
      %v1170 = vpack.c.b16 %v1065, %v1064
      %v1171 = vpack.c.b16 %v1067, %v1066
      %v1172 = vpack.c.b16 %v1069, %v1068
      %v1173 = vpack.c.b16 %v1071, %v1070
      %v1174 = vpack.c.b16 %v1073, %v1072
      %v1175 = vpack.c.b16 %v1075, %v1074
      %v1176 = vpack.c.b16 %v1077, %v1076
      %v1177 = vpack.c.b16 %v1079, %v1078
      %v1178 = vpack.c.b16 %v1081, %v1080
      %v1179 = vpack.c.b16 %v1083, %v1082
      %v1180 = vpack.c.b16 %v1085, %v1084
      %v1181 = vpack.c.b16 %v1087, %v1086
      %v1182 = vpack.c.b16 %v1089, %v1088
      %v1183 = vpack.c.b16 %v1091, %v1090
      %v1184 = vpack.c.b16 %v1093, %v1092
      %v1185 = vpack.c.b16 %v1095, %v1094
      %v1186 = vpack.c.b16 %v1097, %v1096
      %v1187 = vpack.c.b16 %v1099, %v1098
      %v1188 = vpack.c.b16 %v1101, %v1100
      %v1189 = vpack.c.b16 %v1103, %v1102
      %v1190 = vpack.c.b16 %v1105, %v1104
      %v1191 = vpack.c.b16 %v1107, %v1106
      %v1192 = vpack.c.b16 %v1109, %v1108
      %v1193 = vpack.c.b16 %v1111, %v1110
      %v1194 = vpack.c.b16 %v1113, %v1112
      %v1195 = vpack.c.b16 %v1115, %v1114
      %v1196 = vpack.c.b16 %v1117, %v1116
      %v1197 = vpack.c.b16 %v1119, %v1118
      %v1198 = vpack.c.b16 %v1121, %v1120
      %v1199 = vpack.c.b16 %v1123, %v1122
      %v1200 = vpack.c.b16 %v1125, %v1124
      %v1201 = vpack.c.b16 %v1127, %v1126
      %v1202 = vpack.c.b16 %v1129, %v1128
      %v1203 = vpack.c.b16 %v1131, %v1130
      %1276 = vmatprep.subr.bf16.mxu0 0
      %1277 = vmatpush1.bf16.msra.mxu0 %v1139
      %1278 = vmatprep.subr.bf16.mxu0 0
      %1279 = vmatpush1.bf16.msra.mxu0 %v1138
      %1280 = vmatprep.subr.bf16.mxu0 0
      %1281 = vmatpush1.bf16.msra.mxu0 %v1137
      %1282 = vmatprep.subr.bf16.mxu0 0
      %1283 = vmatpush1.bf16.msra.mxu0 %v1136
      %1284 = vmatprep.subr.bf16.mxu0 0
      %1285 = vmatpush1.bf16.msra.mxu0 %v1135
      %1286 = vmatprep.subr.bf16.mxu0 0
      %1287 = vmatpush1.bf16.msra.mxu0 %v1134
      %1288 = vmatprep.subr.bf16.mxu0 0
      %1289 = vmatpush1.bf16.msra.mxu0 %v1133
      %1290 = vmatprep.subr.bf16.mxu0 0
      %1291 = vmatpush1.bf16.msra.mxu0 %v1132
      %1292 = vmatprep.subr.bf16.mxu0 0
      %1293 = vmatpush2.bf16.msra.mxu0 %v1147
      %1294 = vmatprep.subr.bf16.mxu0 0
      %1295 = vmatpush2.bf16.msra.mxu0 %v1146
      %1296 = vmatprep.subr.bf16.mxu0 0
      %1297 = vmatpush2.bf16.msra.mxu0 %v1145
      %1298 = vmatprep.subr.bf16.mxu0 0
      %1299 = vmatpush2.bf16.msra.mxu0 %v1144
      %1300 = vmatprep.subr.bf16.mxu0 0
      %1301 = vmatpush2.bf16.msra.mxu0 %v1143
      %1302 = vmatprep.subr.bf16.mxu0 0
      %1303 = vmatpush2.bf16.msra.mxu0 %v1142
      %1304 = vmatprep.subr.bf16.mxu0 0
      %1305 = vmatpush2.bf16.msra.mxu0 %v1141
      %1306 = vmatprep.subr.bf16.mxu0 0
      %1307 = vmatpush2.bf16.msra.mxu0 %v1140
      %1308 = vmatprep.mubr.bf16.mxu0 %v627
      %1309 = vmatmul.mubr.bf16.gmra.mxu0 %v591
      %v1310 = vpop.f32.mrf.mxu0
      %v1311 = vadd.f32 0.0, %v1310
      %v1312 = vpop.f32.mrf.mxu0
      %v1313 = vpop.f32.mrf.mxu0
      %v1314 = vadd.f32 0.0, %v1313
      %v1315 = vpop.f32.mrf.mxu0
      %1316 = vmatprep.mubr.bf16.mxu0 %v628
      %1317 = vmatmul.mubr.bf16.gmra.mxu0 %v592
      %v1318 = vpop.f32.mrf.mxu0
      %v1319 = vadd.f32 0.0, %v1318
      %v1320 = vpop.f32.mrf.mxu0
      %v1321 = vpop.f32.mrf.mxu0
      %v1322 = vadd.f32 0.0, %v1321
      %v1323 = vpop.f32.mrf.mxu0
      %1324 = vmatprep.mubr.bf16.mxu0 %v629
      %1325 = vmatmul.mubr.bf16.gmra.mxu0 %v593
      %v1326 = vpop.f32.mrf.mxu0
      %v1327 = vadd.f32 0.0, %v1326
      %v1328 = vpop.f32.mrf.mxu0
      %v1329 = vpop.f32.mrf.mxu0
      %v1330 = vadd.f32 0.0, %v1329
      %v1331 = vpop.f32.mrf.mxu0
      %1332 = vmatprep.mubr.bf16.mxu0 %v630
      %1333 = vmatmul.mubr.bf16.gmra.mxu0 %v594
      %v1334 = vpop.f32.mrf.mxu0
      %v1335 = vadd.f32 0.0, %v1334
      %v1336 = vpop.f32.mrf.mxu0
      %v1337 = vpop.f32.mrf.mxu0
      %v1338 = vadd.f32 0.0, %v1337
      %v1339 = vpop.f32.mrf.mxu0
      %1340 = vmatprep.mubr.bf16.mxu0 %v631
      %1341 = vmatmul.mubr.bf16.gmra.mxu0 %v595
      %v1342 = vpop.f32.mrf.mxu0
      %v1343 = vadd.f32 0.0, %v1342
      %v1344 = vpop.f32.mrf.mxu0
      %v1345 = vpop.f32.mrf.mxu0
      %v1346 = vadd.f32 0.0, %v1345
      %v1347 = vpop.f32.mrf.mxu0
      %1348 = vmatprep.mubr.bf16.mxu0 %v632
      %1349 = vmatmul.mubr.bf16.gmra.mxu0 %v596
      %v1350 = vpop.f32.mrf.mxu0
      %v1351 = vadd.f32 0.0, %v1350
      %v1352 = vpop.f32.mrf.mxu0
      %v1353 = vpop.f32.mrf.mxu0
      %v1354 = vadd.f32 0.0, %v1353
      %v1355 = vpop.f32.mrf.mxu0
      %1356 = vmatprep.mubr.bf16.mxu0 %v633
      %1357 = vmatmul.mubr.bf16.gmra.mxu0 %v597
      %v1358 = vpop.f32.mrf.mxu0
      %v1359 = vadd.f32 0.0, %v1358
      %v1360 = vpop.f32.mrf.mxu0
      %v1361 = vpop.f32.mrf.mxu0
      %v1362 = vadd.f32 0.0, %v1361
      %v1363 = vpop.f32.mrf.mxu0
      %1364 = vmatprep.mubr.bf16.mxu0 %v634
      %1365 = vmatmul.mubr.bf16.gmra.mxu0 %v598
      %v1366 = vpop.f32.mrf.mxu0
      %v1367 = vadd.f32 0.0, %v1366
      %v1368 = vpop.f32.mrf.mxu0
      %v1369 = vpop.f32.mrf.mxu0
      %v1370 = vadd.f32 0.0, %v1369
      %v1371 = vpop.f32.mrf.mxu0
      %1372 = vmatprep.mubr.bf16.mxu0 %v635
      %1373 = vmatmul.mubr.bf16.gmra.mxu0 %v599
      %v1374 = vpop.f32.mrf.mxu0
      %v1375 = vadd.f32 0.0, %v1374
      %v1376 = vpop.f32.mrf.mxu0
      %v1377 = vpop.f32.mrf.mxu0
      %v1378 = vadd.f32 0.0, %v1377
      %v1379 = vpop.f32.mrf.mxu0
      %1380 = vmatprep.mubr.bf16.mxu0 %v636
      %1381 = vmatmul.mubr.bf16.gmra.mxu0 %v600
      %v1382 = vpop.f32.mrf.mxu0
      %v1383 = vadd.f32 0.0, %v1382
      %v1384 = vpop.f32.mrf.mxu0
      %v1385 = vpop.f32.mrf.mxu0
      %v1386 = vadd.f32 0.0, %v1385
      %v1387 = vpop.f32.mrf.mxu0
      %1388 = vmatprep.mubr.bf16.mxu0 %v637
      %1389 = vmatmul.mubr.bf16.gmra.mxu0 %v601
      %v1390 = vpop.f32.mrf.mxu0
      %v1391 = vadd.f32 0.0, %v1390
      %v1392 = vpop.f32.mrf.mxu0
      %v1393 = vpop.f32.mrf.mxu0
      %v1394 = vadd.f32 0.0, %v1393
      %v1395 = vpop.f32.mrf.mxu0
      %1396 = vmatprep.mubr.bf16.mxu0 %v638
      %1397 = vmatmul.mubr.bf16.gmra.mxu0 %v602
      %v1398 = vpop.f32.mrf.mxu0
      %v1399 = vadd.f32 0.0, %v1398
      %v1400 = vpop.f32.mrf.mxu0
      %v1401 = vpop.f32.mrf.mxu0
      %v1402 = vadd.f32 0.0, %v1401
      %v1403 = vpop.f32.mrf.mxu0
      %1404 = vmatprep.mubr.bf16.mxu0 %v639
      %1405 = vmatmul.mubr.bf16.gmra.mxu0 %v603
      %v1406 = vpop.f32.mrf.mxu0
      %v1407 = vadd.f32 0.0, %v1406
      %v1408 = vpop.f32.mrf.mxu0
      %v1409 = vpop.f32.mrf.mxu0
      %v1410 = vadd.f32 0.0, %v1409
      %v1411 = vpop.f32.mrf.mxu0
      %1412 = vmatprep.mubr.bf16.mxu0 %v640
      %1413 = vmatmul.mubr.bf16.gmra.mxu0 %v604
      %v1414 = vpop.f32.mrf.mxu0
      %v1415 = vadd.f32 0.0, %v1414
      %v1416 = vpop.f32.mrf.mxu0
      %v1417 = vpop.f32.mrf.mxu0
      %v1418 = vadd.f32 0.0, %v1417
      %v1419 = vpop.f32.mrf.mxu0
      %1420 = vmatprep.mubr.bf16.mxu0 %v641
      %1421 = vmatmul.mubr.bf16.gmra.mxu0 %v605
      %v1422 = vpop.f32.mrf.mxu0
      %v1423 = vadd.f32 0.0, %v1422
      %v1424 = vpop.f32.mrf.mxu0
      %v1425 = vpop.f32.mrf.mxu0
      %v1426 = vadd.f32 0.0, %v1425
      %v1427 = vpop.f32.mrf.mxu0
      %1428 = vmatprep.mubr.bf16.mxu0 %v642
      %1429 = vmatmul.mubr.bf16.gmra.mxu0 %v606
      %v1430 = vpop.f32.mrf.mxu0
      %v1431 = vadd.f32 0.0, %v1430
      %v1432 = vpop.f32.mrf.mxu0
      %v1433 = vpop.f32.mrf.mxu0
      %v1434 = vadd.f32 0.0, %v1433
      %v1435 = vpop.f32.mrf.mxu0
      %1436 = vmatprep.mubr.bf16.mxu0 %v643
      %1437 = vmatmul.mubr.bf16.gmra.mxu0 %v607
      %v1438 = vpop.f32.mrf.mxu0
      %v1439 = vadd.f32 0.0, %v1438
      %v1440 = vpop.f32.mrf.mxu0
      %v1441 = vpop.f32.mrf.mxu0
      %v1442 = vadd.f32 0.0, %v1441
      %v1443 = vpop.f32.mrf.mxu0
      %1444 = vmatprep.mubr.bf16.mxu0 %v644
      %1445 = vmatmul.mubr.bf16.gmra.mxu0 %v608
      %v1446 = vpop.f32.mrf.mxu0
      %v1447 = vadd.f32 0.0, %v1446
      %v1448 = vpop.f32.mrf.mxu0
      %v1449 = vpop.f32.mrf.mxu0
      %v1450 = vadd.f32 0.0, %v1449
      %v1451 = vpop.f32.mrf.mxu0
      %1452 = vmatprep.mubr.bf16.mxu0 %v645
      %1453 = vmatmul.mubr.bf16.gmra.mxu0 %v609
      %v1454 = vpop.f32.mrf.mxu0
      %v1455 = vadd.f32 0.0, %v1454
      %v1456 = vpop.f32.mrf.mxu0
      %v1457 = vpop.f32.mrf.mxu0
      %v1458 = vadd.f32 0.0, %v1457
      %v1459 = vpop.f32.mrf.mxu0
      %1460 = vmatprep.mubr.bf16.mxu0 %v646
      %1461 = vmatmul.mubr.bf16.gmra.mxu0 %v610
      %v1462 = vpop.f32.mrf.mxu0
      %v1463 = vadd.f32 0.0, %v1462
      %v1464 = vpop.f32.mrf.mxu0
      %v1465 = vpop.f32.mrf.mxu0
      %v1466 = vadd.f32 0.0, %v1465
      %v1467 = vpop.f32.mrf.mxu0
      %1468 = vmatprep.mubr.bf16.mxu0 %v647
      %1469 = vmatmul.mubr.bf16.gmra.mxu0 %v611
      %v1470 = vpop.f32.mrf.mxu0
      %v1471 = vadd.f32 0.0, %v1470
      %v1472 = vpop.f32.mrf.mxu0
      %v1473 = vpop.f32.mrf.mxu0
      %v1474 = vadd.f32 0.0, %v1473
      %v1475 = vpop.f32.mrf.mxu0
      %1476 = vmatprep.mubr.bf16.mxu0 %v648
      %1477 = vmatmul.mubr.bf16.gmra.mxu0 %v612
      %v1478 = vpop.f32.mrf.mxu0
      %v1479 = vadd.f32 0.0, %v1478
      %v1480 = vpop.f32.mrf.mxu0
      %v1481 = vpop.f32.mrf.mxu0
      %v1482 = vadd.f32 0.0, %v1481
      %v1483 = vpop.f32.mrf.mxu0
      %1484 = vmatprep.mubr.bf16.mxu0 %v649
      %1485 = vmatmul.mubr.bf16.gmra.mxu0 %v613
      %v1486 = vpop.f32.mrf.mxu0
      %v1487 = vadd.f32 0.0, %v1486
      %v1488 = vpop.f32.mrf.mxu0
      %v1489 = vpop.f32.mrf.mxu0
      %v1490 = vadd.f32 0.0, %v1489
      %v1491 = vpop.f32.mrf.mxu0
      %1492 = vmatprep.mubr.bf16.mxu0 %v650
      %1493 = vmatmul.mubr.bf16.gmra.mxu0 %v614
      %v1494 = vpop.f32.mrf.mxu0
      %v1495 = vadd.f32 0.0, %v1494
      %v1496 = vpop.f32.mrf.mxu0
      %v1497 = vpop.f32.mrf.mxu0
      %v1498 = vadd.f32 0.0, %v1497
      %v1499 = vpop.f32.mrf.mxu0
      %1500 = vmatprep.mubr.bf16.mxu0 %v651
      %1501 = vmatmul.mubr.bf16.gmra.mxu0 %v615
      %v1502 = vpop.f32.mrf.mxu0
      %v1503 = vadd.f32 0.0, %v1502
      %v1504 = vpop.f32.mrf.mxu0
      %v1505 = vpop.f32.mrf.mxu0
      %v1506 = vadd.f32 0.0, %v1505
      %v1507 = vpop.f32.mrf.mxu0
      %1508 = vmatprep.mubr.bf16.mxu0 %v652
      %1509 = vmatmul.mubr.bf16.gmra.mxu0 %v616
      %v1510 = vpop.f32.mrf.mxu0
      %v1511 = vadd.f32 0.0, %v1510
      %v1512 = vpop.f32.mrf.mxu0
      %v1513 = vpop.f32.mrf.mxu0
      %v1514 = vadd.f32 0.0, %v1513
      %v1515 = vpop.f32.mrf.mxu0
      %1516 = vmatprep.mubr.bf16.mxu0 %v653
      %1517 = vmatmul.mubr.bf16.gmra.mxu0 %v617
      %v1518 = vpop.f32.mrf.mxu0
      %v1519 = vadd.f32 0.0, %v1518
      %v1520 = vpop.f32.mrf.mxu0
      %v1521 = vpop.f32.mrf.mxu0
      %v1522 = vadd.f32 0.0, %v1521
      %v1523 = vpop.f32.mrf.mxu0
      %1524 = vmatprep.mubr.bf16.mxu0 %v654
      %1525 = vmatmul.mubr.bf16.gmra.mxu0 %v618
      %v1526 = vpop.f32.mrf.mxu0
      %v1527 = vadd.f32 0.0, %v1526
      %v1528 = vpop.f32.mrf.mxu0
      %v1529 = vpop.f32.mrf.mxu0
      %v1530 = vadd.f32 0.0, %v1529
      %v1531 = vpop.f32.mrf.mxu0
      %1532 = vmatprep.mubr.bf16.mxu0 %v655
      %1533 = vmatmul.mubr.bf16.gmra.mxu0 %v619
      %v1534 = vpop.f32.mrf.mxu0
      %v1535 = vadd.f32 0.0, %v1534
      %v1536 = vpop.f32.mrf.mxu0
      %v1537 = vpop.f32.mrf.mxu0
      %v1538 = vadd.f32 0.0, %v1537
      %v1539 = vpop.f32.mrf.mxu0
      %1540 = vmatprep.mubr.bf16.mxu0 %v656
      %1541 = vmatmul.mubr.bf16.gmra.mxu0 %v620
      %v1542 = vpop.f32.mrf.mxu0
      %v1543 = vadd.f32 0.0, %v1542
      %v1544 = vpop.f32.mrf.mxu0
      %v1545 = vpop.f32.mrf.mxu0
      %v1546 = vadd.f32 0.0, %v1545
      %v1547 = vpop.f32.mrf.mxu0
      %1548 = vmatprep.mubr.bf16.mxu0 %v657
      %1549 = vmatmul.mubr.bf16.gmra.mxu0 %v621
      %v1550 = vpop.f32.mrf.mxu0
      %v1551 = vadd.f32 0.0, %v1550
      %v1552 = vpop.f32.mrf.mxu0
      %v1553 = vpop.f32.mrf.mxu0
      %v1554 = vadd.f32 0.0, %v1553
      %v1555 = vpop.f32.mrf.mxu0
      %1556 = vmatprep.mubr.bf16.mxu0 %v658
      %1557 = vmatmul.mubr.bf16.gmra.mxu0 %v622
      %v1558 = vpop.f32.mrf.mxu0
      %v1559 = vadd.f32 0.0, %v1558
      %v1560 = vpop.f32.mrf.mxu0
      %v1561 = vpop.f32.mrf.mxu0
      %v1562 = vadd.f32 0.0, %v1561
      %v1563 = vpop.f32.mrf.mxu0
      %1564 = vdwg.mxu0
      %1565 = vmatprep.subr.bf16.mxu0 0
      %1566 = vmatpush1.bf16.msra.mxu0 %v1155
      %1567 = vmatprep.subr.bf16.mxu0 0
      %1568 = vmatpush1.bf16.msra.mxu0 %v1154
      %1569 = vmatprep.subr.bf16.mxu0 0
      %1570 = vmatpush1.bf16.msra.mxu0 %v1153
      %1571 = vmatprep.subr.bf16.mxu0 0
      %1572 = vmatpush1.bf16.msra.mxu0 %v1152
      %1573 = vmatprep.subr.bf16.mxu0 0
      %1574 = vmatpush1.bf16.msra.mxu0 %v1151
      %1575 = vmatprep.subr.bf16.mxu0 0
      %1576 = vmatpush1.bf16.msra.mxu0 %v1150
      %1577 = vmatprep.subr.bf16.mxu0 0
      %1578 = vmatpush1.bf16.msra.mxu0 %v1149
      %1579 = vmatprep.subr.bf16.mxu0 0
      %1580 = vmatpush1.bf16.msra.mxu0 %v1148
      %1581 = vmatprep.subr.bf16.mxu0 0
      %1582 = vmatpush2.bf16.msra.mxu0 %v1163
      %1583 = vmatprep.subr.bf16.mxu0 0
      %1584 = vmatpush2.bf16.msra.mxu0 %v1162
      %1585 = vmatprep.subr.bf16.mxu0 0
      %1586 = vmatpush2.bf16.msra.mxu0 %v1161
      %1587 = vmatprep.subr.bf16.mxu0 0
      %1588 = vmatpush2.bf16.msra.mxu0 %v1160
      %1589 = vmatprep.subr.bf16.mxu0 0
      %1590 = vmatpush2.bf16.msra.mxu0 %v1159
      %1591 = vmatprep.subr.bf16.mxu0 0
      %1592 = vmatpush2.bf16.msra.mxu0 %v1158
      %1593 = vmatprep.subr.bf16.mxu0 0
      %1594 = vmatpush2.bf16.msra.mxu0 %v1157
      %1595 = vmatprep.subr.bf16.mxu0 0
      %1596 = vmatpush2.bf16.msra.mxu0 %v1156
      %1597 = vmatprep.mubr.bf16.mxu0 %v593
      %1598 = vmatmul.mubr.bf16.gmra.mxu0 %v808
      %v1599 = vpop.f32.mrf.mxu0
      %v1600 = vadd.f32 %v1311, %v1599
      %v1601 = vpop.f32.mrf.mxu0
      %v1602 = vpop.f32.mrf.mxu0
      %v1603 = vadd.f32 %v1314, %v1602
      %v1604 = vpop.f32.mrf.mxu0
      %1605 = vmatprep.mubr.bf16.mxu0 %v594
      %1606 = vmatmul.mubr.bf16.gmra.mxu0 %v809
      %v1607 = vpop.f32.mrf.mxu0
      %v1608 = vadd.f32 %v1319, %v1607
      %v1609 = vpop.f32.mrf.mxu0
      %v1610 = vpop.f32.mrf.mxu0
      %v1611 = vadd.f32 %v1322, %v1610
      %v1612 = vpop.f32.mrf.mxu0
      %1613 = vmatprep.mubr.bf16.mxu0 %v595
      %1614 = vmatmul.mubr.bf16.gmra.mxu0 %v810
      %v1615 = vpop.f32.mrf.mxu0
      %v1616 = vadd.f32 %v1327, %v1615
      %v1617 = vpop.f32.mrf.mxu0
      %v1618 = vpop.f32.mrf.mxu0
      %v1619 = vadd.f32 %v1330, %v1618
      %v1620 = vpop.f32.mrf.mxu0
      %1621 = vmatprep.mubr.bf16.mxu0 %v596
      %1622 = vmatmul.mubr.bf16.gmra.mxu0 %v811
      %v1623 = vpop.f32.mrf.mxu0
      %v1624 = vadd.f32 %v1335, %v1623
      %v1625 = vpop.f32.mrf.mxu0
      %v1626 = vpop.f32.mrf.mxu0
      %v1627 = vadd.f32 %v1338, %v1626
      %v1628 = vpop.f32.mrf.mxu0
      %1629 = vmatprep.mubr.bf16.mxu0 %v597
      %1630 = vmatmul.mubr.bf16.gmra.mxu0 %v812
      %v1631 = vpop.f32.mrf.mxu0
      %v1632 = vadd.f32 %v1343, %v1631
      %v1633 = vpop.f32.mrf.mxu0
      %v1634 = vpop.f32.mrf.mxu0
      %v1635 = vadd.f32 %v1346, %v1634
      %v1636 = vpop.f32.mrf.mxu0
      %1637 = vmatprep.mubr.bf16.mxu0 %v598
      %1638 = vmatmul.mubr.bf16.gmra.mxu0 %v813
      %v1639 = vpop.f32.mrf.mxu0
      %v1640 = vadd.f32 %v1351, %v1639
      %v1641 = vpop.f32.mrf.mxu0
      %v1642 = vpop.f32.mrf.mxu0
      %v1643 = vadd.f32 %v1354, %v1642
      %v1644 = vpop.f32.mrf.mxu0
      %1645 = vmatprep.mubr.bf16.mxu0 %v599
      %1646 = vmatmul.mubr.bf16.gmra.mxu0 %v814
      %v1647 = vpop.f32.mrf.mxu0
      %v1648 = vadd.f32 %v1359, %v1647
      %v1649 = vpop.f32.mrf.mxu0
      %v1650 = vpop.f32.mrf.mxu0
      %v1651 = vadd.f32 %v1362, %v1650
      %v1652 = vpop.f32.mrf.mxu0
      %1653 = vmatprep.mubr.bf16.mxu0 %v600
      %1654 = vmatmul.mubr.bf16.gmra.mxu0 %v815
      %v1655 = vpop.f32.mrf.mxu0
      %v1656 = vadd.f32 %v1367, %v1655
      %v1657 = vpop.f32.mrf.mxu0
      %v1658 = vpop.f32.mrf.mxu0
      %v1659 = vadd.f32 %v1370, %v1658
      %v1660 = vpop.f32.mrf.mxu0
      %1661 = vmatprep.mubr.bf16.mxu0 %v601
      %1662 = vmatmul.mubr.bf16.gmra.mxu0 %v816
      %v1663 = vpop.f32.mrf.mxu0
      %v1664 = vadd.f32 %v1375, %v1663
      %v1665 = vpop.f32.mrf.mxu0
      %v1666 = vpop.f32.mrf.mxu0
      %v1667 = vadd.f32 %v1378, %v1666
      %v1668 = vpop.f32.mrf.mxu0
      %1669 = vmatprep.mubr.bf16.mxu0 %v602
      %1670 = vmatmul.mubr.bf16.gmra.mxu0 %v817
      %v1671 = vpop.f32.mrf.mxu0
      %v1672 = vadd.f32 %v1383, %v1671
      %v1673 = vpop.f32.mrf.mxu0
      %v1674 = vpop.f32.mrf.mxu0
      %v1675 = vadd.f32 %v1386, %v1674
      %v1676 = vpop.f32.mrf.mxu0
      %1677 = vmatprep.mubr.bf16.mxu0 %v603
      %1678 = vmatmul.mubr.bf16.gmra.mxu0 %v818
      %v1679 = vpop.f32.mrf.mxu0
      %v1680 = vadd.f32 %v1391, %v1679
      %v1681 = vpop.f32.mrf.mxu0
      %v1682 = vpop.f32.mrf.mxu0
      %v1683 = vadd.f32 %v1394, %v1682
      %v1684 = vpop.f32.mrf.mxu0
      %1685 = vmatprep.mubr.bf16.mxu0 %v604
      %1686 = vmatmul.mubr.bf16.gmra.mxu0 %v819
      %v1687 = vpop.f32.mrf.mxu0
      %v1688 = vadd.f32 %v1399, %v1687
      %v1689 = vpop.f32.mrf.mxu0
      %v1690 = vpop.f32.mrf.mxu0
      %v1691 = vadd.f32 %v1402, %v1690
      %v1692 = vpop.f32.mrf.mxu0
      %1693 = vmatprep.mubr.bf16.mxu0 %v605
      %1694 = vmatmul.mubr.bf16.gmra.mxu0 %v820
      %v1695 = vpop.f32.mrf.mxu0
      %v1696 = vadd.f32 %v1407, %v1695
      %v1697 = vpop.f32.mrf.mxu0
      %v1698 = vpop.f32.mrf.mxu0
      %v1699 = vadd.f32 %v1410, %v1698
      %v1700 = vpop.f32.mrf.mxu0
      %1701 = vmatprep.mubr.bf16.mxu0 %v606
      %1702 = vmatmul.mubr.bf16.gmra.mxu0 %v821
      %v1703 = vpop.f32.mrf.mxu0
      %v1704 = vadd.f32 %v1415, %v1703
      %v1705 = vpop.f32.mrf.mxu0
      %v1706 = vpop.f32.mrf.mxu0
      %v1707 = vadd.f32 %v1418, %v1706
      %v1708 = vpop.f32.mrf.mxu0
      %1709 = vmatprep.mubr.bf16.mxu0 %v607
      %1710 = vmatmul.mubr.bf16.gmra.mxu0 %v822
      %v1711 = vpop.f32.mrf.mxu0
      %v1712 = vadd.f32 %v1423, %v1711
      %v1713 = vpop.f32.mrf.mxu0
      %v1714 = vpop.f32.mrf.mxu0
      %v1715 = vadd.f32 %v1426, %v1714
      %v1716 = vpop.f32.mrf.mxu0
      %1717 = vmatprep.mubr.bf16.mxu0 %v608
      %1718 = vmatmul.mubr.bf16.gmra.mxu0 %v823
      %v1719 = vpop.f32.mrf.mxu0
      %v1720 = vadd.f32 %v1431, %v1719
      %v1721 = vpop.f32.mrf.mxu0
      %v1722 = vpop.f32.mrf.mxu0
      %v1723 = vadd.f32 %v1434, %v1722
      %v1724 = vpop.f32.mrf.mxu0
      %1725 = vmatprep.mubr.bf16.mxu0 %v609
      %1726 = vmatmul.mubr.bf16.gmra.mxu0 %v824
      %v1727 = vpop.f32.mrf.mxu0
      %v1728 = vadd.f32 %v1439, %v1727
      %v1729 = vpop.f32.mrf.mxu0
      %v1730 = vpop.f32.mrf.mxu0
      %v1731 = vadd.f32 %v1442, %v1730
      %v1732 = vpop.f32.mrf.mxu0
      %1733 = vmatprep.mubr.bf16.mxu0 %v610
      %1734 = vmatmul.mubr.bf16.gmra.mxu0 %v825
      %v1735 = vpop.f32.mrf.mxu0
      %v1736 = vadd.f32 %v1447, %v1735
      %v1737 = vpop.f32.mrf.mxu0
      %v1738 = vpop.f32.mrf.mxu0
      %v1739 = vadd.f32 %v1450, %v1738
      %v1740 = vpop.f32.mrf.mxu0
      %1741 = vmatprep.mubr.bf16.mxu0 %v611
      %1742 = vmatmul.mubr.bf16.gmra.mxu0 %v826
      %v1743 = vpop.f32.mrf.mxu0
      %v1744 = vadd.f32 %v1455, %v1743
      %v1745 = vpop.f32.mrf.mxu0
      %v1746 = vpop.f32.mrf.mxu0
      %v1747 = vadd.f32 %v1458, %v1746
      %v1748 = vpop.f32.mrf.mxu0
      %1749 = vmatprep.mubr.bf16.mxu0 %v612
      %1750 = vmatmul.mubr.bf16.gmra.mxu0 %v827
      %v1751 = vpop.f32.mrf.mxu0
      %v1752 = vadd.f32 %v1463, %v1751
      %v1753 = vpop.f32.mrf.mxu0
      %v1754 = vpop.f32.mrf.mxu0
      %v1755 = vadd.f32 %v1466, %v1754
      %v1756 = vpop.f32.mrf.mxu0
      %1757 = vmatprep.mubr.bf16.mxu0 %v613
      %1758 = vmatmul.mubr.bf16.gmra.mxu0 %v828
      %v1759 = vpop.f32.mrf.mxu0
      %v1760 = vadd.f32 %v1471, %v1759
      %v1761 = vpop.f32.mrf.mxu0
      %v1762 = vpop.f32.mrf.mxu0
      %v1763 = vadd.f32 %v1474, %v1762
      %v1764 = vpop.f32.mrf.mxu0
      %1765 = vmatprep.mubr.bf16.mxu0 %v614
      %1766 = vmatmul.mubr.bf16.gmra.mxu0 %v829
      %v1767 = vpop.f32.mrf.mxu0
      %v1768 = vadd.f32 %v1479, %v1767
      %v1769 = vpop.f32.mrf.mxu0
      %v1770 = vpop.f32.mrf.mxu0
      %v1771 = vadd.f32 %v1482, %v1770
      %v1772 = vpop.f32.mrf.mxu0
      %1773 = vmatprep.mubr.bf16.mxu0 %v615
      %1774 = vmatmul.mubr.bf16.gmra.mxu0 %v830
      %v1775 = vpop.f32.mrf.mxu0
      %v1776 = vadd.f32 %v1487, %v1775
      %v1777 = vpop.f32.mrf.mxu0
      %v1778 = vpop.f32.mrf.mxu0
      %v1779 = vadd.f32 %v1490, %v1778
      %v1780 = vpop.f32.mrf.mxu0
      %1781 = vmatprep.mubr.bf16.mxu0 %v616
      %1782 = vmatmul.mubr.bf16.gmra.mxu0 %v831
      %v1783 = vpop.f32.mrf.mxu0
      %v1784 = vadd.f32 %v1495, %v1783
      %v1785 = vpop.f32.mrf.mxu0
      %v1786 = vpop.f32.mrf.mxu0
      %v1787 = vadd.f32 %v1498, %v1786
      %v1788 = vpop.f32.mrf.mxu0
      %1789 = vmatprep.mubr.bf16.mxu0 %v617
      %1790 = vmatmul.mubr.bf16.gmra.mxu0 %v832
      %v1791 = vpop.f32.mrf.mxu0
      %v1792 = vadd.f32 %v1503, %v1791
      %v1793 = vpop.f32.mrf.mxu0
      %v1794 = vpop.f32.mrf.mxu0
      %v1795 = vadd.f32 %v1506, %v1794
      %v1796 = vpop.f32.mrf.mxu0
      %1797 = vmatprep.mubr.bf16.mxu0 %v618
      %1798 = vmatmul.mubr.bf16.gmra.mxu0 %v833
      %v1799 = vpop.f32.mrf.mxu0
      %v1800 = vadd.f32 %v1511, %v1799
      %v1801 = vpop.f32.mrf.mxu0
      %v1802 = vpop.f32.mrf.mxu0
      %v1803 = vadd.f32 %v1514, %v1802
      %v1804 = vpop.f32.mrf.mxu0
      %1805 = vmatprep.mubr.bf16.mxu0 %v619
      %1806 = vmatmul.mubr.bf16.gmra.mxu0 %v834
      %v1807 = vpop.f32.mrf.mxu0
      %v1808 = vadd.f32 %v1519, %v1807
      %v1809 = vpop.f32.mrf.mxu0
      %v1810 = vpop.f32.mrf.mxu0
      %v1811 = vadd.f32 %v1522, %v1810
      %v1812 = vpop.f32.mrf.mxu0
      %1813 = vmatprep.mubr.bf16.mxu0 %v620
      %1814 = vmatmul.mubr.bf16.gmra.mxu0 %v835
      %v1815 = vpop.f32.mrf.mxu0
      %v1816 = vadd.f32 %v1527, %v1815
      %v1817 = vpop.f32.mrf.mxu0
      %v1818 = vpop.f32.mrf.mxu0
      %v1819 = vadd.f32 %v1530, %v1818
      %v1820 = vpop.f32.mrf.mxu0
      %1821 = vmatprep.mubr.bf16.mxu0 %v621
      %1822 = vmatmul.mubr.bf16.gmra.mxu0 %v836
      %v1823 = vpop.f32.mrf.mxu0
      %v1824 = vadd.f32 %v1535, %v1823
      %v1825 = vpop.f32.mrf.mxu0
      %v1826 = vpop.f32.mrf.mxu0
      %v1827 = vadd.f32 %v1538, %v1826
      %v1828 = vpop.f32.mrf.mxu0
      %1829 = vmatprep.mubr.bf16.mxu0 %v622
      %1830 = vmatmul.mubr.bf16.gmra.mxu0 %v837
      %v1831 = vpop.f32.mrf.mxu0
      %v1832 = vadd.f32 %v1543, %v1831
      %v1833 = vpop.f32.mrf.mxu0
      %v1834 = vpop.f32.mrf.mxu0
      %v1835 = vadd.f32 %v1546, %v1834
      %v1836 = vpop.f32.mrf.mxu0
      %1837 = vmatprep.mubr.bf16.mxu0 %v623
      %1838 = vmatmul.mubr.bf16.gmra.mxu0 %v838
      %v1839 = vpop.f32.mrf.mxu0
      %v1840 = vadd.f32 %v1551, %v1839
      %v1841 = vpop.f32.mrf.mxu0
      %v1842 = vpop.f32.mrf.mxu0
      %v1843 = vadd.f32 %v1554, %v1842
      %v1844 = vpop.f32.mrf.mxu0
      %1845 = vmatprep.mubr.bf16.mxu0 %v624
      %1846 = vmatmul.mubr.bf16.gmra.mxu0 %v839
      %v1847 = vpop.f32.mrf.mxu0
      %v1848 = vadd.f32 %v1559, %v1847
      %v1849 = vpop.f32.mrf.mxu0
      %v1850 = vpop.f32.mrf.mxu0
      %v1851 = vadd.f32 %v1562, %v1850
      %v1852 = vpop.f32.mrf.mxu0
      %1853 = vdwg.mxu0
      %1854 = vmatprep.subr.bf16.mxu0 0
      %1855 = vmatpush1.bf16.msra.mxu0 %v1171
      %1856 = vmatprep.subr.bf16.mxu0 0
      %1857 = vmatpush1.bf16.msra.mxu0 %v1170
      %1858 = vmatprep.subr.bf16.mxu0 0
      %1859 = vmatpush1.bf16.msra.mxu0 %v1169
      %1860 = vmatprep.subr.bf16.mxu0 0
      %1861 = vmatpush1.bf16.msra.mxu0 %v1168
      %1862 = vmatprep.subr.bf16.mxu0 0
      %1863 = vmatpush1.bf16.msra.mxu0 %v1167
      %1864 = vmatprep.subr.bf16.mxu0 0
      %1865 = vmatpush1.bf16.msra.mxu0 %v1166
      %1866 = vmatprep.subr.bf16.mxu0 0
      %1867 = vmatpush1.bf16.msra.mxu0 %v1165
      %1868 = vmatprep.subr.bf16.mxu0 0
      %1869 = vmatpush1.bf16.msra.mxu0 %v1164
      %1870 = vmatprep.subr.bf16.mxu0 0
      %1871 = vmatpush2.bf16.msra.mxu0 %v1179
      %1872 = vmatprep.subr.bf16.mxu0 0
      %1873 = vmatpush2.bf16.msra.mxu0 %v1178
      %1874 = vmatprep.subr.bf16.mxu0 0
      %1875 = vmatpush2.bf16.msra.mxu0 %v1177
      %1876 = vmatprep.subr.bf16.mxu0 0
      %1877 = vmatpush2.bf16.msra.mxu0 %v1176
      %1878 = vmatprep.subr.bf16.mxu0 0
      %1879 = vmatpush2.bf16.msra.mxu0 %v1175
      %1880 = vmatprep.subr.bf16.mxu0 0
      %1881 = vmatpush2.bf16.msra.mxu0 %v1174
      %1882 = vmatprep.subr.bf16.mxu0 0
      %1883 = vmatpush2.bf16.msra.mxu0 %v1173
      %1884 = vmatprep.subr.bf16.mxu0 0
      %1885 = vmatpush2.bf16.msra.mxu0 %v1172
      %1886 = vmatprep.mubr.bf16.mxu0 %v810
      %1887 = vmatmul.mubr.bf16.gmra.mxu0 %v629
      %v1888 = vpop.f32.mrf.mxu0
      %v1889 = vadd.f32 %v1600, %v1888
      %v1890 = vpop.f32.mrf.mxu0
      %v1891 = vpop.f32.mrf.mxu0
      %v1892 = vadd.f32 %v1603, %v1891
      %v1893 = vpop.f32.mrf.mxu0
      %1894 = vmatprep.mubr.bf16.mxu0 %v811
      %1895 = vmatmul.mubr.bf16.gmra.mxu0 %v630
      %v1896 = vpop.f32.mrf.mxu0
      %v1897 = vadd.f32 %v1608, %v1896
      %v1898 = vpop.f32.mrf.mxu0
      %v1899 = vpop.f32.mrf.mxu0
      %v1900 = vadd.f32 %v1611, %v1899
      %v1901 = vpop.f32.mrf.mxu0
      %1902 = vmatprep.mubr.bf16.mxu0 %v812
      %1903 = vmatmul.mubr.bf16.gmra.mxu0 %v631
      %v1904 = vpop.f32.mrf.mxu0
      %v1905 = vadd.f32 %v1616, %v1904
      %v1906 = vpop.f32.mrf.mxu0
      %v1907 = vpop.f32.mrf.mxu0
      %v1908 = vadd.f32 %v1619, %v1907
      %v1909 = vpop.f32.mrf.mxu0
      %1910 = vmatprep.mubr.bf16.mxu0 %v813
      %1911 = vmatmul.mubr.bf16.gmra.mxu0 %v632
      %v1912 = vpop.f32.mrf.mxu0
      %v1913 = vadd.f32 %v1624, %v1912
      %v1914 = vpop.f32.mrf.mxu0
      %v1915 = vpop.f32.mrf.mxu0
      %v1916 = vadd.f32 %v1627, %v1915
      %v1917 = vpop.f32.mrf.mxu0
      %1918 = vmatprep.mubr.bf16.mxu0 %v814
      %1919 = vmatmul.mubr.bf16.gmra.mxu0 %v633
      %v1920 = vpop.f32.mrf.mxu0
      %v1921 = vadd.f32 %v1632, %v1920
      %v1922 = vpop.f32.mrf.mxu0
      %v1923 = vpop.f32.mrf.mxu0
      %v1924 = vadd.f32 %v1635, %v1923
      %v1925 = vpop.f32.mrf.mxu0
      %1926 = vmatprep.mubr.bf16.mxu0 %v815
      %1927 = vmatmul.mubr.bf16.gmra.mxu0 %v634
      %v1928 = vpop.f32.mrf.mxu0
      %v1929 = vadd.f32 %v1640, %v1928
      %v1930 = vpop.f32.mrf.mxu0
      %v1931 = vpop.f32.mrf.mxu0
      %v1932 = vadd.f32 %v1643, %v1931
      %v1933 = vpop.f32.mrf.mxu0
      %1934 = vmatprep.mubr.bf16.mxu0 %v816
      %1935 = vmatmul.mubr.bf16.gmra.mxu0 %v635
      %v1936 = vpop.f32.mrf.mxu0
      %v1937 = vadd.f32 %v1648, %v1936
      %v1938 = vpop.f32.mrf.mxu0
      %v1939 = vpop.f32.mrf.mxu0
      %v1940 = vadd.f32 %v1651, %v1939
      %v1941 = vpop.f32.mrf.mxu0
      %1942 = vmatprep.mubr.bf16.mxu0 %v817
      %1943 = vmatmul.mubr.bf16.gmra.mxu0 %v636
      %v1944 = vpop.f32.mrf.mxu0
      %v1945 = vadd.f32 %v1656, %v1944
      %v1946 = vpop.f32.mrf.mxu0
      %v1947 = vpop.f32.mrf.mxu0
      %v1948 = vadd.f32 %v1659, %v1947
      %v1949 = vpop.f32.mrf.mxu0
      %1950 = vmatprep.mubr.bf16.mxu0 %v818
      %1951 = vmatmul.mubr.bf16.gmra.mxu0 %v637
      %v1952 = vpop.f32.mrf.mxu0
      %v1953 = vadd.f32 %v1664, %v1952
      %v1954 = vpop.f32.mrf.mxu0
      %v1955 = vpop.f32.mrf.mxu0
      %v1956 = vadd.f32 %v1667, %v1955
      %v1957 = vpop.f32.mrf.mxu0
      %1958 = vmatprep.mubr.bf16.mxu0 %v819
      %1959 = vmatmul.mubr.bf16.gmra.mxu0 %v638
      %v1960 = vpop.f32.mrf.mxu0
      %v1961 = vadd.f32 %v1672, %v1960
      %v1962 = vpop.f32.mrf.mxu0
      %v1963 = vpop.f32.mrf.mxu0
      %v1964 = vadd.f32 %v1675, %v1963
      %v1965 = vpop.f32.mrf.mxu0
      %1966 = vmatprep.mubr.bf16.mxu0 %v820
      %1967 = vmatmul.mubr.bf16.gmra.mxu0 %v639
      %v1968 = vpop.f32.mrf.mxu0
      %v1969 = vadd.f32 %v1680, %v1968
      %v1970 = vpop.f32.mrf.mxu0
      %v1971 = vpop.f32.mrf.mxu0
      %v1972 = vadd.f32 %v1683, %v1971
      %v1973 = vpop.f32.mrf.mxu0
      %1974 = vmatprep.mubr.bf16.mxu0 %v821
      %1975 = vmatmul.mubr.bf16.gmra.mxu0 %v640
      %v1976 = vpop.f32.mrf.mxu0
      %v1977 = vadd.f32 %v1688, %v1976
      %v1978 = vpop.f32.mrf.mxu0
      %v1979 = vpop.f32.mrf.mxu0
      %v1980 = vadd.f32 %v1691, %v1979
      %v1981 = vpop.f32.mrf.mxu0
      %1982 = vmatprep.mubr.bf16.mxu0 %v822
      %1983 = vmatmul.mubr.bf16.gmra.mxu0 %v641
      %v1984 = vpop.f32.mrf.mxu0
      %v1985 = vadd.f32 %v1696, %v1984
      %v1986 = vpop.f32.mrf.mxu0
      %v1987 = vpop.f32.mrf.mxu0
      %v1988 = vadd.f32 %v1699, %v1987
      %v1989 = vpop.f32.mrf.mxu0
      %1990 = vmatprep.mubr.bf16.mxu0 %v823
      %1991 = vmatmul.mubr.bf16.gmra.mxu0 %v642
      %v1992 = vpop.f32.mrf.mxu0
      %v1993 = vadd.f32 %v1704, %v1992
      %v1994 = vpop.f32.mrf.mxu0
      %v1995 = vpop.f32.mrf.mxu0
      %v1996 = vadd.f32 %v1707, %v1995
      %v1997 = vpop.f32.mrf.mxu0
      %1998 = vmatprep.mubr.bf16.mxu0 %v824
      %1999 = vmatmul.mubr.bf16.gmra.mxu0 %v643
      %v2000 = vpop.f32.mrf.mxu0
      %v2001 = vadd.f32 %v1712, %v2000
      %v2002 = vpop.f32.mrf.mxu0
      %v2003 = vpop.f32.mrf.mxu0
      %v2004 = vadd.f32 %v1715, %v2003
      %v2005 = vpop.f32.mrf.mxu0
      %2006 = vmatprep.mubr.bf16.mxu0 %v825
      %2007 = vmatmul.mubr.bf16.gmra.mxu0 %v644
      %v2008 = vpop.f32.mrf.mxu0
      %v2009 = vadd.f32 %v1720, %v2008
      %v2010 = vpop.f32.mrf.mxu0
      %v2011 = vpop.f32.mrf.mxu0
      %v2012 = vadd.f32 %v1723, %v2011
      %v2013 = vpop.f32.mrf.mxu0
      %2014 = vmatprep.mubr.bf16.mxu0 %v826
      %2015 = vmatmul.mubr.bf16.gmra.mxu0 %v645
      %v2016 = vpop.f32.mrf.mxu0
      %v2017 = vadd.f32 %v1728, %v2016
      %v2018 = vpop.f32.mrf.mxu0
      %v2019 = vpop.f32.mrf.mxu0
      %v2020 = vadd.f32 %v1731, %v2019
      %v2021 = vpop.f32.mrf.mxu0
      %2022 = vmatprep.mubr.bf16.mxu0 %v827
      %2023 = vmatmul.mubr.bf16.gmra.mxu0 %v646
      %v2024 = vpop.f32.mrf.mxu0
      %v2025 = vadd.f32 %v1736, %v2024
      %v2026 = vpop.f32.mrf.mxu0
      %v2027 = vpop.f32.mrf.mxu0
      %v2028 = vadd.f32 %v1739, %v2027
      %v2029 = vpop.f32.mrf.mxu0
      %2030 = vmatprep.mubr.bf16.mxu0 %v828
      %2031 = vmatmul.mubr.bf16.gmra.mxu0 %v647
      %v2032 = vpop.f32.mrf.mxu0
      %v2033 = vadd.f32 %v1744, %v2032
      %v2034 = vpop.f32.mrf.mxu0
      %v2035 = vpop.f32.mrf.mxu0
      %v2036 = vadd.f32 %v1747, %v2035
      %v2037 = vpop.f32.mrf.mxu0
      %2038 = vmatprep.mubr.bf16.mxu0 %v829
      %2039 = vmatmul.mubr.bf16.gmra.mxu0 %v648
      %v2040 = vpop.f32.mrf.mxu0
      %v2041 = vadd.f32 %v1752, %v2040
      %v2042 = vpop.f32.mrf.mxu0
      %v2043 = vpop.f32.mrf.mxu0
      %v2044 = vadd.f32 %v1755, %v2043
      %v2045 = vpop.f32.mrf.mxu0
      %2046 = vmatprep.mubr.bf16.mxu0 %v830
      %2047 = vmatmul.mubr.bf16.gmra.mxu0 %v649
      %v2048 = vpop.f32.mrf.mxu0
      %v2049 = vadd.f32 %v1760, %v2048
      %v2050 = vpop.f32.mrf.mxu0
      %v2051 = vpop.f32.mrf.mxu0
      %v2052 = vadd.f32 %v1763, %v2051
      %v2053 = vpop.f32.mrf.mxu0
      %2054 = vmatprep.mubr.bf16.mxu0 %v831
      %2055 = vmatmul.mubr.bf16.gmra.mxu0 %v650
      %v2056 = vpop.f32.mrf.mxu0
      %v2057 = vadd.f32 %v1768, %v2056
      %v2058 = vpop.f32.mrf.mxu0
      %v2059 = vpop.f32.mrf.mxu0
      %v2060 = vadd.f32 %v1771, %v2059
      %v2061 = vpop.f32.mrf.mxu0
      %2062 = vmatprep.mubr.bf16.mxu0 %v832
      %2063 = vmatmul.mubr.bf16.gmra.mxu0 %v651
      %v2064 = vpop.f32.mrf.mxu0
      %v2065 = vadd.f32 %v1776, %v2064
      %v2066 = vpop.f32.mrf.mxu0
      %v2067 = vpop.f32.mrf.mxu0
      %v2068 = vadd.f32 %v1779, %v2067
      %v2069 = vpop.f32.mrf.mxu0
      %2070 = vmatprep.mubr.bf16.mxu0 %v833
      %2071 = vmatmul.mubr.bf16.gmra.mxu0 %v652
      %v2072 = vpop.f32.mrf.mxu0
      %v2073 = vadd.f32 %v1784, %v2072
      %v2074 = vpop.f32.mrf.mxu0
      %v2075 = vpop.f32.mrf.mxu0
      %v2076 = vadd.f32 %v1787, %v2075
      %v2077 = vpop.f32.mrf.mxu0
      %2078 = vmatprep.mubr.bf16.mxu0 %v834
      %2079 = vmatmul.mubr.bf16.gmra.mxu0 %v653
      %v2080 = vpop.f32.mrf.mxu0
      %v2081 = vadd.f32 %v1792, %v2080
      %v2082 = vpop.f32.mrf.mxu0
      %v2083 = vpop.f32.mrf.mxu0
      %v2084 = vadd.f32 %v1795, %v2083
      %v2085 = vpop.f32.mrf.mxu0
      %2086 = vmatprep.mubr.bf16.mxu0 %v835
      %2087 = vmatmul.mubr.bf16.gmra.mxu0 %v654
      %v2088 = vpop.f32.mrf.mxu0
      %v2089 = vadd.f32 %v1800, %v2088
      %v2090 = vpop.f32.mrf.mxu0
      %v2091 = vpop.f32.mrf.mxu0
      %v2092 = vadd.f32 %v1803, %v2091
      %v2093 = vpop.f32.mrf.mxu0
      %2094 = vmatprep.mubr.bf16.mxu0 %v836
      %2095 = vmatmul.mubr.bf16.gmra.mxu0 %v655
      %v2096 = vpop.f32.mrf.mxu0
      %v2097 = vadd.f32 %v1808, %v2096
      %v2098 = vpop.f32.mrf.mxu0
      %v2099 = vpop.f32.mrf.mxu0
      %v2100 = vadd.f32 %v1811, %v2099
      %v2101 = vpop.f32.mrf.mxu0
      %2102 = vmatprep.mubr.bf16.mxu0 %v837
      %2103 = vmatmul.mubr.bf16.gmra.mxu0 %v656
      %v2104 = vpop.f32.mrf.mxu0
      %v2105 = vadd.f32 %v1816, %v2104
      %v2106 = vpop.f32.mrf.mxu0
      %v2107 = vpop.f32.mrf.mxu0
      %v2108 = vadd.f32 %v1819, %v2107
      %v2109 = vpop.f32.mrf.mxu0
      %2110 = vmatprep.mubr.bf16.mxu0 %v838
      %2111 = vmatmul.mubr.bf16.gmra.mxu0 %v657
      %v2112 = vpop.f32.mrf.mxu0
      %v2113 = vadd.f32 %v1824, %v2112
      %v2114 = vpop.f32.mrf.mxu0
      %v2115 = vpop.f32.mrf.mxu0
      %v2116 = vadd.f32 %v1827, %v2115
      %v2117 = vpop.f32.mrf.mxu0
      %2118 = vmatprep.mubr.bf16.mxu0 %v839
      %2119 = vmatmul.mubr.bf16.gmra.mxu0 %v658
      %v2120 = vpop.f32.mrf.mxu0
      %v2121 = vadd.f32 %v1832, %v2120
      %v2122 = vpop.f32.mrf.mxu0
      %v2123 = vpop.f32.mrf.mxu0
      %v2124 = vadd.f32 %v1835, %v2123
      %v2125 = vpop.f32.mrf.mxu0
      %2126 = vmatprep.mubr.bf16.mxu0 %v840
      %2127 = vmatmul.mubr.bf16.gmra.mxu0 %v659
      %v2128 = vpop.f32.mrf.mxu0
      %v2129 = vadd.f32 %v1840, %v2128
      %v2130 = vpop.f32.mrf.mxu0
      %v2131 = vpop.f32.mrf.mxu0
      %v2132 = vadd.f32 %v1843, %v2131
      %v2133 = vpop.f32.mrf.mxu0
      %2134 = vmatprep.mubr.bf16.mxu0 %v841
      %2135 = vmatmul.mubr.bf16.gmra.mxu0 %v660
      %v2136 = vpop.f32.mrf.mxu0
      %v2137 = vadd.f32 %v1848, %v2136
      %v2138 = vpop.f32.mrf.mxu0
      %v2139 = vpop.f32.mrf.mxu0
      %v2140 = vadd.f32 %v1851, %v2139
      %v2141 = vpop.f32.mrf.mxu0
      %2142 = vdwg.mxu0
      %2143 = vmatprep.subr.bf16.mxu0 0
      %2144 = vmatpush1.bf16.msra.mxu0 %v1187
      %2145 = vmatprep.subr.bf16.mxu0 0
      %2146 = vmatpush1.bf16.msra.mxu0 %v1186
      %2147 = vmatprep.subr.bf16.mxu0 0
      %2148 = vmatpush1.bf16.msra.mxu0 %v1185
      %2149 = vmatprep.subr.bf16.mxu0 0
      %2150 = vmatpush1.bf16.msra.mxu0 %v1184
      %2151 = vmatprep.subr.bf16.mxu0 0
      %2152 = vmatpush1.bf16.msra.mxu0 %v1183
      %2153 = vmatprep.subr.bf16.mxu0 0
      %2154 = vmatpush1.bf16.msra.mxu0 %v1182
      %2155 = vmatprep.subr.bf16.mxu0 0
      %2156 = vmatpush1.bf16.msra.mxu0 %v1181
      %2157 = vmatprep.subr.bf16.mxu0 0
      %2158 = vmatpush1.bf16.msra.mxu0 %v1180
      %2159 = vmatprep.subr.bf16.mxu0 0
      %2160 = vmatpush2.bf16.msra.mxu0 %v1195
      %2161 = vmatprep.subr.bf16.mxu0 0
      %2162 = vmatpush2.bf16.msra.mxu0 %v1194
      %2163 = vmatprep.subr.bf16.mxu0 0
      %2164 = vmatpush2.bf16.msra.mxu0 %v1193
      %2165 = vmatprep.subr.bf16.mxu0 0
      %2166 = vmatpush2.bf16.msra.mxu0 %v1192
      %2167 = vmatprep.subr.bf16.mxu0 0
      %2168 = vmatpush2.bf16.msra.mxu0 %v1191
      %2169 = vmatprep.subr.bf16.mxu0 0
      %2170 = vmatpush2.bf16.msra.mxu0 %v1190
      %2171 = vmatprep.subr.bf16.mxu0 0
      %2172 = vmatpush2.bf16.msra.mxu0 %v1189
      %2173 = vmatprep.subr.bf16.mxu0 0
      %2174 = vmatpush2.bf16.msra.mxu0 %v1188
      %2175 = vmatprep.mubr.bf16.mxu0 %v631
      %2176 = vmatmul.mubr.bf16.gmra.mxu0 %v595
      %v2177 = vpop.f32.mrf.mxu0
      %v2178 = vadd.f32 %v1889, %v2177
      %v2179 = vpop.f32.mrf.mxu0
      %v2180 = vpop.f32.mrf.mxu0
      %v2181 = vadd.f32 %v1892, %v2180
      %v2182 = vpop.f32.mrf.mxu0
      %2183 = vmatprep.mubr.bf16.mxu0 %v632
      %2184 = vmatmul.mubr.bf16.gmra.mxu0 %v596
      %v2185 = vpop.f32.mrf.mxu0
      %v2186 = vadd.f32 %v1897, %v2185
      %v2187 = vpop.f32.mrf.mxu0
      %v2188 = vpop.f32.mrf.mxu0
      %v2189 = vadd.f32 %v1900, %v2188
      %v2190 = vpop.f32.mrf.mxu0
      %2191 = vmatprep.mubr.bf16.mxu0 %v633
      %2192 = vmatmul.mubr.bf16.gmra.mxu0 %v597
      %v2193 = vpop.f32.mrf.mxu0
      %v2194 = vadd.f32 %v1905, %v2193
      %v2195 = vpop.f32.mrf.mxu0
      %v2196 = vpop.f32.mrf.mxu0
      %v2197 = vadd.f32 %v1908, %v2196
      %v2198 = vpop.f32.mrf.mxu0
      %2199 = vmatprep.mubr.bf16.mxu0 %v634
      %2200 = vmatmul.mubr.bf16.gmra.mxu0 %v598
      %v2201 = vpop.f32.mrf.mxu0
      %v2202 = vadd.f32 %v1913, %v2201
      %v2203 = vpop.f32.mrf.mxu0
      %v2204 = vpop.f32.mrf.mxu0
      %v2205 = vadd.f32 %v1916, %v2204
      %v2206 = vpop.f32.mrf.mxu0
      %2207 = vmatprep.mubr.bf16.mxu0 %v635
      %2208 = vmatmul.mubr.bf16.gmra.mxu0 %v599
      %v2209 = vpop.f32.mrf.mxu0
      %v2210 = vadd.f32 %v1921, %v2209
      %v2211 = vpop.f32.mrf.mxu0
      %v2212 = vpop.f32.mrf.mxu0
      %v2213 = vadd.f32 %v1924, %v2212
      %v2214 = vpop.f32.mrf.mxu0
      %2215 = vmatprep.mubr.bf16.mxu0 %v636
      %2216 = vmatmul.mubr.bf16.gmra.mxu0 %v600
      %v2217 = vpop.f32.mrf.mxu0
      %v2218 = vadd.f32 %v1929, %v2217
      %v2219 = vpop.f32.mrf.mxu0
      %v2220 = vpop.f32.mrf.mxu0
      %v2221 = vadd.f32 %v1932, %v2220
      %v2222 = vpop.f32.mrf.mxu0
      %2223 = vmatprep.mubr.bf16.mxu0 %v637
      %2224 = vmatmul.mubr.bf16.gmra.mxu0 %v601
      %v2225 = vpop.f32.mrf.mxu0
      %v2226 = vadd.f32 %v1937, %v2225
      %v2227 = vpop.f32.mrf.mxu0
      %v2228 = vpop.f32.mrf.mxu0
      %v2229 = vadd.f32 %v1940, %v2228
      %v2230 = vpop.f32.mrf.mxu0
      %2231 = vmatprep.mubr.bf16.mxu0 %v638
      %2232 = vmatmul.mubr.bf16.gmra.mxu0 %v602
      %v2233 = vpop.f32.mrf.mxu0
      %v2234 = vadd.f32 %v1945, %v2233
      %v2235 = vpop.f32.mrf.mxu0
      %v2236 = vpop.f32.mrf.mxu0
      %v2237 = vadd.f32 %v1948, %v2236
      %v2238 = vpop.f32.mrf.mxu0
      %2239 = vmatprep.mubr.bf16.mxu0 %v639
      %2240 = vmatmul.mubr.bf16.gmra.mxu0 %v603
      %v2241 = vpop.f32.mrf.mxu0
      %v2242 = vadd.f32 %v1953, %v2241
      %v2243 = vpop.f32.mrf.mxu0
      %v2244 = vpop.f32.mrf.mxu0
      %v2245 = vadd.f32 %v1956, %v2244
      %v2246 = vpop.f32.mrf.mxu0
      %2247 = vmatprep.mubr.bf16.mxu0 %v640
      %2248 = vmatmul.mubr.bf16.gmra.mxu0 %v604
      %v2249 = vpop.f32.mrf.mxu0
      %v2250 = vadd.f32 %v1961, %v2249
      %v2251 = vpop.f32.mrf.mxu0
      %v2252 = vpop.f32.mrf.mxu0
      %v2253 = vadd.f32 %v1964, %v2252
      %v2254 = vpop.f32.mrf.mxu0
      %2255 = vmatprep.mubr.bf16.mxu0 %v641
      %2256 = vmatmul.mubr.bf16.gmra.mxu0 %v605
      %v2257 = vpop.f32.mrf.mxu0
      %v2258 = vadd.f32 %v1969, %v2257
      %v2259 = vpop.f32.mrf.mxu0
      %v2260 = vpop.f32.mrf.mxu0
      %v2261 = vadd.f32 %v1972, %v2260
      %v2262 = vpop.f32.mrf.mxu0
      %2263 = vmatprep.mubr.bf16.mxu0 %v642
      %2264 = vmatmul.mubr.bf16.gmra.mxu0 %v606
      %v2265 = vpop.f32.mrf.mxu0
      %v2266 = vadd.f32 %v1977, %v2265
      %v2267 = vpop.f32.mrf.mxu0
      %v2268 = vpop.f32.mrf.mxu0
      %v2269 = vadd.f32 %v1980, %v2268
      %v2270 = vpop.f32.mrf.mxu0
      %2271 = vmatprep.mubr.bf16.mxu0 %v643
      %2272 = vmatmul.mubr.bf16.gmra.mxu0 %v607
      %v2273 = vpop.f32.mrf.mxu0
      %v2274 = vadd.f32 %v1985, %v2273
      %v2275 = vpop.f32.mrf.mxu0
      %v2276 = vpop.f32.mrf.mxu0
      %v2277 = vadd.f32 %v1988, %v2276
      %v2278 = vpop.f32.mrf.mxu0
      %2279 = vmatprep.mubr.bf16.mxu0 %v644
      %2280 = vmatmul.mubr.bf16.gmra.mxu0 %v608
      %v2281 = vpop.f32.mrf.mxu0
      %v2282 = vadd.f32 %v1993, %v2281
      %v2283 = vpop.f32.mrf.mxu0
      %v2284 = vpop.f32.mrf.mxu0
      %v2285 = vadd.f32 %v1996, %v2284
      %v2286 = vpop.f32.mrf.mxu0
      %2287 = vmatprep.mubr.bf16.mxu0 %v645
      %2288 = vmatmul.mubr.bf16.gmra.mxu0 %v609
      %v2289 = vpop.f32.mrf.mxu0
      %v2290 = vadd.f32 %v2001, %v2289
      %v2291 = vpop.f32.mrf.mxu0
      %v2292 = vpop.f32.mrf.mxu0
      %v2293 = vadd.f32 %v2004, %v2292
      %v2294 = vpop.f32.mrf.mxu0
      %2295 = vmatprep.mubr.bf16.mxu0 %v646
      %2296 = vmatmul.mubr.bf16.gmra.mxu0 %v610
      %v2297 = vpop.f32.mrf.mxu0
      %v2298 = vadd.f32 %v2009, %v2297
      %v2299 = vpop.f32.mrf.mxu0
      %v2300 = vpop.f32.mrf.mxu0
      %v2301 = vadd.f32 %v2012, %v2300
      %v2302 = vpop.f32.mrf.mxu0
      %2303 = vmatprep.mubr.bf16.mxu0 %v647
      %2304 = vmatmul.mubr.bf16.gmra.mxu0 %v611
      %v2305 = vpop.f32.mrf.mxu0
      %v2306 = vadd.f32 %v2017, %v2305
      %v2307 = vpop.f32.mrf.mxu0
      %v2308 = vpop.f32.mrf.mxu0
      %v2309 = vadd.f32 %v2020, %v2308
      %v2310 = vpop.f32.mrf.mxu0
      %2311 = vmatprep.mubr.bf16.mxu0 %v648
      %2312 = vmatmul.mubr.bf16.gmra.mxu0 %v612
      %v2313 = vpop.f32.mrf.mxu0
      %v2314 = vadd.f32 %v2025, %v2313
      %v2315 = vpop.f32.mrf.mxu0
      %v2316 = vpop.f32.mrf.mxu0
      %v2317 = vadd.f32 %v2028, %v2316
      %v2318 = vpop.f32.mrf.mxu0
      %2319 = vmatprep.mubr.bf16.mxu0 %v649
      %2320 = vmatmul.mubr.bf16.gmra.mxu0 %v613
      %v2321 = vpop.f32.mrf.mxu0
      %v2322 = vadd.f32 %v2033, %v2321
      %v2323 = vpop.f32.mrf.mxu0
      %v2324 = vpop.f32.mrf.mxu0
      %v2325 = vadd.f32 %v2036, %v2324
      %v2326 = vpop.f32.mrf.mxu0
      %2327 = vmatprep.mubr.bf16.mxu0 %v650
      %2328 = vmatmul.mubr.bf16.gmra.mxu0 %v614
      %v2329 = vpop.f32.mrf.mxu0
      %v2330 = vadd.f32 %v2041, %v2329
      %v2331 = vpop.f32.mrf.mxu0
      %v2332 = vpop.f32.mrf.mxu0
      %v2333 = vadd.f32 %v2044, %v2332
      %v2334 = vpop.f32.mrf.mxu0
      %2335 = vmatprep.mubr.bf16.mxu0 %v651
      %2336 = vmatmul.mubr.bf16.gmra.mxu0 %v615
      %v2337 = vpop.f32.mrf.mxu0
      %v2338 = vadd.f32 %v2049, %v2337
      %v2339 = vpop.f32.mrf.mxu0
      %v2340 = vpop.f32.mrf.mxu0
      %v2341 = vadd.f32 %v2052, %v2340
      %v2342 = vpop.f32.mrf.mxu0
      %2343 = vmatprep.mubr.bf16.mxu0 %v652
      %2344 = vmatmul.mubr.bf16.gmra.mxu0 %v616
      %v2345 = vpop.f32.mrf.mxu0
      %v2346 = vadd.f32 %v2057, %v2345
      %v2347 = vpop.f32.mrf.mxu0
      %v2348 = vpop.f32.mrf.mxu0
      %v2349 = vadd.f32 %v2060, %v2348
      %v2350 = vpop.f32.mrf.mxu0
      %2351 = vmatprep.mubr.bf16.mxu0 %v653
      %2352 = vmatmul.mubr.bf16.gmra.mxu0 %v617
      %v2353 = vpop.f32.mrf.mxu0
      %v2354 = vadd.f32 %v2065, %v2353
      %v2355 = vpop.f32.mrf.mxu0
      %v2356 = vpop.f32.mrf.mxu0
      %v2357 = vadd.f32 %v2068, %v2356
      %v2358 = vpop.f32.mrf.mxu0
      %2359 = vmatprep.mubr.bf16.mxu0 %v654
      %2360 = vmatmul.mubr.bf16.gmra.mxu0 %v618
      %v2361 = vpop.f32.mrf.mxu0
      %v2362 = vadd.f32 %v2073, %v2361
      %v2363 = vpop.f32.mrf.mxu0
      %v2364 = vpop.f32.mrf.mxu0
      %v2365 = vadd.f32 %v2076, %v2364
      %v2366 = vpop.f32.mrf.mxu0
      %2367 = vmatprep.mubr.bf16.mxu0 %v655
      %2368 = vmatmul.mubr.bf16.gmra.mxu0 %v619
      %v2369 = vpop.f32.mrf.mxu0
      %v2370 = vadd.f32 %v2081, %v2369
      %v2371 = vpop.f32.mrf.mxu0
      %v2372 = vpop.f32.mrf.mxu0
      %v2373 = vadd.f32 %v2084, %v2372
      %v2374 = vpop.f32.mrf.mxu0
      %2375 = vmatprep.mubr.bf16.mxu0 %v656
      %2376 = vmatmul.mubr.bf16.gmra.mxu0 %v620
      %v2377 = vpop.f32.mrf.mxu0
      %v2378 = vadd.f32 %v2089, %v2377
      %v2379 = vpop.f32.mrf.mxu0
      %v2380 = vpop.f32.mrf.mxu0
      %v2381 = vadd.f32 %v2092, %v2380
      %v2382 = vpop.f32.mrf.mxu0
      %2383 = vmatprep.mubr.bf16.mxu0 %v657
      %2384 = vmatmul.mubr.bf16.gmra.mxu0 %v621
      %v2385 = vpop.f32.mrf.mxu0
      %v2386 = vadd.f32 %v2097, %v2385
      %v2387 = vpop.f32.mrf.mxu0
      %v2388 = vpop.f32.mrf.mxu0
      %v2389 = vadd.f32 %v2100, %v2388
      %v2390 = vpop.f32.mrf.mxu0
      %2391 = vmatprep.mubr.bf16.mxu0 %v658
      %2392 = vmatmul.mubr.bf16.gmra.mxu0 %v622
      %v2393 = vpop.f32.mrf.mxu0
      %v2394 = vadd.f32 %v2105, %v2393
      %v2395 = vpop.f32.mrf.mxu0
      %v2396 = vpop.f32.mrf.mxu0
      %v2397 = vadd.f32 %v2108, %v2396
      %v2398 = vpop.f32.mrf.mxu0
      %2399 = vmatprep.mubr.bf16.mxu0 %v659
      %2400 = vmatmul.mubr.bf16.gmra.mxu0 %v623
      %v2401 = vpop.f32.mrf.mxu0
      %v2402 = vadd.f32 %v2113, %v2401
      %v2403 = vpop.f32.mrf.mxu0
      %v2404 = vpop.f32.mrf.mxu0
      %v2405 = vadd.f32 %v2116, %v2404
      %v2406 = vpop.f32.mrf.mxu0
      %2407 = vmatprep.mubr.bf16.mxu0 %v660
      %2408 = vmatmul.mubr.bf16.gmra.mxu0 %v624
      %v2409 = vpop.f32.mrf.mxu0
      %v2410 = vadd.f32 %v2121, %v2409
      %v2411 = vpop.f32.mrf.mxu0
      %v2412 = vpop.f32.mrf.mxu0
      %v2413 = vadd.f32 %v2124, %v2412
      %v2414 = vpop.f32.mrf.mxu0
      %2415 = vmatprep.mubr.bf16.mxu0 %v661
      %2416 = vmatmul.mubr.bf16.gmra.mxu0 %v625
      %v2417 = vpop.f32.mrf.mxu0
      %v2418 = vadd.f32 %v2129, %v2417
      %v2419 = vpop.f32.mrf.mxu0
      %v2420 = vpop.f32.mrf.mxu0
      %v2421 = vadd.f32 %v2132, %v2420
      %v2422 = vpop.f32.mrf.mxu0
      %2423 = vmatprep.mubr.bf16.mxu0 %v662
      %2424 = vmatmul.mubr.bf16.gmra.mxu0 %v626
      %v2425 = vpop.f32.mrf.mxu0
      %v2426 = vadd.f32 %v2137, %v2425
      %v2427 = vpop.f32.mrf.mxu0
      %v2428 = vpop.f32.mrf.mxu0
      %v2429 = vadd.f32 %v2140, %v2428
      %v2430 = vpop.f32.mrf.mxu0
      %2431 = vdwg.mxu0
      %2432 = vmatprep.subr.bf16.mxu0 0
      %2433 = vmatpush1.bf16.msra.mxu0 %v1203
      %2434 = vmatprep.subr.bf16.mxu0 0
      %2435 = vmatpush1.bf16.msra.mxu0 %v1202
      %2436 = vmatprep.subr.bf16.mxu0 0
      %2437 = vmatpush1.bf16.msra.mxu0 %v1201
      %2438 = vmatprep.subr.bf16.mxu0 0
      %2439 = vmatpush1.bf16.msra.mxu0 %v1200
      %2440 = vmatprep.subr.bf16.mxu0 0
      %2441 = vmatpush1.bf16.msra.mxu0 %v1199
      %2442 = vmatprep.subr.bf16.mxu0 0
      %2443 = vmatpush1.bf16.msra.mxu0 %v1198
      %2444 = vmatprep.subr.bf16.mxu0 0
      %2445 = vmatpush1.bf16.msra.mxu0 %v1197
      %2446 = vmatprep.subr.bf16.mxu0 0
      %2447 = vmatpush1.bf16.msra.mxu0 %v1196
      %2448 = vmatprep.subr.bf16.mxu0 0
      %2449 = vmatpush2.bf16.msra.mxu0 0
      %2450 = vmatprep.subr.bf16.mxu0 0
      %2451 = vmatpush2.bf16.msra.mxu0 0
      %2452 = vmatprep.subr.bf16.mxu0 0
      %2453 = vmatpush2.bf16.msra.mxu0 0
      %2454 = vmatprep.subr.bf16.mxu0 0
      %2455 = vmatpush2.bf16.msra.mxu0 0
      %2456 = vmatprep.subr.bf16.mxu0 0
      %2457 = vmatpush2.bf16.msra.mxu0 0
      %2458 = vmatprep.subr.bf16.mxu0 0
      %2459 = vmatpush2.bf16.msra.mxu0 0
      %2460 = vmatprep.subr.bf16.mxu0 0
      %2461 = vmatpush2.bf16.msra.mxu0 0
      %2462 = vmatprep.subr.bf16.mxu0 0
      %2463 = vmatpush2.bf16.msra.mxu0 0
      %2464 = vmatprep.mubr.bf16.mxu0 0
      %2465 = vmatmul.mubr.bf16.gmra.mxu0 %v812
      %v2466 = vpop.f32.mrf.mxu0
      %v2467 = vadd.f32 %v2178, %v2466
      %v2468 = vpop.f32.mrf.mxu0
      %v2469 = vpop.f32.mrf.mxu0
      %v2470 = vadd.f32 %v2181, %v2469
      %v2471 = vpop.f32.mrf.mxu0
      %2472 = vmatprep.mubr.bf16.mxu0 0
      %2473 = vmatmul.mubr.bf16.gmra.mxu0 %v813
      %v2474 = vpop.f32.mrf.mxu0
      %v2475 = vadd.f32 %v2186, %v2474
      %v2476 = vpop.f32.mrf.mxu0
      %v2477 = vpop.f32.mrf.mxu0
      %v2478 = vadd.f32 %v2189, %v2477
      %v2479 = vpop.f32.mrf.mxu0
      %2480 = vmatprep.mubr.bf16.mxu0 0
      %2481 = vmatmul.mubr.bf16.gmra.mxu0 %v814
      %v2482 = vpop.f32.mrf.mxu0
      %v2483 = vadd.f32 %v2194, %v2482
      %v2484 = vpop.f32.mrf.mxu0
      %v2485 = vpop.f32.mrf.mxu0
      %v2486 = vadd.f32 %v2197, %v2485
      %v2487 = vpop.f32.mrf.mxu0
      %2488 = vmatprep.mubr.bf16.mxu0 0
      %2489 = vmatmul.mubr.bf16.gmra.mxu0 %v815
      %v2490 = vpop.f32.mrf.mxu0
      %v2491 = vadd.f32 %v2202, %v2490
      %v2492 = vpop.f32.mrf.mxu0
      %v2493 = vpop.f32.mrf.mxu0
      %v2494 = vadd.f32 %v2205, %v2493
      %v2495 = vpop.f32.mrf.mxu0
      %2496 = vmatprep.mubr.bf16.mxu0 0
      %2497 = vmatmul.mubr.bf16.gmra.mxu0 %v816
      %v2498 = vpop.f32.mrf.mxu0
      %v2499 = vadd.f32 %v2210, %v2498
      %v2500 = vpop.f32.mrf.mxu0
      %v2501 = vpop.f32.mrf.mxu0
      %v2502 = vadd.f32 %v2213, %v2501
      %v2503 = vpop.f32.mrf.mxu0
      %2504 = vmatprep.mubr.bf16.mxu0 0
      %2505 = vmatmul.mubr.bf16.gmra.mxu0 %v817
      %v2506 = vpop.f32.mrf.mxu0
      %v2507 = vadd.f32 %v2218, %v2506
      %v2508 = vpop.f32.mrf.mxu0
      %v2509 = vpop.f32.mrf.mxu0
      %v2510 = vadd.f32 %v2221, %v2509
      %v2511 = vpop.f32.mrf.mxu0
      %2512 = vmatprep.mubr.bf16.mxu0 0
      %2513 = vmatmul.mubr.bf16.gmra.mxu0 %v818
      %v2514 = vpop.f32.mrf.mxu0
      %v2515 = vadd.f32 %v2226, %v2514
      %v2516 = vpop.f32.mrf.mxu0
      %v2517 = vpop.f32.mrf.mxu0
      %v2518 = vadd.f32 %v2229, %v2517
      %v2519 = vpop.f32.mrf.mxu0
      %2520 = vmatprep.mubr.bf16.mxu0 0
      %2521 = vmatmul.mubr.bf16.gmra.mxu0 %v819
      %v2522 = vpop.f32.mrf.mxu0
      %v2523 = vadd.f32 %v2234, %v2522
      %v2524 = vpop.f32.mrf.mxu0
      %v2525 = vpop.f32.mrf.mxu0
      %v2526 = vadd.f32 %v2237, %v2525
      %v2527 = vpop.f32.mrf.mxu0
      %2528 = vmatprep.mubr.bf16.mxu0 0
      %2529 = vmatmul.mubr.bf16.gmra.mxu0 %v820
      %v2530 = vpop.f32.mrf.mxu0
      %v2531 = vadd.f32 %v2242, %v2530
      %v2532 = vpop.f32.mrf.mxu0
      %v2533 = vpop.f32.mrf.mxu0
      %v2534 = vadd.f32 %v2245, %v2533
      %v2535 = vpop.f32.mrf.mxu0
      %2536 = vmatprep.mubr.bf16.mxu0 0
      %2537 = vmatmul.mubr.bf16.gmra.mxu0 %v821
      %v2538 = vpop.f32.mrf.mxu0
      %v2539 = vadd.f32 %v2250, %v2538
      %v2540 = vpop.f32.mrf.mxu0
      %v2541 = vpop.f32.mrf.mxu0
      %v2542 = vadd.f32 %v2253, %v2541
      %v2543 = vpop.f32.mrf.mxu0
      %2544 = vmatprep.mubr.bf16.mxu0 0
      %2545 = vmatmul.mubr.bf16.gmra.mxu0 %v822
      %v2546 = vpop.f32.mrf.mxu0
      %v2547 = vadd.f32 %v2258, %v2546
      %v2548 = vpop.f32.mrf.mxu0
      %v2549 = vpop.f32.mrf.mxu0
      %v2550 = vadd.f32 %v2261, %v2549
      %v2551 = vpop.f32.mrf.mxu0
      %2552 = vmatprep.mubr.bf16.mxu0 0
      %2553 = vmatmul.mubr.bf16.gmra.mxu0 %v823
      %v2554 = vpop.f32.mrf.mxu0
      %v2555 = vadd.f32 %v2266, %v2554
      %v2556 = vpop.f32.mrf.mxu0
      %v2557 = vpop.f32.mrf.mxu0
      %v2558 = vadd.f32 %v2269, %v2557
      %v2559 = vpop.f32.mrf.mxu0
      %2560 = vmatprep.mubr.bf16.mxu0 0
      %2561 = vmatmul.mubr.bf16.gmra.mxu0 %v824
      %v2562 = vpop.f32.mrf.mxu0
      %v2563 = vadd.f32 %v2274, %v2562
      %v2564 = vpop.f32.mrf.mxu0
      %v2565 = vpop.f32.mrf.mxu0
      %v2566 = vadd.f32 %v2277, %v2565
      %v2567 = vpop.f32.mrf.mxu0
      %2568 = vmatprep.mubr.bf16.mxu0 0
      %2569 = vmatmul.mubr.bf16.gmra.mxu0 %v825
      %v2570 = vpop.f32.mrf.mxu0
      %v2571 = vadd.f32 %v2282, %v2570
      %v2572 = vpop.f32.mrf.mxu0
      %v2573 = vpop.f32.mrf.mxu0
      %v2574 = vadd.f32 %v2285, %v2573
      %v2575 = vpop.f32.mrf.mxu0
      %2576 = vmatprep.mubr.bf16.mxu0 0
      %2577 = vmatmul.mubr.bf16.gmra.mxu0 %v826
      %v2578 = vpop.f32.mrf.mxu0
      %v2579 = vadd.f32 %v2290, %v2578
      %v2580 = vpop.f32.mrf.mxu0
      %v2581 = vpop.f32.mrf.mxu0
      %v2582 = vadd.f32 %v2293, %v2581
      %v2583 = vpop.f32.mrf.mxu0
      %2584 = vmatprep.mubr.bf16.mxu0 0
      %2585 = vmatmul.mubr.bf16.gmra.mxu0 %v827
      %v2586 = vpop.f32.mrf.mxu0
      %v2587 = vadd.f32 %v2298, %v2586
      %v2588 = vpop.f32.mrf.mxu0
      %v2589 = vpop.f32.mrf.mxu0
      %v2590 = vadd.f32 %v2301, %v2589
      %v2591 = vpop.f32.mrf.mxu0
      %2592 = vmatprep.mubr.bf16.mxu0 0
      %2593 = vmatmul.mubr.bf16.gmra.mxu0 %v828
      %v2594 = vpop.f32.mrf.mxu0
      %v2595 = vadd.f32 %v2306, %v2594
      %v2596 = vpop.f32.mrf.mxu0
      %v2597 = vpop.f32.mrf.mxu0
      %v2598 = vadd.f32 %v2309, %v2597
      %v2599 = vpop.f32.mrf.mxu0
      %2600 = vmatprep.mubr.bf16.mxu0 0
      %2601 = vmatmul.mubr.bf16.gmra.mxu0 %v829
      %v2602 = vpop.f32.mrf.mxu0
      %v2603 = vadd.f32 %v2314, %v2602
      %v2604 = vpop.f32.mrf.mxu0
      %v2605 = vpop.f32.mrf.mxu0
      %v2606 = vadd.f32 %v2317, %v2605
      %v2607 = vpop.f32.mrf.mxu0
      %2608 = vmatprep.mubr.bf16.mxu0 0
      %2609 = vmatmul.mubr.bf16.gmra.mxu0 %v830
      %v2610 = vpop.f32.mrf.mxu0
      %v2611 = vadd.f32 %v2322, %v2610
      %v2612 = vpop.f32.mrf.mxu0
      %v2613 = vpop.f32.mrf.mxu0
      %v2614 = vadd.f32 %v2325, %v2613
      %v2615 = vpop.f32.mrf.mxu0
      %2616 = vmatprep.mubr.bf16.mxu0 0
      %2617 = vmatmul.mubr.bf16.gmra.mxu0 %v831
      %v2618 = vpop.f32.mrf.mxu0
      %v2619 = vadd.f32 %v2330, %v2618
      %v2620 = vpop.f32.mrf.mxu0
      %v2621 = vpop.f32.mrf.mxu0
      %v2622 = vadd.f32 %v2333, %v2621
      %v2623 = vpop.f32.mrf.mxu0
      %2624 = vmatprep.mubr.bf16.mxu0 0
      %2625 = vmatmul.mubr.bf16.gmra.mxu0 %v832
      %v2626 = vpop.f32.mrf.mxu0
      %v2627 = vadd.f32 %v2338, %v2626
      %v2628 = vpop.f32.mrf.mxu0
      %v2629 = vpop.f32.mrf.mxu0
      %v2630 = vadd.f32 %v2341, %v2629
      %v2631 = vpop.f32.mrf.mxu0
      %2632 = vmatprep.mubr.bf16.mxu0 0
      %2633 = vmatmul.mubr.bf16.gmra.mxu0 %v833
      %v2634 = vpop.f32.mrf.mxu0
      %v2635 = vadd.f32 %v2346, %v2634
      %v2636 = vpop.f32.mrf.mxu0
      %v2637 = vpop.f32.mrf.mxu0
      %v2638 = vadd.f32 %v2349, %v2637
      %v2639 = vpop.f32.mrf.mxu0
      %2640 = vmatprep.mubr.bf16.mxu0 0
      %2641 = vmatmul.mubr.bf16.gmra.mxu0 %v834
      %v2642 = vpop.f32.mrf.mxu0
      %v2643 = vadd.f32 %v2354, %v2642
      %v2644 = vpop.f32.mrf.mxu0
      %v2645 = vpop.f32.mrf.mxu0
      %v2646 = vadd.f32 %v2357, %v2645
      %v2647 = vpop.f32.mrf.mxu0
      %2648 = vmatprep.mubr.bf16.mxu0 0
      %2649 = vmatmul.mubr.bf16.gmra.mxu0 %v835
      %v2650 = vpop.f32.mrf.mxu0
      %v2651 = vadd.f32 %v2362, %v2650
      %v2652 = vpop.f32.mrf.mxu0
      %v2653 = vpop.f32.mrf.mxu0
      %v2654 = vadd.f32 %v2365, %v2653
      %v2655 = vpop.f32.mrf.mxu0
      %2656 = vmatprep.mubr.bf16.mxu0 0
      %2657 = vmatmul.mubr.bf16.gmra.mxu0 %v836
      %v2658 = vpop.f32.mrf.mxu0
      %v2659 = vadd.f32 %v2370, %v2658
      %v2660 = vpop.f32.mrf.mxu0
      %v2661 = vpop.f32.mrf.mxu0
      %v2662 = vadd.f32 %v2373, %v2661
      %v2663 = vpop.f32.mrf.mxu0
      %2664 = vmatprep.mubr.bf16.mxu0 0
      %2665 = vmatmul.mubr.bf16.gmra.mxu0 %v837
      %v2666 = vpop.f32.mrf.mxu0
      %v2667 = vadd.f32 %v2378, %v2666
      %v2668 = vpop.f32.mrf.mxu0
      %v2669 = vpop.f32.mrf.mxu0
      %v2670 = vadd.f32 %v2381, %v2669
      %v2671 = vpop.f32.mrf.mxu0
      %2672 = vmatprep.mubr.bf16.mxu0 0
      %2673 = vmatmul.mubr.bf16.gmra.mxu0 %v838
      %v2674 = vpop.f32.mrf.mxu0
      %v2675 = vadd.f32 %v2386, %v2674
      %v2676 = vpop.f32.mrf.mxu0
      %v2677 = vpop.f32.mrf.mxu0
      %v2678 = vadd.f32 %v2389, %v2677
      %v2679 = vpop.f32.mrf.mxu0
      %2680 = vmatprep.mubr.bf16.mxu0 0
      %2681 = vmatmul.mubr.bf16.gmra.mxu0 %v839
      %v2682 = vpop.f32.mrf.mxu0
      %v2683 = vadd.f32 %v2394, %v2682
      %v2684 = vpop.f32.mrf.mxu0
      %v2685 = vpop.f32.mrf.mxu0
      %v2686 = vadd.f32 %v2397, %v2685
      %v2687 = vpop.f32.mrf.mxu0
      %2688 = vmatprep.mubr.bf16.mxu0 0
      %2689 = vmatmul.mubr.bf16.gmra.mxu0 %v840
      %v2690 = vpop.f32.mrf.mxu0
      %v2691 = vadd.f32 %v2402, %v2690
      %v2692 = vpop.f32.mrf.mxu0
      %v2693 = vpop.f32.mrf.mxu0
      %v2694 = vadd.f32 %v2405, %v2693
      %v2695 = vpop.f32.mrf.mxu0
      %2696 = vmatprep.mubr.bf16.mxu0 0
      %2697 = vmatmul.mubr.bf16.gmra.mxu0 %v841
      %v2698 = vpop.f32.mrf.mxu0
      %v2699 = vadd.f32 %v2410, %v2698
      %v2700 = vpop.f32.mrf.mxu0
      %v2701 = vpop.f32.mrf.mxu0
      %v2702 = vadd.f32 %v2413, %v2701
      %v2703 = vpop.f32.mrf.mxu0
      %2704 = vmatprep.mubr.bf16.mxu0 0
      %2705 = vmatmul.mubr.bf16.gmra.mxu0 %v842
      %v2706 = vpop.f32.mrf.mxu0
      %v2707 = vadd.f32 %v2418, %v2706
      %v2708 = vpop.f32.mrf.mxu0
      %v2709 = vpop.f32.mrf.mxu0
      %v2710 = vadd.f32 %v2421, %v2709
      %v2711 = vpop.f32.mrf.mxu0
      %2712 = vmatprep.mubr.bf16.mxu0 0
      %2713 = vmatmul.mubr.bf16.gmra.mxu0 %v843
      %v2714 = vpop.f32.mrf.mxu0
      %v2715 = vadd.f32 %v2426, %v2714
      %v2716 = vpop.f32.mrf.mxu0
      %v2717 = vpop.f32.mrf.mxu0
      %v2718 = vadd.f32 %v2429, %v2717
      %v2719 = vpop.f32.mrf.mxu0
      %2720 = vdwg.mxu0
      %v2721 = vmul.f32 %v2467, %v298
      %v2722 = vmul.f32 %v2470, %v299
      %v2723 = vmul.f32 %v2475, %v300
      %v2724 = vmul.f32 %v2478, %v301
      %v2725 = vmul.f32 %v2483, %v298
      %v2726 = vmul.f32 %v2486, %v299
      %v2727 = vmul.f32 %v2491, %v300
      %v2728 = vmul.f32 %v2494, %v301
      %v2729 = vmul.f32 %v2499, %v298
      %v2730 = vmul.f32 %v2502, %v299
      %v2731 = vmul.f32 %v2507, %v300
      %v2732 = vmul.f32 %v2510, %v301
      %v2733 = vmul.f32 %v2515, %v298
      %v2734 = vmul.f32 %v2518, %v299
      %v2735 = vmul.f32 %v2523, %v300
      %v2736 = vmul.f32 %v2526, %v301
      %v2737 = vmul.f32 %v2531, %v298
      %v2738 = vmul.f32 %v2534, %v299
      %v2739 = vmul.f32 %v2539, %v300
      %v2740 = vmul.f32 %v2542, %v301
      %v2741 = vmul.f32 %v2547, %v298
      %v2742 = vmul.f32 %v2550, %v299
      %v2743 = vmul.f32 %v2555, %v300
      %v2744 = vmul.f32 %v2558, %v301
      %v2745 = vmul.f32 %v2563, %v298
      %v2746 = vmul.f32 %v2566, %v299
      %v2747 = vmul.f32 %v2571, %v300
      %v2748 = vmul.f32 %v2574, %v301
      %v2749 = vmul.f32 %v2579, %v298
      %v2750 = vmul.f32 %v2582, %v299
      %v2751 = vmul.f32 %v2587, %v300
      %v2752 = vmul.f32 %v2590, %v301
      %v2753 = vmul.f32 %v2595, %v298
      %v2754 = vmul.f32 %v2598, %v299
      %v2755 = vmul.f32 %v2603, %v300
      %v2756 = vmul.f32 %v2606, %v301
      %v2757 = vmul.f32 %v2611, %v298
      %v2758 = vmul.f32 %v2614, %v299
      %v2759 = vmul.f32 %v2619, %v300
      %v2760 = vmul.f32 %v2622, %v301
      %v2761 = vmul.f32 %v2627, %v298
      %v2762 = vmul.f32 %v2630, %v299
      %v2763 = vmul.f32 %v2635, %v300
      %v2764 = vmul.f32 %v2638, %v301
      %v2765 = vmul.f32 %v2643, %v298
      %v2766 = vmul.f32 %v2646, %v299
      %v2767 = vmul.f32 %v2651, %v300
      %v2768 = vmul.f32 %v2654, %v301
      %v2769 = vmul.f32 %v2659, %v298
      %v2770 = vmul.f32 %v2662, %v299
      %v2771 = vmul.f32 %v2667, %v300
      %v2772 = vmul.f32 %v2670, %v301
      %v2773 = vmul.f32 %v2675, %v298
      %v2774 = vmul.f32 %v2678, %v299
      %v2775 = vmul.f32 %v2683, %v300
      %v2776 = vmul.f32 %v2686, %v301
      %v2777 = vmul.f32 %v2691, %v298
      %v2778 = vmul.f32 %v2694, %v299
      %v2779 = vmul.f32 %v2699, %v300
      %v2780 = vmul.f32 %v2702, %v301
      %v2781 = vmul.f32 %v2707, %v298
      %v2782 = vmul.f32 %v2710, %v299
      %v2783 = vmul.f32 %v2715, %v300
      %v2784 = vmul.f32 %v2718, %v301
      %v2785 = vadd.f32 %v2721, %v2722
      %v2786 = vadd.f32 %v2785, %v2723
      %v2787 = vadd.f32 %v2786, %v2724
      %v2788 = vadd.f32 %v2787, %v2725
      %v2789 = vadd.f32 %v2788, %v2726
      %v2790 = vadd.f32 %v2789, %v2727
      %v2791 = vadd.f32 %v2790, %v2728
      %v2792 = vadd.f32 %v2791, %v2729
      %v2793 = vadd.f32 %v2792, %v2730
      %v2794 = vadd.f32 %v2793, %v2731
      %v2795 = vadd.f32 %v2794, %v2732
      %v2796 = vadd.f32 %v2795, %v2733
      %v2797 = vadd.f32 %v2796, %v2734
      %v2798 = vadd.f32 %v2797, %v2735
      %v2799 = vadd.f32 %v2798, %v2736
      %v2800 = vadd.f32 %v2799, %v2737
      %v2801 = vadd.f32 %v2800, %v2738
      %v2802 = vadd.f32 %v2801, %v2739
      %v2803 = vadd.f32 %v2802, %v2740
      %v2804 = vadd.f32 %v2803, %v2741
      %v2805 = vadd.f32 %v2804, %v2742
      %v2806 = vadd.f32 %v2805, %v2743
      %v2807 = vadd.f32 %v2806, %v2744
      %v2808 = vadd.f32 %v2807, %v2745
      %v2809 = vadd.f32 %v2808, %v2746
      %v2810 = vadd.f32 %v2809, %v2747
      %v2811 = vadd.f32 %v2810, %v2748
      %v2812 = vadd.f32 %v2811, %v2749
      %v2813 = vadd.f32 %v2812, %v2750
      %v2814 = vadd.f32 %v2813, %v2751
      %v2815 = vadd.f32 %v2814, %v2752
      %v2816 = vadd.f32 %v2815, %v2753
      %v2817 = vadd.f32 %v2816, %v2754
      %v2818 = vadd.f32 %v2817, %v2755
      %v2819 = vadd.f32 %v2818, %v2756
      %v2820 = vadd.f32 %v2819, %v2757
      %v2821 = vadd.f32 %v2820, %v2758
      %v2822 = vadd.f32 %v2821, %v2759
      %v2823 = vadd.f32 %v2822, %v2760
      %v2824 = vadd.f32 %v2823, %v2761
      %v2825 = vadd.f32 %v2824, %v2762
      %v2826 = vadd.f32 %v2825, %v2763
      %v2827 = vadd.f32 %v2826, %v2764
      %v2828 = vadd.f32 %v2827, %v2765
      %v2829 = vadd.f32 %v2828, %v2766
      %v2830 = vadd.f32 %v2829, %v2767
      %v2831 = vadd.f32 %v2830, %v2768
      %v2832 = vadd.f32 %v2831, %v2769
      %v2833 = vadd.f32 %v2832, %v2770
      %v2834 = vadd.f32 %v2833, %v2771
      %v2835 = vadd.f32 %v2834, %v2772
      %v2836 = vadd.f32 %v2835, %v2773
      %v2837 = vadd.f32 %v2836, %v2774
      %v2838 = vadd.f32 %v2837, %v2775
      %v2839 = vadd.f32 %v2838, %v2776
      %v2840 = vadd.f32 %v2839, %v2777
      %v2841 = vadd.f32 %v2840, %v2778
      %v2842 = vadd.f32 %v2841, %v2779
      %v2843 = vadd.f32 %v2842, %v2780
      %v2844 = vadd.f32 %v2843, %v2781
      %v2845 = vadd.f32 %v2844, %v2782
      %v2846 = vadd.f32 %v2845, %v2783
      %v2847 = vadd.f32 %v2846, %v2784
      %v2848 = vrot.slane %v2847, 4
      %v2849 = vadd.f32 %v2847, %v2848
      %v2850 = vrot.slane %v2849, 2
      %v2851 = vadd.f32 %v2849, %v2850
      %v2852 = vrot.slane %v2851, 1
      %v2853 = vadd.f32 %v2851, %v2852
      %v2854 = vmul.f32 %v2853, 0.00390625
      %v2855 = vsub.f32 %v2467, %v2854
      %v2856 = vsub.f32 %v2470, %v2854
      %v2857 = vsub.f32 %v2475, %v2854
      %v2858 = vsub.f32 %v2478, %v2854
      %v2859 = vsub.f32 %v2483, %v2854
      %v2860 = vsub.f32 %v2486, %v2854
      %v2861 = vsub.f32 %v2491, %v2854
      %v2862 = vsub.f32 %v2494, %v2854
      %v2863 = vsub.f32 %v2499, %v2854
      %v2864 = vsub.f32 %v2502, %v2854
      %v2865 = vsub.f32 %v2507, %v2854
      %v2866 = vsub.f32 %v2510, %v2854
      %v2867 = vsub.f32 %v2515, %v2854
      %v2868 = vsub.f32 %v2518, %v2854
      %v2869 = vsub.f32 %v2523, %v2854
      %v2870 = vsub.f32 %v2526, %v2854
      %v2871 = vsub.f32 %v2531, %v2854
      %v2872 = vsub.f32 %v2534, %v2854
      %v2873 = vsub.f32 %v2539, %v2854
      %v2874 = vsub.f32 %v2542, %v2854
      %v2875 = vsub.f32 %v2547, %v2854
      %v2876 = vsub.f32 %v2550, %v2854
      %v2877 = vsub.f32 %v2555, %v2854
      %v2878 = vsub.f32 %v2558, %v2854
      %v2879 = vsub.f32 %v2563, %v2854
      %v2880 = vsub.f32 %v2566, %v2854
      %v2881 = vsub.f32 %v2571, %v2854
      %v2882 = vsub.f32 %v2574, %v2854
      %v2883 = vsub.f32 %v2579, %v2854
      %v2884 = vsub.f32 %v2582, %v2854
      %v2885 = vsub.f32 %v2587, %v2854
      %v2886 = vsub.f32 %v2590, %v2854
      %v2887 = vsub.f32 %v2595, %v2854
      %v2888 = vsub.f32 %v2598, %v2854
      %v2889 = vsub.f32 %v2603, %v2854
      %v2890 = vsub.f32 %v2606, %v2854
      %v2891 = vsub.f32 %v2611, %v2854
      %v2892 = vsub.f32 %v2614, %v2854
      %v2893 = vsub.f32 %v2619, %v2854
      %v2894 = vsub.f32 %v2622, %v2854
      %v2895 = vsub.f32 %v2627, %v2854
      %v2896 = vsub.f32 %v2630, %v2854
      %v2897 = vsub.f32 %v2635, %v2854
      %v2898 = vsub.f32 %v2638, %v2854
      %v2899 = vsub.f32 %v2643, %v2854
      %v2900 = vsub.f32 %v2646, %v2854
      %v2901 = vsub.f32 %v2651, %v2854
      %v2902 = vsub.f32 %v2654, %v2854
      %v2903 = vsub.f32 %v2659, %v2854
      %v2904 = vsub.f32 %v2662, %v2854
      %v2905 = vsub.f32 %v2667, %v2854
      %v2906 = vsub.f32 %v2670, %v2854
      %v2907 = vsub.f32 %v2675, %v2854
      %v2908 = vsub.f32 %v2678, %v2854
      %v2909 = vsub.f32 %v2683, %v2854
      %v2910 = vsub.f32 %v2686, %v2854
      %v2911 = vsub.f32 %v2691, %v2854
      %v2912 = vsub.f32 %v2694, %v2854
      %v2913 = vsub.f32 %v2699, %v2854
      %v2914 = vsub.f32 %v2702, %v2854
      %v2915 = vsub.f32 %v2707, %v2854
      %v2916 = vsub.f32 %v2710, %v2854
      %v2917 = vsub.f32 %v2715, %v2854
      %v2918 = vsub.f32 %v2718, %v2854
      %v2919 = vmul.f32 %v2855, %v298
      %v2920 = vmul.f32 %v2856, %v299
      %v2921 = vmul.f32 %v2857, %v300
      %v2922 = vmul.f32 %v2858, %v301
      %v2923 = vmul.f32 %v2859, %v298
      %v2924 = vmul.f32 %v2860, %v299
      %v2925 = vmul.f32 %v2861, %v300
      %v2926 = vmul.f32 %v2862, %v301
      %v2927 = vmul.f32 %v2863, %v298
      %v2928 = vmul.f32 %v2864, %v299
      %v2929 = vmul.f32 %v2865, %v300
      %v2930 = vmul.f32 %v2866, %v301
      %v2931 = vmul.f32 %v2867, %v298
      %v2932 = vmul.f32 %v2868, %v299
      %v2933 = vmul.f32 %v2869, %v300
      %v2934 = vmul.f32 %v2870, %v301
      %v2935 = vmul.f32 %v2871, %v298
      %v2936 = vmul.f32 %v2872, %v299
      %v2937 = vmul.f32 %v2873, %v300
      %v2938 = vmul.f32 %v2874, %v301
      %v2939 = vmul.f32 %v2875, %v298
      %v2940 = vmul.f32 %v2876, %v299
      %v2941 = vmul.f32 %v2877, %v300
      %v2942 = vmul.f32 %v2878, %v301
      %v2943 = vmul.f32 %v2879, %v298
      %v2944 = vmul.f32 %v2880, %v299
      %v2945 = vmul.f32 %v2881, %v300
      %v2946 = vmul.f32 %v2882, %v301
      %v2947 = vmul.f32 %v2883, %v298
      %v2948 = vmul.f32 %v2884, %v299
      %v2949 = vmul.f32 %v2885, %v300
      %v2950 = vmul.f32 %v2886, %v301
      %v2951 = vmul.f32 %v2887, %v298
      %v2952 = vmul.f32 %v2888, %v299
      %v2953 = vmul.f32 %v2889, %v300
      %v2954 = vmul.f32 %v2890, %v301
      %v2955 = vmul.f32 %v2891, %v298
      %v2956 = vmul.f32 %v2892, %v299
      %v2957 = vmul.f32 %v2893, %v300
      %v2958 = vmul.f32 %v2894, %v301
      %v2959 = vmul.f32 %v2895, %v298
      %v2960 = vmul.f32 %v2896, %v299
      %v2961 = vmul.f32 %v2897, %v300
      %v2962 = vmul.f32 %v2898, %v301
      %v2963 = vmul.f32 %v2899, %v298
      %v2964 = vmul.f32 %v2900, %v299
      %v2965 = vmul.f32 %v2901, %v300
      %v2966 = vmul.f32 %v2902, %v301
      %v2967 = vmul.f32 %v2903, %v298
      %v2968 = vmul.f32 %v2904, %v299
      %v2969 = vmul.f32 %v2905, %v300
      %v2970 = vmul.f32 %v2906, %v301
      %v2971 = vmul.f32 %v2907, %v298
      %v2972 = vmul.f32 %v2908, %v299
      %v2973 = vmul.f32 %v2909, %v300
      %v2974 = vmul.f32 %v2910, %v301
      %v2975 = vmul.f32 %v2911, %v298
      %v2976 = vmul.f32 %v2912, %v299
      %v2977 = vmul.f32 %v2913, %v300
      %v2978 = vmul.f32 %v2914, %v301
      %v2979 = vmul.f32 %v2915, %v298
      %v2980 = vmul.f32 %v2916, %v299
      %v2981 = vmul.f32 %v2917, %v300
      %v2982 = vmul.f32 %v2918, %v301
      %v2983 = vmul.f32 %v2919, %v2919
      %v2984 = vmul.f32 %v2920, %v2920
      %v2985 = vmul.f32 %v2921, %v2921
      %v2986 = vmul.f32 %v2922, %v2922
      %v2987 = vmul.f32 %v2923, %v2923
      %v2988 = vmul.f32 %v2924, %v2924
      %v2989 = vmul.f32 %v2925, %v2925
      %v2990 = vmul.f32 %v2926, %v2926
      %v2991 = vmul.f32 %v2927, %v2927
      %v2992 = vmul.f32 %v2928, %v2928
      %v2993 = vmul.f32 %v2929, %v2929
      %v2994 = vmul.f32 %v2930, %v2930
      %v2995 = vmul.f32 %v2931, %v2931
      %v2996 = vmul.f32 %v2932, %v2932
      %v2997 = vmul.f32 %v2933, %v2933
      %v2998 = vmul.f32 %v2934, %v2934
      %v2999 = vmul.f32 %v2935, %v2935
      %v3000 = vmul.f32 %v2936, %v2936
      %v3001 = vmul.f32 %v2937, %v2937
      %v3002 = vmul.f32 %v2938, %v2938
      %v3003 = vmul.f32 %v2939, %v2939
      %v3004 = vmul.f32 %v2940, %v2940
      %v3005 = vmul.f32 %v2941, %v2941
      %v3006 = vmul.f32 %v2942, %v2942
      %v3007 = vmul.f32 %v2943, %v2943
      %v3008 = vmul.f32 %v2944, %v2944
      %v3009 = vmul.f32 %v2945, %v2945
      %v3010 = vmul.f32 %v2946, %v2946
      %v3011 = vmul.f32 %v2947, %v2947
      %v3012 = vmul.f32 %v2948, %v2948
      %v3013 = vmul.f32 %v2949, %v2949
      %v3014 = vmul.f32 %v2950, %v2950
      %v3015 = vmul.f32 %v2951, %v2951
      %v3016 = vmul.f32 %v2952, %v2952
      %v3017 = vmul.f32 %v2953, %v2953
      %v3018 = vmul.f32 %v2954, %v2954
      %v3019 = vmul.f32 %v2955, %v2955
      %v3020 = vmul.f32 %v2956, %v2956
      %v3021 = vmul.f32 %v2957, %v2957
      %v3022 = vmul.f32 %v2958, %v2958
      %v3023 = vmul.f32 %v2959, %v2959
      %v3024 = vmul.f32 %v2960, %v2960
      %v3025 = vmul.f32 %v2961, %v2961
      %v3026 = vmul.f32 %v2962, %v2962
      %v3027 = vmul.f32 %v2963, %v2963
      %v3028 = vmul.f32 %v2964, %v2964
      %v3029 = vmul.f32 %v2965, %v2965
      %v3030 = vmul.f32 %v2966, %v2966
      %v3031 = vmul.f32 %v2967, %v2967
      %v3032 = vmul.f32 %v2968, %v2968
      %v3033 = vmul.f32 %v2969, %v2969
      %v3034 = vmul.f32 %v2970, %v2970
      %v3035 = vmul.f32 %v2971, %v2971
      %v3036 = vmul.f32 %v2972, %v2972
      %v3037 = vmul.f32 %v2973, %v2973
      %v3038 = vmul.f32 %v2974, %v2974
      %v3039 = vmul.f32 %v2975, %v2975
      %v3040 = vmul.f32 %v2976, %v2976
      %v3041 = vmul.f32 %v2977, %v2977
      %v3042 = vmul.f32 %v2978, %v2978
      %v3043 = vmul.f32 %v2979, %v2979
      %v3044 = vmul.f32 %v2980, %v2980
      %v3045 = vmul.f32 %v2981, %v2981
      %v3046 = vmul.f32 %v2982, %v2982
      %v3047 = vadd.f32 %v2983, %v2984
      %v3048 = vadd.f32 %v3047, %v2985
      %v3049 = vadd.f32 %v3048, %v2986
      %v3050 = vadd.f32 %v3049, %v2987
      %v3051 = vadd.f32 %v3050, %v2988
      %v3052 = vadd.f32 %v3051, %v2989
      %v3053 = vadd.f32 %v3052, %v2990
      %v3054 = vadd.f32 %v3053, %v2991
      %v3055 = vadd.f32 %v3054, %v2992
      %v3056 = vadd.f32 %v3055, %v2993
      %v3057 = vadd.f32 %v3056, %v2994
      %v3058 = vadd.f32 %v3057, %v2995
      %v3059 = vadd.f32 %v3058, %v2996
      %v3060 = vadd.f32 %v3059, %v2997
      %v3061 = vadd.f32 %v3060, %v2998
      %v3062 = vadd.f32 %v3061, %v2999
      %v3063 = vadd.f32 %v3062, %v3000
      %v3064 = vadd.f32 %v3063, %v3001
      %v3065 = vadd.f32 %v3064, %v3002
      %v3066 = vadd.f32 %v3065, %v3003
      %v3067 = vadd.f32 %v3066, %v3004
      %v3068 = vadd.f32 %v3067, %v3005
      %v3069 = vadd.f32 %v3068, %v3006
      %v3070 = vadd.f32 %v3069, %v3007
      %v3071 = vadd.f32 %v3070, %v3008
      %v3072 = vadd.f32 %v3071, %v3009
      %v3073 = vadd.f32 %v3072, %v3010
      %v3074 = vadd.f32 %v3073, %v3011
      %v3075 = vadd.f32 %v3074, %v3012
      %v3076 = vadd.f32 %v3075, %v3013
      %v3077 = vadd.f32 %v3076, %v3014
      %v3078 = vadd.f32 %v3077, %v3015
      %v3079 = vadd.f32 %v3078, %v3016
      %v3080 = vadd.f32 %v3079, %v3017
      %v3081 = vadd.f32 %v3080, %v3018
      %v3082 = vadd.f32 %v3081, %v3019
      %v3083 = vadd.f32 %v3082, %v3020
      %v3084 = vadd.f32 %v3083, %v3021
      %v3085 = vadd.f32 %v3084, %v3022
      %v3086 = vadd.f32 %v3085, %v3023
      %v3087 = vadd.f32 %v3086, %v3024
      %v3088 = vadd.f32 %v3087, %v3025
      %v3089 = vadd.f32 %v3088, %v3026
      %v3090 = vadd.f32 %v3089, %v3027
      %v3091 = vadd.f32 %v3090, %v3028
      %v3092 = vadd.f32 %v3091, %v3029
      %v3093 = vadd.f32 %v3092, %v3030
      %v3094 = vadd.f32 %v3093, %v3031
      %v3095 = vadd.f32 %v3094, %v3032
      %v3096 = vadd.f32 %v3095, %v3033
      %v3097 = vadd.f32 %v3096, %v3034
      %v3098 = vadd.f32 %v3097, %v3035
      %v3099 = vadd.f32 %v3098, %v3036
      %v3100 = vadd.f32 %v3099, %v3037
      %v3101 = vadd.f32 %v3100, %v3038
      %v3102 = vadd.f32 %v3101, %v3039
      %v3103 = vadd.f32 %v3102, %v3040
      %v3104 = vadd.f32 %v3103, %v3041
      %v3105 = vadd.f32 %v3104, %v3042
      %v3106 = vadd.f32 %v3105, %v3043
      %v3107 = vadd.f32 %v3106, %v3044
      %v3108 = vadd.f32 %v3107, %v3045
      %v3109 = vadd.f32 %v3108, %v3046
      %v3110 = vrot.slane %v3109, 4
      %v3111 = vadd.f32 %v3109, %v3110
      %v3112 = vrot.slane %v3111, 2
      %v3113 = vadd.f32 %v3111, %v3112
      %v3114 = vrot.slane %v3113, 1
      %v3115 = vadd.f32 %v3113, %v3114
      %v3116 = vmul.f32 %v3115, 0.00390625
      %v3117 = vadd.f32 %v3116, 1e-05
      %v3118 = vrsqrt.pop %v3117
      %v3119 = vmul.f32 %v2855, %v3118
      %v3120 = vmul.f32 %v2856, %v3118
      %v3121 = vmul.f32 %v2857, %v3118
      %v3122 = vmul.f32 %v2858, %v3118
      %v3123 = vmul.f32 %v2859, %v3118
      %v3124 = vmul.f32 %v2860, %v3118
      %v3125 = vmul.f32 %v2861, %v3118
      %v3126 = vmul.f32 %v2862, %v3118
      %v3127 = vmul.f32 %v2863, %v3118
      %v3128 = vmul.f32 %v2864, %v3118
      %v3129 = vmul.f32 %v2865, %v3118
      %v3130 = vmul.f32 %v2866, %v3118
      %v3131 = vmul.f32 %v2867, %v3118
      %v3132 = vmul.f32 %v2868, %v3118
      %v3133 = vmul.f32 %v2869, %v3118
      %v3134 = vmul.f32 %v2870, %v3118
      %v3135 = vmul.f32 %v2871, %v3118
      %v3136 = vmul.f32 %v2872, %v3118
      %v3137 = vmul.f32 %v2873, %v3118
      %v3138 = vmul.f32 %v2874, %v3118
      %v3139 = vmul.f32 %v2875, %v3118
      %v3140 = vmul.f32 %v2876, %v3118
      %v3141 = vmul.f32 %v2877, %v3118
      %v3142 = vmul.f32 %v2878, %v3118
      %v3143 = vmul.f32 %v2879, %v3118
      %v3144 = vmul.f32 %v2880, %v3118
      %v3145 = vmul.f32 %v2881, %v3118
      %v3146 = vmul.f32 %v2882, %v3118
      %v3147 = vmul.f32 %v2883, %v3118
      %v3148 = vmul.f32 %v2884, %v3118
      %v3149 = vmul.f32 %v2885, %v3118
      %v3150 = vmul.f32 %v2886, %v3118
      %v3151 = vmul.f32 %v2887, %v3118
      %v3152 = vmul.f32 %v2888, %v3118
      %v3153 = vmul.f32 %v2889, %v3118
      %v3154 = vmul.f32 %v2890, %v3118
      %v3155 = vmul.f32 %v2891, %v3118
      %v3156 = vmul.f32 %v2892, %v3118
      %v3157 = vmul.f32 %v2893, %v3118
      %v3158 = vmul.f32 %v2894, %v3118
      %v3159 = vmul.f32 %v2895, %v3118
      %v3160 = vmul.f32 %v2896, %v3118
      %v3161 = vmul.f32 %v2897, %v3118
      %v3162 = vmul.f32 %v2898, %v3118
      %v3163 = vmul.f32 %v2899, %v3118
      %v3164 = vmul.f32 %v2900, %v3118
      %v3165 = vmul.f32 %v2901, %v3118
      %v3166 = vmul.f32 %v2902, %v3118
      %v3167 = vmul.f32 %v2903, %v3118
      %v3168 = vmul.f32 %v2904, %v3118
      %v3169 = vmul.f32 %v2905, %v3118
      %v3170 = vmul.f32 %v2906, %v3118
      %v3171 = vmul.f32 %v2907, %v3118
      %v3172 = vmul.f32 %v2908, %v3118
      %v3173 = vmul.f32 %v2909, %v3118
      %v3174 = vmul.f32 %v2910, %v3118
      %v3175 = vmul.f32 %v2911, %v3118
      %v3176 = vmul.f32 %v2912, %v3118
      %v3177 = vmul.f32 %v2913, %v3118
      %v3178 = vmul.f32 %v2914, %v3118
      %v3179 = vmul.f32 %v2915, %v3118
      %v3180 = vmul.f32 %v2916, %v3118
      %v3181 = vmul.f32 %v2917, %v3118
      %v3182 = vmul.f32 %v2918, %v3118
      %v3183 = vmax.f32 %v3119, 0.0
      %v3184 = vmax.f32 %v3120, 0.0
      %v3185 = vmax.f32 %v3121, 0.0
      %v3186 = vmax.f32 %v3122, 0.0
      %v3187 = vmax.f32 %v3123, 0.0
      %v3188 = vmax.f32 %v3124, 0.0
      %v3189 = vmax.f32 %v3125, 0.0
      %v3190 = vmax.f32 %v3126, 0.0
      %v3191 = vmax.f32 %v3127, 0.0
      %v3192 = vmax.f32 %v3128, 0.0
      %v3193 = vmax.f32 %v3129, 0.0
      %v3194 = vmax.f32 %v3130, 0.0
      %v3195 = vmax.f32 %v3131, 0.0
      %v3196 = vmax.f32 %v3132, 0.0
      %v3197 = vmax.f32 %v3133, 0.0
      %v3198 = vmax.f32 %v3134, 0.0
      %v3199 = vmax.f32 %v3135, 0.0
      %v3200 = vmax.f32 %v3136, 0.0
      %v3201 = vmax.f32 %v3137, 0.0
      %v3202 = vmax.f32 %v3138, 0.0
      %v3203 = vmax.f32 %v3139, 0.0
      %v3204 = vmax.f32 %v3140, 0.0
      %v3205 = vmax.f32 %v3141, 0.0
      %v3206 = vmax.f32 %v3142, 0.0
      %v3207 = vmax.f32 %v3143, 0.0
      %v3208 = vmax.f32 %v3144, 0.0
      %v3209 = vmax.f32 %v3145, 0.0
      %v3210 = vmax.f32 %v3146, 0.0
      %v3211 = vmax.f32 %v3147, 0.0
      %v3212 = vmax.f32 %v3148, 0.0
      %v3213 = vmax.f32 %v3149, 0.0
      %v3214 = vmax.f32 %v3150, 0.0
      %v3215 = vmax.f32 %v3151, 0.0
      %v3216 = vmax.f32 %v3152, 0.0
      %v3217 = vmax.f32 %v3153, 0.0
      %v3218 = vmax.f32 %v3154, 0.0
      %v3219 = vmax.f32 %v3155, 0.0
      %v3220 = vmax.f32 %v3156, 0.0
      %v3221 = vmax.f32 %v3157, 0.0
      %v3222 = vmax.f32 %v3158, 0.0
      %v3223 = vmax.f32 %v3159, 0.0
      %v3224 = vmax.f32 %v3160, 0.0
      %v3225 = vmax.f32 %v3161, 0.0
      %v3226 = vmax.f32 %v3162, 0.0
      %v3227 = vmax.f32 %v3163, 0.0
      %v3228 = vmax.f32 %v3164, 0.0
      %v3229 = vmax.f32 %v3165, 0.0
      %v3230 = vmax.f32 %v3166, 0.0
      %v3231 = vmax.f32 %v3167, 0.0
      %v3232 = vmax.f32 %v3168, 0.0
      %v3233 = vmax.f32 %v3169, 0.0
      %v3234 = vmax.f32 %v3170, 0.0
      %v3235 = vmax.f32 %v3171, 0.0
      %v3236 = vmax.f32 %v3172, 0.0
      %v3237 = vmax.f32 %v3173, 0.0
      %v3238 = vmax.f32 %v3174, 0.0
      %v3239 = vmax.f32 %v3175, 0.0
      %v3240 = vmax.f32 %v3176, 0.0
      %v3241 = vmax.f32 %v3177, 0.0
      %v3242 = vmax.f32 %v3178, 0.0
      %v3243 = vmax.f32 %v3179, 0.0
      %v3244 = vmax.f32 %v3180, 0.0
      %v3245 = vmax.f32 %v3181, 0.0
      %v3246 = vmax.f32 %v3182, 0.0
      %v3247 = vmul.f32 %v3183, %v298
      %v3248 = vmul.f32 %v3184, %v299
      %v3249 = vmul.f32 %v3185, %v300
      %v3250 = vmul.f32 %v3186, %v301
      %v3251 = vmul.f32 %v3187, %v298
      %v3252 = vmul.f32 %v3188, %v299
      %v3253 = vmul.f32 %v3189, %v300
      %v3254 = vmul.f32 %v3190, %v301
      %v3255 = vmul.f32 %v3191, %v298
      %v3256 = vmul.f32 %v3192, %v299
      %v3257 = vmul.f32 %v3193, %v300
      %v3258 = vmul.f32 %v3194, %v301
      %v3259 = vmul.f32 %v3195, %v298
      %v3260 = vmul.f32 %v3196, %v299
      %v3261 = vmul.f32 %v3197, %v300
      %v3262 = vmul.f32 %v3198, %v301
      %v3263 = vmul.f32 %v3199, %v298
      %v3264 = vmul.f32 %v3200, %v299
      %v3265 = vmul.f32 %v3201, %v300
      %v3266 = vmul.f32 %v3202, %v301
      %v3267 = vmul.f32 %v3203, %v298
      %v3268 = vmul.f32 %v3204, %v299
      %v3269 = vmul.f32 %v3205, %v300
      %v3270 = vmul.f32 %v3206, %v301
      %v3271 = vmul.f32 %v3207, %v298
      %v3272 = vmul.f32 %v3208, %v299
      %v3273 = vmul.f32 %v3209, %v300
      %v3274 = vmul.f32 %v3210, %v301
      %v3275 = vmul.f32 %v3211, %v298
      %v3276 = vmul.f32 %v3212, %v299
      %v3277 = vmul.f32 %v3213, %v300
      %v3278 = vmul.f32 %v3214, %v301
      %v3279 = vmul.f32 %v3215, %v298
      %v3280 = vmul.f32 %v3216, %v299
      %v3281 = vmul.f32 %v3217, %v300
      %v3282 = vmul.f32 %v3218, %v301
      %v3283 = vmul.f32 %v3219, %v298
      %v3284 = vmul.f32 %v3220, %v299
      %v3285 = vmul.f32 %v3221, %v300
      %v3286 = vmul.f32 %v3222, %v301
      %v3287 = vmul.f32 %v3223, %v298
      %v3288 = vmul.f32 %v3224, %v299
      %v3289 = vmul.f32 %v3225, %v300
      %v3290 = vmul.f32 %v3226, %v301
      %v3291 = vmul.f32 %v3227, %v298
      %v3292 = vmul.f32 %v3228, %v299
      %v3293 = vmul.f32 %v3229, %v300
      %v3294 = vmul.f32 %v3230, %v301
      %v3295 = vmul.f32 %v3231, %v298
      %v3296 = vmul.f32 %v3232, %v299
      %v3297 = vmul.f32 %v3233, %v300
      %v3298 = vmul.f32 %v3234, %v301
      %v3299 = vmul.f32 %v3235, %v298
      %v3300 = vmul.f32 %v3236, %v299
      %v3301 = vmul.f32 %v3237, %v300
      %v3302 = vmul.f32 %v3238, %v301
      %v3303 = vmul.f32 %v3239, %v298
      %v3304 = vmul.f32 %v3240, %v299
      %v3305 = vmul.f32 %v3241, %v300
      %v3306 = vmul.f32 %v3242, %v301
      %v3307 = vmul.f32 %v3243, %v298
      %v3308 = vmul.f32 %v3244, %v299
      %v3309 = vmul.f32 %v3245, %v300
      %v3310 = vmul.f32 %v3246, %v301
      %v3311 = vld [vmem:[%s3] sm:$0xf]
      %v3312 = vld [vmem:[%s3 + $0x4] sm:$0xf]
      %v3313 = vld [vmem:[%s3 + $0x8] sm:$0xf]
      %v3314 = vld [vmem:[%s3 + $0xc] sm:$0xf]
      %v3315 = vld [vmem:[%s3 + $0x10] sm:$0xf]
      %v3316 = vld [vmem:[%s3 + $0x14] sm:$0xf]
      %v3317 = vld [vmem:[%s3 + $0x18] sm:$0xf]
      %v3318 = vld [vmem:[%s3 + $0x1c] sm:$0xf]
      %v3319 = vld [vmem:[%s3 + $0x20] sm:$0xf]
      %v3320 = vld [vmem:[%s3 + $0x24] sm:$0xf]
      %v3321 = vld [vmem:[%s3 + $0x28] sm:$0xf]
      %v3322 = vld [vmem:[%s3 + $0x2c] sm:$0xf]
      %v3323 = vld [vmem:[%s3 + $0x30] sm:$0xf]
      %v3324 = vld [vmem:[%s3 + $0x34] sm:$0xf]
      %v3325 = vld [vmem:[%s3 + $0x38] sm:$0xf]
      %v3326 = vld [vmem:[%s3 + $0x3c] sm:$0xf]
      %v3327 = vld [vmem:[%s3 + $0x40] sm:$0xf]
      %v3328 = vld [vmem:[%s3 + $0x44] sm:$0xf]
      %v3329 = vld [vmem:[%s3 + $0x48] sm:$0xf]
      %v3330 = vld [vmem:[%s3 + $0x4c] sm:$0xf]
      %v3331 = vld [vmem:[%s3 + $0x50] sm:$0xf]
      %v3332 = vld [vmem:[%s3 + $0x54] sm:$0xf]
      %v3333 = vld [vmem:[%s3 + $0x58] sm:$0xf]
      %v3334 = vld [vmem:[%s3 + $0x5c] sm:$0xf]
      %v3335 = vld [vmem:[%s3 + $0x60] sm:$0xf]
      %v3336 = vld [vmem:[%s3 + $0x64] sm:$0xf]
      %v3337 = vld [vmem:[%s3 + $0x68] sm:$0xf]
      %v3338 = vld [vmem:[%s3 + $0x6c] sm:$0xf]
      %v3339 = vld [vmem:[%s3 + $0x70] sm:$0xf]
      %v3340 = vld [vmem:[%s3 + $0x74] sm:$0xf]
      %v3341 = vld [vmem:[%s3 + $0x78] sm:$0xf]
      %v3342 = vld [vmem:[%s3 + $0x7c] sm:$0xf]
      %v3343 = vld [vmem:[%s3 + $0x80] sm:$0xf]
      %v3344 = vld [vmem:[%s3 + $0x84] sm:$0xf]
      %v3345 = vld [vmem:[%s3 + $0x88] sm:$0xf]
      %v3346 = vld [vmem:[%s3 + $0x8c] sm:$0xf]
      %v3347 = vld [vmem:[%s3 + $0x90] sm:$0xf]
      %v3348 = vld [vmem:[%s3 + $0x94] sm:$0xf]
      %v3349 = vld [vmem:[%s3 + $0x98] sm:$0xf]
      %v3350 = vld [vmem:[%s3 + $0x9c] sm:$0xf]
      %v3351 = vld [vmem:[%s3 + $0xa0] sm:$0xf]
      %v3352 = vld [vmem:[%s3 + $0xa4] sm:$0xf]
      %v3353 = vld [vmem:[%s3 + $0xa8] sm:$0xf]
      %v3354 = vld [vmem:[%s3 + $0xac] sm:$0xf]
      %v3355 = vld [vmem:[%s3 + $0xb0] sm:$0xf]
      %v3356 = vld [vmem:[%s3 + $0xb4] sm:$0xf]
      %v3357 = vld [vmem:[%s3 + $0xb8] sm:$0xf]
      %v3358 = vld [vmem:[%s3 + $0xbc] sm:$0xf]
      %v3359 = vld [vmem:[%s3 + $0xc0] sm:$0xf]
      %v3360 = vld [vmem:[%s3 + $0xc4] sm:$0xf]
      %v3361 = vld [vmem:[%s3 + $0xc8] sm:$0xf]
      %v3362 = vld [vmem:[%s3 + $0xcc] sm:$0xf]
      %v3363 = vld [vmem:[%s3 + $0xd0] sm:$0xf]
      %v3364 = vld [vmem:[%s3 + $0xd4] sm:$0xf]
      %v3365 = vld [vmem:[%s3 + $0xd8] sm:$0xf]
      %v3366 = vld [vmem:[%s3 + $0xdc] sm:$0xf]
      %v3367 = vld [vmem:[%s3 + $0xe0] sm:$0xf]
      %v3368 = vld [vmem:[%s3 + $0xe4] sm:$0xf]
      %v3369 = vld [vmem:[%s3 + $0xe8] sm:$0xf]
      %v3370 = vld [vmem:[%s3 + $0xec] sm:$0xf]
      %v3371 = vld [vmem:[%s3 + $0xf0] sm:$0xf]
      %v3372 = vld [vmem:[%s3 + $0xf4] sm:$0xf]
      %v3373 = vld [vmem:[%s3 + $0xf8] sm:$0xf]
      %v3374 = vld [vmem:[%s3 + $0xfc] sm:$0xf]
      %v3375 = vld [vmem:[%s3 + $0x100] sm:$0xf]
      %v3376 = vld [vmem:[%s3 + $0x104] sm:$0xf]
      %v3377 = vld [vmem:[%s3 + $0x108] sm:$0xf]
      %v3378 = vld [vmem:[%s3 + $0x10c] sm:$0xf]
      %v3379 = vld [vmem:[%s3 + $0x110] sm:$0xf]
      %v3380 = vld [vmem:[%s3 + $0x114] sm:$0xf]
      %v3381 = vld [vmem:[%s3 + $0x118] sm:$0xf]
      %v3382 = vld [vmem:[%s3 + $0x11c] sm:$0xf]
      %v3383 = vld [vmem:[%s3 + $0x120] sm:$0xf]
      %v3384 = vld [vmem:[%s3 + $0x124] sm:$0xf]
      %v3385 = vld [vmem:[%s3 + $0x128] sm:$0xf]
      %v3386 = vld [vmem:[%s3 + $0x12c] sm:$0xf]
      %v3387 = vld [vmem:[%s3 + $0x130] sm:$0xf]
      %v3388 = vld [vmem:[%s3 + $0x134] sm:$0xf]
      %v3389 = vld [vmem:[%s3 + $0x138] sm:$0xf]
      %v3390 = vld [vmem:[%s3 + $0x13c] sm:$0xf]
      %v3391 = vld [vmem:[%s3 + $0x140] sm:$0xf]
      %v3392 = vld [vmem:[%s3 + $0x144] sm:$0xf]
      %v3393 = vld [vmem:[%s3 + $0x148] sm:$0xf]
      %v3394 = vld [vmem:[%s3 + $0x14c] sm:$0xf]
      %v3395 = vld [vmem:[%s3 + $0x150] sm:$0xf]
      %v3396 = vld [vmem:[%s3 + $0x154] sm:$0xf]
      %v3397 = vld [vmem:[%s3 + $0x158] sm:$0xf]
      %v3398 = vld [vmem:[%s3 + $0x15c] sm:$0xf]
      %v3399 = vld [vmem:[%s3 + $0x160] sm:$0xf]
      %v3400 = vld [vmem:[%s3 + $0x164] sm:$0xf]
      %v3401 = vld [vmem:[%s3 + $0x168] sm:$0xf]
      %v3402 = vld [vmem:[%s3 + $0x16c] sm:$0xf]
      %v3403 = vld [vmem:[%s3 + $0x170] sm:$0xf]
      %v3404 = vld [vmem:[%s3 + $0x174] sm:$0xf]
      %v3405 = vld [vmem:[%s3 + $0x178] sm:$0xf]
      %v3406 = vld [vmem:[%s3 + $0x17c] sm:$0xf]
      %v3407 = vld [vmem:[%s3 + $0x180] sm:$0xf]
      %v3408 = vld [vmem:[%s3 + $0x184] sm:$0xf]
      %v3409 = vld [vmem:[%s3 + $0x188] sm:$0xf]
      %v3410 = vld [vmem:[%s3 + $0x18c] sm:$0xf]
      %v3411 = vld [vmem:[%s3 + $0x190] sm:$0xf]
      %v3412 = vld [vmem:[%s3 + $0x194] sm:$0xf]
      %v3413 = vld [vmem:[%s3 + $0x198] sm:$0xf]
      %v3414 = vld [vmem:[%s3 + $0x19c] sm:$0xf]
      %v3415 = vld [vmem:[%s3 + $0x1a0] sm:$0xf]
      %v3416 = vld [vmem:[%s3 + $0x1a4] sm:$0xf]
      %v3417 = vld [vmem:[%s3 + $0x1a8] sm:$0xf]
      %v3418 = vld [vmem:[%s3 + $0x1ac] sm:$0xf]
      %v3419 = vld [vmem:[%s3 + $0x1b0] sm:$0xf]
      %v3420 = vld [vmem:[%s3 + $0x1b4] sm:$0xf]
      %v3421 = vld [vmem:[%s3 + $0x1b8] sm:$0xf]
      %v3422 = vld [vmem:[%s3 + $0x1bc] sm:$0xf]
      %v3423 = vld [vmem:[%s3 + $0x1c0] sm:$0xf]
      %v3424 = vld [vmem:[%s3 + $0x1c4] sm:$0xf]
      %v3425 = vld [vmem:[%s3 + $0x1c8] sm:$0xf]
      %v3426 = vld [vmem:[%s3 + $0x1cc] sm:$0xf]
      %v3427 = vld [vmem:[%s3 + $0x1d0] sm:$0xf]
      %v3428 = vld [vmem:[%s3 + $0x1d4] sm:$0xf]
      %v3429 = vld [vmem:[%s3 + $0x1d8] sm:$0xf]
      %v3430 = vld [vmem:[%s3 + $0x1dc] sm:$0xf]
      %v3431 = vld [vmem:[%s3 + $0x1e0] sm:$0xf]
      %v3432 = vld [vmem:[%s3 + $0x1e4] sm:$0xf]
      %v3433 = vld [vmem:[%s3 + $0x1e8] sm:$0xf]
      %v3434 = vld [vmem:[%s3 + $0x1ec] sm:$0xf]
      %v3435 = vld [vmem:[%s3 + $0x1f0] sm:$0xf]
      %v3436 = vld [vmem:[%s3 + $0x1f4] sm:$0xf]
      %v3437 = vld [vmem:[%s3 + $0x1f8] sm:$0xf]
      %v3438 = vld [vmem:[%s3 + $0x1fc] sm:$0xf]
      %v3439 = vld [vmem:[%s3 + $0x200] sm:$0xf]
      %v3440 = vld [vmem:[%s3 + $0x204] sm:$0xf]
      %v3441 = vld [vmem:[%s3 + $0x208] sm:$0xf]
      %v3442 = vld [vmem:[%s3 + $0x20c] sm:$0xf]
      %v3443 = vld [vmem:[%s3 + $0x210] sm:$0xf]
      %v3444 = vld [vmem:[%s3 + $0x214] sm:$0xf]
      %v3445 = vld [vmem:[%s3 + $0x218] sm:$0xf]
      %v3446 = vld [vmem:[%s3 + $0x21c] sm:$0xf]
      %v3447 = vld [vmem:[%s3 + $0x220] sm:$0xf]
      %v3448 = vld [vmem:[%s3 + $0x224] sm:$0xf]
      %v3449 = vld [vmem:[%s3 + $0x228] sm:$0xf]
      %v3450 = vld [vmem:[%s3 + $0x22c] sm:$0xf]
      %v3451 = vld [vmem:[%s3 + $0x230] sm:$0xf]
      %v3452 = vld [vmem:[%s3 + $0x234] sm:$0xf]
      %v3453 = vld [vmem:[%s3 + $0x238] sm:$0xf]
      %v3454 = vld [vmem:[%s3 + $0x23c] sm:$0xf]
      %v3455 = vrot.slane %v3247, 7
      %v3456 = vrot.slane %v3248, 7
      %v3457 = vrot.slane %v3249, 7
      %v3458 = vrot.slane %v3250, 7
      %v3459 = vrot.slane %v3251, 7
      %v3460 = vrot.slane %v3252, 7
      %v3461 = vrot.slane %v3253, 7
      %v3462 = vrot.slane %v3254, 7
      %v3463 = vrot.slane %v3255, 7
      %v3464 = vrot.slane %v3256, 7
      %v3465 = vrot.slane %v3257, 7
      %v3466 = vrot.slane %v3258, 7
      %v3467 = vrot.slane %v3259, 7
      %v3468 = vrot.slane %v3260, 7
      %v3469 = vrot.slane %v3261, 7
      %v3470 = vrot.slane %v3262, 7
      %v3471 = vrot.slane %v3263, 7
      %v3472 = vrot.slane %v3264, 7
      %v3473 = vrot.slane %v3265, 7
      %v3474 = vrot.slane %v3266, 7
      %v3475 = vrot.slane %v3267, 7
      %v3476 = vrot.slane %v3268, 7
      %v3477 = vrot.slane %v3269, 7
      %v3478 = vrot.slane %v3270, 7
      %v3479 = vrot.slane %v3271, 7
      %v3480 = vrot.slane %v3272, 7
      %v3481 = vrot.slane %v3273, 7
      %v3482 = vrot.slane %v3274, 7
      %v3483 = vrot.slane %v3275, 7
      %v3484 = vrot.slane %v3276, 7
      %v3485 = vrot.slane %v3277, 7
      %v3486 = vrot.slane %v3278, 7
      %v3487 = vrot.slane %v3279, 7
      %v3488 = vrot.slane %v3280, 7
      %v3489 = vrot.slane %v3281, 7
      %v3490 = vrot.slane %v3282, 7
      %v3491 = vrot.slane %v3283, 7
      %v3492 = vrot.slane %v3284, 7
      %v3493 = vrot.slane %v3285, 7
      %v3494 = vrot.slane %v3286, 7
      %v3495 = vrot.slane %v3287, 7
      %v3496 = vrot.slane %v3288, 7
      %v3497 = vrot.slane %v3289, 7
      %v3498 = vrot.slane %v3290, 7
      %v3499 = vrot.slane %v3291, 7
      %v3500 = vrot.slane %v3292, 7
      %v3501 = vrot.slane %v3293, 7
      %v3502 = vrot.slane %v3294, 7
      %v3503 = vrot.slane %v3295, 7
      %v3504 = vrot.slane %v3296, 7
      %v3505 = vrot.slane %v3297, 7
      %v3506 = vrot.slane %v3298, 7
      %v3507 = vrot.slane %v3299, 7
      %v3508 = vrot.slane %v3300, 7
      %v3509 = vrot.slane %v3301, 7
      %v3510 = vrot.slane %v3302, 7
      %v3511 = vrot.slane %v3303, 7
      %v3512 = vrot.slane %v3304, 7
      %v3513 = vrot.slane %v3305, 7
      %v3514 = vrot.slane %v3306, 7
      %v3515 = vrot.slane %v3307, 7
      %v3516 = vrot.slane %v3308, 7
      %v3517 = vrot.slane %v3309, 7
      %v3518 = vrot.slane %v3310, 7
      %v3519 = vsel %vm518, %v3518, 0.0
      %v3520 = vsel %vm518, %v3517, %v3518
      %v3521 = vsel %vm518, %v3516, %v3517
      %v3522 = vsel %vm518, %v3515, %v3516
      %v3523 = vsel %vm518, %v3514, %v3515
      %v3524 = vsel %vm518, %v3513, %v3514
      %v3525 = vsel %vm518, %v3512, %v3513
      %v3526 = vsel %vm518, %v3511, %v3512
      %v3527 = vsel %vm518, %v3510, %v3511
      %v3528 = vsel %vm518, %v3509, %v3510
      %v3529 = vsel %vm518, %v3508, %v3509
      %v3530 = vsel %vm518, %v3507, %v3508
      %v3531 = vsel %vm518, %v3506, %v3507
      %v3532 = vsel %vm518, %v3505, %v3506
      %v3533 = vsel %vm518, %v3504, %v3505
      %v3534 = vsel %vm518, %v3503, %v3504
      %v3535 = vsel %vm518, %v3502, %v3503
      %v3536 = vsel %vm518, %v3501, %v3502
      %v3537 = vsel %vm518, %v3500, %v3501
      %v3538 = vsel %vm518, %v3499, %v3500
      %v3539 = vsel %vm518, %v3498, %v3499
      %v3540 = vsel %vm518, %v3497, %v3498
      %v3541 = vsel %vm518, %v3496, %v3497
      %v3542 = vsel %vm518, %v3495, %v3496
      %v3543 = vsel %vm518, %v3494, %v3495
      %v3544 = vsel %vm518, %v3493, %v3494
      %v3545 = vsel %vm518, %v3492, %v3493
      %v3546 = vsel %vm518, %v3491, %v3492
      %v3547 = vsel %vm518, %v3490, %v3491
      %v3548 = vsel %vm518, %v3489, %v3490
      %v3549 = vsel %vm518, %v3488, %v3489
      %v3550 = vsel %vm518, %v3487, %v3488
      %v3551 = vsel %vm518, %v3486, %v3487
      %v3552 = vsel %vm518, %v3485, %v3486
      %v3553 = vsel %vm518, %v3484, %v3485
      %v3554 = vsel %vm518, %v3483, %v3484
      %v3555 = vsel %vm518, %v3482, %v3483
      %v3556 = vsel %vm518, %v3481, %v3482
      %v3557 = vsel %vm518, %v3480, %v3481
      %v3558 = vsel %vm518, %v3479, %v3480
      %v3559 = vsel %vm518, %v3478, %v3479
      %v3560 = vsel %vm518, %v3477, %v3478
      %v3561 = vsel %vm518, %v3476, %v3477
      %v3562 = vsel %vm518, %v3475, %v3476
      %v3563 = vsel %vm518, %v3474, %v3475
      %v3564 = vsel %vm518, %v3473, %v3474
      %v3565 = vsel %vm518, %v3472, %v3473
      %v3566 = vsel %vm518, %v3471, %v3472
      %v3567 = vsel %vm518, %v3470, %v3471
      %v3568 = vsel %vm518, %v3469, %v3470
      %v3569 = vsel %vm518, %v3468, %v3469
      %v3570 = vsel %vm518, %v3467, %v3468
      %v3571 = vsel %vm518, %v3466, %v3467
      %v3572 = vsel %vm518, %v3465, %v3466
      %v3573 = vsel %vm518, %v3464, %v3465
      %v3574 = vsel %vm518, %v3463, %v3464
      %v3575 = vsel %vm518, %v3462, %v3463
      %v3576 = vsel %vm518, %v3461, %v3462
      %v3577 = vsel %vm518, %v3460, %v3461
      %v3578 = vsel %vm518, %v3459, %v3460
      %v3579 = vsel %vm518, %v3458, %v3459
      %v3580 = vsel %vm518, %v3457, %v3458
      %v3581 = vsel %vm518, %v3456, %v3457
      %v3582 = vsel %vm518, %v3455, %v3456
      %v3583 = vsel %vm518, 0.0, %v3455
      %v3584 = vpack.c.bf16 0.0, 0.0
      %v3585 = vpack.c.bf16 %v3582, %v3583
      %v3586 = vpack.c.bf16 %v3580, %v3581
      %v3587 = vpack.c.bf16 %v3578, %v3579
      %v3588 = vpack.c.bf16 %v3576, %v3577
      %v3589 = vpack.c.bf16 %v3574, %v3575
      %v3590 = vpack.c.bf16 %v3572, %v3573
      %v3591 = vpack.c.bf16 %v3570, %v3571
      %v3592 = vpack.c.bf16 %v3568, %v3569
      %v3593 = vpack.c.bf16 %v3566, %v3567
      %v3594 = vpack.c.bf16 %v3564, %v3565
      %v3595 = vpack.c.bf16 %v3562, %v3563
      %v3596 = vpack.c.bf16 %v3560, %v3561
      %v3597 = vpack.c.bf16 %v3558, %v3559
      %v3598 = vpack.c.bf16 %v3556, %v3557
      %v3599 = vpack.c.bf16 %v3554, %v3555
      %v3600 = vpack.c.bf16 %v3552, %v3553
      %v3601 = vpack.c.bf16 %v3550, %v3551
      %v3602 = vpack.c.bf16 %v3548, %v3549
      %v3603 = vpack.c.bf16 %v3546, %v3547
      %v3604 = vpack.c.bf16 %v3544, %v3545
      %v3605 = vpack.c.bf16 %v3542, %v3543
      %v3606 = vpack.c.bf16 %v3540, %v3541
      %v3607 = vpack.c.bf16 %v3538, %v3539
      %v3608 = vpack.c.bf16 %v3536, %v3537
      %v3609 = vpack.c.bf16 %v3534, %v3535
      %v3610 = vpack.c.bf16 %v3532, %v3533
      %v3611 = vpack.c.bf16 %v3530, %v3531
      %v3612 = vpack.c.bf16 %v3528, %v3529
      %v3613 = vpack.c.bf16 %v3526, %v3527
      %v3614 = vpack.c.bf16 %v3524, %v3525
      %v3615 = vpack.c.bf16 %v3522, %v3523
      %v3616 = vpack.c.bf16 %v3520, %v3521
      %v3617 = vpack.c.bf16 0.0, %v3519
      %v3618 = vpack.c.bf16 0.0, 0.0
      %v3619 = vpack.c.bf16 %v3248, %v3247
      %v3620 = vpack.c.bf16 %v3250, %v3249
      %v3621 = vpack.c.bf16 %v3252, %v3251
      %v3622 = vpack.c.bf16 %v3254, %v3253
      %v3623 = vpack.c.bf16 %v3256, %v3255
      %v3624 = vpack.c.bf16 %v3258, %v3257
      %v3625 = vpack.c.bf16 %v3260, %v3259
      %v3626 = vpack.c.bf16 %v3262, %v3261
      %v3627 = vpack.c.bf16 %v3264, %v3263
      %v3628 = vpack.c.bf16 %v3266, %v3265
      %v3629 = vpack.c.bf16 %v3268, %v3267
      %v3630 = vpack.c.bf16 %v3270, %v3269
      %v3631 = vpack.c.bf16 %v3272, %v3271
      %v3632 = vpack.c.bf16 %v3274, %v3273
      %v3633 = vpack.c.bf16 %v3276, %v3275
      %v3634 = vpack.c.bf16 %v3278, %v3277
      %v3635 = vpack.c.bf16 %v3280, %v3279
      %v3636 = vpack.c.bf16 %v3282, %v3281
      %v3637 = vpack.c.bf16 %v3284, %v3283
      %v3638 = vpack.c.bf16 %v3286, %v3285
      %v3639 = vpack.c.bf16 %v3288, %v3287
      %v3640 = vpack.c.bf16 %v3290, %v3289
      %v3641 = vpack.c.bf16 %v3292, %v3291
      %v3642 = vpack.c.bf16 %v3294, %v3293
      %v3643 = vpack.c.bf16 %v3296, %v3295
      %v3644 = vpack.c.bf16 %v3298, %v3297
      %v3645 = vpack.c.bf16 %v3300, %v3299
      %v3646 = vpack.c.bf16 %v3302, %v3301
      %v3647 = vpack.c.bf16 %v3304, %v3303
      %v3648 = vpack.c.bf16 %v3306, %v3305
      %v3649 = vpack.c.bf16 %v3308, %v3307
      %v3650 = vpack.c.bf16 %v3310, %v3309
      %v3651 = vrot.slane %v3247, 1
      %v3652 = vrot.slane %v3248, 1
      %v3653 = vrot.slane %v3249, 1
      %v3654 = vrot.slane %v3250, 1
      %v3655 = vrot.slane %v3251, 1
      %v3656 = vrot.slane %v3252, 1
      %v3657 = vrot.slane %v3253, 1
      %v3658 = vrot.slane %v3254, 1
      %v3659 = vrot.slane %v3255, 1
      %v3660 = vrot.slane %v3256, 1
      %v3661 = vrot.slane %v3257, 1
      %v3662 = vrot.slane %v3258, 1
      %v3663 = vrot.slane %v3259, 1
      %v3664 = vrot.slane %v3260, 1
      %v3665 = vrot.slane %v3261, 1
      %v3666 = vrot.slane %v3262, 1
      %v3667 = vrot.slane %v3263, 1
      %v3668 = vrot.slane %v3264, 1
      %v3669 = vrot.slane %v3265, 1
      %v3670 = vrot.slane %v3266, 1
      %v3671 = vrot.slane %v3267, 1
      %v3672 = vrot.slane %v3268, 1
      %v3673 = vrot.slane %v3269, 1
      %v3674 = vrot.slane %v3270, 1
      %v3675 = vrot.slane %v3271, 1
      %v3676 = vrot.slane %v3272, 1
      %v3677 = vrot.slane %v3273, 1
      %v3678 = vrot.slane %v3274, 1
      %v3679 = vrot.slane %v3275, 1
      %v3680 = vrot.slane %v3276, 1
      %v3681 = vrot.slane %v3277, 1
      %v3682 = vrot.slane %v3278, 1
      %v3683 = vrot.slane %v3279, 1
      %v3684 = vrot.slane %v3280, 1
      %v3685 = vrot.slane %v3281, 1
      %v3686 = vrot.slane %v3282, 1
      %v3687 = vrot.slane %v3283, 1
      %v3688 = vrot.slane %v3284, 1
      %v3689 = vrot.slane %v3285, 1
      %v3690 = vrot.slane %v3286, 1
      %v3691 = vrot.slane %v3287, 1
      %v3692 = vrot.slane %v3288, 1
      %v3693 = vrot.slane %v3289, 1
      %v3694 = vrot.slane %v3290, 1
      %v3695 = vrot.slane %v3291, 1
      %v3696 = vrot.slane %v3292, 1
      %v3697 = vrot.slane %v3293, 1
      %v3698 = vrot.slane %v3294, 1
      %v3699 = vrot.slane %v3295, 1
      %v3700 = vrot.slane %v3296, 1
      %v3701 = vrot.slane %v3297, 1
      %v3702 = vrot.slane %v3298, 1
      %v3703 = vrot.slane %v3299, 1
      %v3704 = vrot.slane %v3300, 1
      %v3705 = vrot.slane %v3301, 1
      %v3706 = vrot.slane %v3302, 1
      %v3707 = vrot.slane %v3303, 1
      %v3708 = vrot.slane %v3304, 1
      %v3709 = vrot.slane %v3305, 1
      %v3710 = vrot.slane %v3306, 1
      %v3711 = vrot.slane %v3307, 1
      %v3712 = vrot.slane %v3308, 1
      %v3713 = vrot.slane %v3309, 1
      %v3714 = vrot.slane %v3310, 1
      %v3715 = vsel %vm735, %v3714, 0.0
      %v3716 = vsel %vm735, %v3713, %v3714
      %v3717 = vsel %vm735, %v3712, %v3713
      %v3718 = vsel %vm735, %v3711, %v3712
      %v3719 = vsel %vm735, %v3710, %v3711
      %v3720 = vsel %vm735, %v3709, %v3710
      %v3721 = vsel %vm735, %v3708, %v3709
      %v3722 = vsel %vm735, %v3707, %v3708
      %v3723 = vsel %vm735, %v3706, %v3707
      %v3724 = vsel %vm735, %v3705, %v3706
      %v3725 = vsel %vm735, %v3704, %v3705
      %v3726 = vsel %vm735, %v3703, %v3704
      %v3727 = vsel %vm735, %v3702, %v3703
      %v3728 = vsel %vm735, %v3701, %v3702
      %v3729 = vsel %vm735, %v3700, %v3701
      %v3730 = vsel %vm735, %v3699, %v3700
      %v3731 = vsel %vm735, %v3698, %v3699
      %v3732 = vsel %vm735, %v3697, %v3698
      %v3733 = vsel %vm735, %v3696, %v3697
      %v3734 = vsel %vm735, %v3695, %v3696
      %v3735 = vsel %vm735, %v3694, %v3695
      %v3736 = vsel %vm735, %v3693, %v3694
      %v3737 = vsel %vm735, %v3692, %v3693
      %v3738 = vsel %vm735, %v3691, %v3692
      %v3739 = vsel %vm735, %v3690, %v3691
      %v3740 = vsel %vm735, %v3689, %v3690
      %v3741 = vsel %vm735, %v3688, %v3689
      %v3742 = vsel %vm735, %v3687, %v3688
      %v3743 = vsel %vm735, %v3686, %v3687
      %v3744 = vsel %vm735, %v3685, %v3686
      %v3745 = vsel %vm735, %v3684, %v3685
      %v3746 = vsel %vm735, %v3683, %v3684
      %v3747 = vsel %vm735, %v3682, %v3683
      %v3748 = vsel %vm735, %v3681, %v3682
      %v3749 = vsel %vm735, %v3680, %v3681
      %v3750 = vsel %vm735, %v3679, %v3680
      %v3751 = vsel %vm735, %v3678, %v3679
      %v3752 = vsel %vm735, %v3677, %v3678
      %v3753 = vsel %vm735, %v3676, %v3677
      %v3754 = vsel %vm735, %v3675, %v3676
      %v3755 = vsel %vm735, %v3674, %v3675
      %v3756 = vsel %vm735, %v3673, %v3674
      %v3757 = vsel %vm735, %v3672, %v3673
      %v3758 = vsel %vm735, %v3671, %v3672
      %v3759 = vsel %vm735, %v3670, %v3671
      %v3760 = vsel %vm735, %v3669, %v3670
      %v3761 = vsel %vm735, %v3668, %v3669
      %v3762 = vsel %vm735, %v3667, %v3668
      %v3763 = vsel %vm735, %v3666, %v3667
      %v3764 = vsel %vm735, %v3665, %v3666
      %v3765 = vsel %vm735, %v3664, %v3665
      %v3766 = vsel %vm735, %v3663, %v3664
      %v3767 = vsel %vm735, %v3662, %v3663
      %v3768 = vsel %vm735, %v3661, %v3662
      %v3769 = vsel %vm735, %v3660, %v3661
      %v3770 = vsel %vm735, %v3659, %v3660
      %v3771 = vsel %vm735, %v3658, %v3659
      %v3772 = vsel %vm735, %v3657, %v3658
      %v3773 = vsel %vm735, %v3656, %v3657
      %v3774 = vsel %vm735, %v3655, %v3656
      %v3775 = vsel %vm735, %v3654, %v3655
      %v3776 = vsel %vm735, %v3653, %v3654
      %v3777 = vsel %vm735, %v3652, %v3653
      %v3778 = vsel %vm735, %v3651, %v3652
      %v3779 = vsel %vm735, 0.0, %v3651
      %v3780 = vpack.c.bf16 0.0, 0.0
      %v3781 = vpack.c.bf16 %v3779, 0.0
      %v3782 = vpack.c.bf16 %v3777, %v3778
      %v3783 = vpack.c.bf16 %v3775, %v3776
      %v3784 = vpack.c.bf16 %v3773, %v3774
      %v3785 = vpack.c.bf16 %v3771, %v3772
      %v3786 = vpack.c.bf16 %v3769, %v3770
      %v3787 = vpack.c.bf16 %v3767, %v3768
      %v3788 = vpack.c.bf16 %v3765, %v3766
      %v3789 = vpack.c.bf16 %v3763, %v3764
      %v3790 = vpack.c.bf16 %v3761, %v3762
      %v3791 = vpack.c.bf16 %v3759, %v3760
      %v3792 = vpack.c.bf16 %v3757, %v3758
      %v3793 = vpack.c.bf16 %v3755, %v3756
      %v3794 = vpack.c.bf16 %v3753, %v3754
      %v3795 = vpack.c.bf16 %v3751, %v3752
      %v3796 = vpack.c.bf16 %v3749, %v3750
      %v3797 = vpack.c.bf16 %v3747, %v3748
      %v3798 = vpack.c.bf16 %v3745, %v3746
      %v3799 = vpack.c.bf16 %v3743, %v3744
      %v3800 = vpack.c.bf16 %v3741, %v3742
      %v3801 = vpack.c.bf16 %v3739, %v3740
      %v3802 = vpack.c.bf16 %v3737, %v3738
      %v3803 = vpack.c.bf16 %v3735, %v3736
      %v3804 = vpack.c.bf16 %v3733, %v3734
      %v3805 = vpack.c.bf16 %v3731, %v3732
      %v3806 = vpack.c.bf16 %v3729, %v3730
      %v3807 = vpack.c.bf16 %v3727, %v3728
      %v3808 = vpack.c.bf16 %v3725, %v3726
      %v3809 = vpack.c.bf16 %v3723, %v3724
      %v3810 = vpack.c.bf16 %v3721, %v3722
      %v3811 = vpack.c.bf16 %v3719, %v3720
      %v3812 = vpack.c.bf16 %v3717, %v3718
      %v3813 = vpack.c.bf16 %v3715, %v3716
      %v3958 = vunpack.c.l.b16 %v3311
      %v3959 = vunpack.c.l.b16 %v3312
      %v3960 = vunpack.c.l.b16 %v3313
      %v3961 = vunpack.c.l.b16 %v3314
      %v3962 = vunpack.c.l.b16 %v3315
      %v3963 = vunpack.c.l.b16 %v3316
      %v3964 = vunpack.c.l.b16 %v3317
      %v3965 = vunpack.c.l.b16 %v3318
      %v3966 = vunpack.c.l.b16 %v3319
      %v3967 = vunpack.c.l.b16 %v3320
      %v3968 = vunpack.c.l.b16 %v3321
      %v3969 = vunpack.c.l.b16 %v3322
      %v3970 = vunpack.c.l.b16 %v3323
      %v3971 = vunpack.c.l.b16 %v3324
      %v3972 = vunpack.c.l.b16 %v3325
      %v3973 = vunpack.c.l.b16 %v3326
      %v3974 = vunpack.c.l.b16 %v3327
      %v3975 = vunpack.c.l.b16 %v3328
      %v3976 = vunpack.c.l.b16 %v3329
      %v3977 = vunpack.c.l.b16 %v3330
      %v3978 = vunpack.c.l.b16 %v3331
      %v3979 = vunpack.c.l.b16 %v3332
      %v3980 = vunpack.c.l.b16 %v3333
      %v3981 = vunpack.c.l.b16 %v3334
      %v3982 = vunpack.c.l.b16 %v3335
      %v3983 = vunpack.c.l.b16 %v3336
      %v3984 = vunpack.c.l.b16 %v3337
      %v3985 = vunpack.c.l.b16 %v3338
      %v3986 = vunpack.c.l.b16 %v3339
      %v3987 = vunpack.c.l.b16 %v3340
      %v3988 = vunpack.c.l.b16 %v3341
      %v3989 = vunpack.c.l.b16 %v3342
      %v3990 = vunpack.c.l.b16 %v3343
      %v3991 = vunpack.c.l.b16 %v3344
      %v3992 = vunpack.c.l.b16 %v3345
      %v3993 = vunpack.c.l.b16 %v3346
      %v3994 = vunpack.c.l.b16 %v3347
      %v3995 = vunpack.c.l.b16 %v3348
      %v3996 = vunpack.c.l.b16 %v3349
      %v3997 = vunpack.c.l.b16 %v3350
      %v3998 = vunpack.c.l.b16 %v3351
      %v3999 = vunpack.c.l.b16 %v3352
      %v4000 = vunpack.c.l.b16 %v3353
      %v4001 = vunpack.c.l.b16 %v3354
      %v4002 = vunpack.c.l.b16 %v3355
      %v4003 = vunpack.c.l.b16 %v3356
      %v4004 = vunpack.c.l.b16 %v3357
      %v4005 = vunpack.c.l.b16 %v3358
      %v4006 = vunpack.c.l.b16 %v3359
      %v4007 = vunpack.c.l.b16 %v3360
      %v4008 = vunpack.c.l.b16 %v3361
      %v4009 = vunpack.c.l.b16 %v3362
      %v4010 = vunpack.c.l.b16 %v3363
      %v4011 = vunpack.c.l.b16 %v3364
      %v4012 = vunpack.c.l.b16 %v3365
      %v4013 = vunpack.c.l.b16 %v3366
      %v4014 = vunpack.c.l.b16 %v3367
      %v4015 = vunpack.c.l.b16 %v3368
      %v4016 = vunpack.c.l.b16 %v3369
      %v4017 = vunpack.c.l.b16 %v3370
      %v4018 = vunpack.c.l.b16 %v3371
      %v4019 = vunpack.c.l.b16 %v3372
      %v4020 = vunpack.c.l.b16 %v3373
      %v4021 = vunpack.c.l.b16 %v3374
      %v4022 = vunpack.c.l.b16 %v3375
      %v4023 = vunpack.c.l.b16 %v3376
      %v4024 = vunpack.c.l.b16 %v3377
      %v4025 = vunpack.c.l.b16 %v3378
      %v4026 = vunpack.c.l.b16 %v3379
      %v4027 = vunpack.c.l.b16 %v3380
      %v4028 = vunpack.c.l.b16 %v3381
      %v4029 = vunpack.c.l.b16 %v3382
      %v4030 = vunpack.c.l.b16 %v3383
      %v4031 = vunpack.c.l.b16 %v3384
      %v4032 = vunpack.c.l.b16 %v3385
      %v4033 = vunpack.c.l.b16 %v3386
      %v4034 = vunpack.c.l.b16 %v3387
      %v4035 = vunpack.c.l.b16 %v3388
      %v4036 = vunpack.c.l.b16 %v3389
      %v4037 = vunpack.c.l.b16 %v3390
      %v4038 = vunpack.c.l.b16 %v3391
      %v4039 = vunpack.c.l.b16 %v3392
      %v4040 = vunpack.c.l.b16 %v3393
      %v4041 = vunpack.c.l.b16 %v3394
      %v4042 = vunpack.c.l.b16 %v3395
      %v4043 = vunpack.c.l.b16 %v3396
      %v4044 = vunpack.c.l.b16 %v3397
      %v4045 = vunpack.c.l.b16 %v3398
      %v4046 = vunpack.c.l.b16 %v3399
      %v4047 = vunpack.c.l.b16 %v3400
      %v4048 = vunpack.c.l.b16 %v3401
      %v4049 = vunpack.c.l.b16 %v3402
      %v4050 = vunpack.c.l.b16 %v3403
      %v4051 = vunpack.c.l.b16 %v3404
      %v4052 = vunpack.c.l.b16 %v3405
      %v4053 = vunpack.c.l.b16 %v3406
      %v4054 = vunpack.c.l.b16 %v3407
      %v4055 = vunpack.c.l.b16 %v3408
      %v4056 = vunpack.c.l.b16 %v3409
      %v4057 = vunpack.c.l.b16 %v3410
      %v4058 = vunpack.c.l.b16 %v3411
      %v4059 = vunpack.c.l.b16 %v3412
      %v4060 = vunpack.c.l.b16 %v3413
      %v4061 = vunpack.c.l.b16 %v3414
      %v4062 = vunpack.c.l.b16 %v3415
      %v4063 = vunpack.c.l.b16 %v3416
      %v4064 = vunpack.c.l.b16 %v3417
      %v4065 = vunpack.c.l.b16 %v3418
      %v4066 = vunpack.c.l.b16 %v3419
      %v4067 = vunpack.c.l.b16 %v3420
      %v4068 = vunpack.c.l.b16 %v3421
      %v4069 = vunpack.c.l.b16 %v3422
      %v4070 = vunpack.c.l.b16 %v3423
      %v4071 = vunpack.c.l.b16 %v3424
      %v4072 = vunpack.c.l.b16 %v3425
      %v4073 = vunpack.c.l.b16 %v3426
      %v4074 = vunpack.c.l.b16 %v3427
      %v4075 = vunpack.c.l.b16 %v3428
      %v4076 = vunpack.c.l.b16 %v3429
      %v4077 = vunpack.c.l.b16 %v3430
      %v4078 = vunpack.c.l.b16 %v3431
      %v4079 = vunpack.c.l.b16 %v3432
      %v4080 = vunpack.c.l.b16 %v3433
      %v4081 = vunpack.c.l.b16 %v3434
      %v4082 = vunpack.c.l.b16 %v3435
      %v4083 = vunpack.c.l.b16 %v3436
      %v4084 = vunpack.c.l.b16 %v3437
      %v4085 = vunpack.c.l.b16 %v3438
      %v4086 = vunpack.c.l.b16 %v3439
      %v4087 = vunpack.c.l.b16 %v3440
      %v4088 = vunpack.c.l.b16 %v3441
      %v4089 = vunpack.c.l.b16 %v3442
      %v4090 = vunpack.c.l.b16 %v3443
      %v4091 = vunpack.c.l.b16 %v3444
      %v4092 = vunpack.c.l.b16 %v3445
      %v4093 = vunpack.c.l.b16 %v3446
      %v4094 = vunpack.c.l.b16 %v3447
      %v4095 = vunpack.c.l.b16 %v3448
      %v4096 = vunpack.c.l.b16 %v3449
      %v4097 = vunpack.c.l.b16 %v3450
      %v4098 = vunpack.c.l.b16 %v3451
      %v4099 = vunpack.c.l.b16 %v3452
      %v4100 = vunpack.c.l.b16 %v3453
      %v4101 = vunpack.c.l.b16 %v3454
      %v4102 = vpack.c.b16 %v3959, %v3958
      %v4103 = vpack.c.b16 %v3961, %v3960
      %v4104 = vpack.c.b16 %v3963, %v3962
      %v4105 = vpack.c.b16 %v3965, %v3964
      %v4106 = vpack.c.b16 %v3967, %v3966
      %v4107 = vpack.c.b16 %v3969, %v3968
      %v4108 = vpack.c.b16 %v3971, %v3970
      %v4109 = vpack.c.b16 %v3973, %v3972
      %v4110 = vpack.c.b16 %v3975, %v3974
      %v4111 = vpack.c.b16 %v3977, %v3976
      %v4112 = vpack.c.b16 %v3979, %v3978
      %v4113 = vpack.c.b16 %v3981, %v3980
      %v4114 = vpack.c.b16 %v3983, %v3982
      %v4115 = vpack.c.b16 %v3985, %v3984
      %v4116 = vpack.c.b16 %v3987, %v3986
      %v4117 = vpack.c.b16 %v3989, %v3988
      %v4118 = vpack.c.b16 %v3991, %v3990
      %v4119 = vpack.c.b16 %v3993, %v3992
      %v4120 = vpack.c.b16 %v3995, %v3994
      %v4121 = vpack.c.b16 %v3997, %v3996
      %v4122 = vpack.c.b16 %v3999, %v3998
      %v4123 = vpack.c.b16 %v4001, %v4000
      %v4124 = vpack.c.b16 %v4003, %v4002
      %v4125 = vpack.c.b16 %v4005, %v4004
      %v4126 = vpack.c.b16 %v4007, %v4006
      %v4127 = vpack.c.b16 %v4009, %v4008
      %v4128 = vpack.c.b16 %v4011, %v4010
      %v4129 = vpack.c.b16 %v4013, %v4012
      %v4130 = vpack.c.b16 %v4015, %v4014
      %v4131 = vpack.c.b16 %v4017, %v4016
      %v4132 = vpack.c.b16 %v4019, %v4018
      %v4133 = vpack.c.b16 %v4021, %v4020
      %v4134 = vpack.c.b16 %v4023, %v4022
      %v4135 = vpack.c.b16 %v4025, %v4024
      %v4136 = vpack.c.b16 %v4027, %v4026
      %v4137 = vpack.c.b16 %v4029, %v4028
      %v4138 = vpack.c.b16 %v4031, %v4030
      %v4139 = vpack.c.b16 %v4033, %v4032
      %v4140 = vpack.c.b16 %v4035, %v4034
      %v4141 = vpack.c.b16 %v4037, %v4036
      %v4142 = vpack.c.b16 %v4039, %v4038
      %v4143 = vpack.c.b16 %v4041, %v4040
      %v4144 = vpack.c.b16 %v4043, %v4042
      %v4145 = vpack.c.b16 %v4045, %v4044
      %v4146 = vpack.c.b16 %v4047, %v4046
      %v4147 = vpack.c.b16 %v4049, %v4048
      %v4148 = vpack.c.b16 %v4051, %v4050
      %v4149 = vpack.c.b16 %v4053, %v4052
      %v4150 = vpack.c.b16 %v4055, %v4054
      %v4151 = vpack.c.b16 %v4057, %v4056
      %v4152 = vpack.c.b16 %v4059, %v4058
      %v4153 = vpack.c.b16 %v4061, %v4060
      %v4154 = vpack.c.b16 %v4063, %v4062
      %v4155 = vpack.c.b16 %v4065, %v4064
      %v4156 = vpack.c.b16 %v4067, %v4066
      %v4157 = vpack.c.b16 %v4069, %v4068
      %v4158 = vpack.c.b16 %v4071, %v4070
      %v4159 = vpack.c.b16 %v4073, %v4072
      %v4160 = vpack.c.b16 %v4075, %v4074
      %v4161 = vpack.c.b16 %v4077, %v4076
      %v4162 = vpack.c.b16 %v4079, %v4078
      %v4163 = vpack.c.b16 %v4081, %v4080
      %v4164 = vpack.c.b16 %v4083, %v4082
      %v4165 = vpack.c.b16 %v4085, %v4084
      %v4166 = vpack.c.b16 %v4087, %v4086
      %v4167 = vpack.c.b16 %v4089, %v4088
      %v4168 = vpack.c.b16 %v4091, %v4090
      %v4169 = vpack.c.b16 %v4093, %v4092
      %v4170 = vpack.c.b16 %v4095, %v4094
      %v4171 = vpack.c.b16 %v4097, %v4096
      %v4172 = vpack.c.b16 %v4099, %v4098
      %v4173 = vpack.c.b16 %v4101, %v4100
      %4246 = vmatprep.subr.bf16.mxu0 0
      %4247 = vmatpush1.bf16.msra.mxu0 %v4109
      %4248 = vmatprep.subr.bf16.mxu0 0
      %4249 = vmatpush1.bf16.msra.mxu0 %v4108
      %4250 = vmatprep.subr.bf16.mxu0 0
      %4251 = vmatpush1.bf16.msra.mxu0 %v4107
      %4252 = vmatprep.subr.bf16.mxu0 0
      %4253 = vmatpush1.bf16.msra.mxu0 %v4106
      %4254 = vmatprep.subr.bf16.mxu0 0
      %4255 = vmatpush1.bf16.msra.mxu0 %v4105
      %4256 = vmatprep.subr.bf16.mxu0 0
      %4257 = vmatpush1.bf16.msra.mxu0 %v4104
      %4258 = vmatprep.subr.bf16.mxu0 0
      %4259 = vmatpush1.bf16.msra.mxu0 %v4103
      %4260 = vmatprep.subr.bf16.mxu0 0
      %4261 = vmatpush1.bf16.msra.mxu0 %v4102
      %4262 = vmatprep.subr.bf16.mxu0 0
      %4263 = vmatpush2.bf16.msra.mxu0 %v4117
      %4264 = vmatprep.subr.bf16.mxu0 0
      %4265 = vmatpush2.bf16.msra.mxu0 %v4116
      %4266 = vmatprep.subr.bf16.mxu0 0
      %4267 = vmatpush2.bf16.msra.mxu0 %v4115
      %4268 = vmatprep.subr.bf16.mxu0 0
      %4269 = vmatpush2.bf16.msra.mxu0 %v4114
      %4270 = vmatprep.subr.bf16.mxu0 0
      %4271 = vmatpush2.bf16.msra.mxu0 %v4113
      %4272 = vmatprep.subr.bf16.mxu0 0
      %4273 = vmatpush2.bf16.msra.mxu0 %v4112
      %4274 = vmatprep.subr.bf16.mxu0 0
      %4275 = vmatpush2.bf16.msra.mxu0 %v4111
      %4276 = vmatprep.subr.bf16.mxu0 0
      %4277 = vmatpush2.bf16.msra.mxu0 %v4110
      %4278 = vmatprep.mubr.bf16.mxu0 %v3618
      %4279 = vmatmul.mubr.bf16.gmra.mxu0 %v3584
      %v4280 = vpop.f32.mrf.mxu0
      %v4281 = vadd.f32 %v217, %v4280
      %v4282 = vpop.f32.mrf.mxu0
      %v4283 = vpop.f32.mrf.mxu0
      %v4284 = vadd.f32 %v218, %v4283
      %v4285 = vpop.f32.mrf.mxu0
      %4286 = vmatprep.mubr.bf16.mxu0 %v3618
      %4287 = vmatmul.mubr.bf16.gmra.mxu0 %v3584
      %v4288 = vpop.f32.mrf.mxu0
      %v4289 = vadd.f32 %v219, %v4288
      %v4290 = vpop.f32.mrf.mxu0
      %v4291 = vpop.f32.mrf.mxu0
      %v4292 = vadd.f32 %v220, %v4291
      %v4293 = vpop.f32.mrf.mxu0
      %4294 = vmatprep.mubr.bf16.mxu0 %v3619
      %4295 = vmatmul.mubr.bf16.gmra.mxu0 %v3585
      %v4296 = vpop.f32.mrf.mxu0
      %v4297 = vadd.f32 %v221, %v4296
      %v4298 = vpop.f32.mrf.mxu0
      %v4299 = vpop.f32.mrf.mxu0
      %v4300 = vadd.f32 %v222, %v4299
      %v4301 = vpop.f32.mrf.mxu0
      %4302 = vmatprep.mubr.bf16.mxu0 %v3620
      %4303 = vmatmul.mubr.bf16.gmra.mxu0 %v3586
      %v4304 = vpop.f32.mrf.mxu0
      %v4305 = vadd.f32 %v223, %v4304
      %v4306 = vpop.f32.mrf.mxu0
      %v4307 = vpop.f32.mrf.mxu0
      %v4308 = vadd.f32 %v224, %v4307
      %v4309 = vpop.f32.mrf.mxu0
      %4310 = vmatprep.mubr.bf16.mxu0 %v3621
      %4311 = vmatmul.mubr.bf16.gmra.mxu0 %v3587
      %v4312 = vpop.f32.mrf.mxu0
      %v4313 = vadd.f32 %v225, %v4312
      %v4314 = vpop.f32.mrf.mxu0
      %v4315 = vpop.f32.mrf.mxu0
      %v4316 = vadd.f32 %v226, %v4315
      %v4317 = vpop.f32.mrf.mxu0
      %4318 = vmatprep.mubr.bf16.mxu0 %v3622
      %4319 = vmatmul.mubr.bf16.gmra.mxu0 %v3588
      %v4320 = vpop.f32.mrf.mxu0
      %v4321 = vadd.f32 %v227, %v4320
      %v4322 = vpop.f32.mrf.mxu0
      %v4323 = vpop.f32.mrf.mxu0
      %v4324 = vadd.f32 %v228, %v4323
      %v4325 = vpop.f32.mrf.mxu0
      %4326 = vmatprep.mubr.bf16.mxu0 %v3623
      %4327 = vmatmul.mubr.bf16.gmra.mxu0 %v3589
      %v4328 = vpop.f32.mrf.mxu0
      %v4329 = vadd.f32 %v229, %v4328
      %v4330 = vpop.f32.mrf.mxu0
      %v4331 = vpop.f32.mrf.mxu0
      %v4332 = vadd.f32 %v230, %v4331
      %v4333 = vpop.f32.mrf.mxu0
      %4334 = vmatprep.mubr.bf16.mxu0 %v3624
      %4335 = vmatmul.mubr.bf16.gmra.mxu0 %v3590
      %v4336 = vpop.f32.mrf.mxu0
      %v4337 = vadd.f32 %v231, %v4336
      %v4338 = vpop.f32.mrf.mxu0
      %v4339 = vpop.f32.mrf.mxu0
      %v4340 = vadd.f32 %v232, %v4339
      %v4341 = vpop.f32.mrf.mxu0
      %4342 = vmatprep.mubr.bf16.mxu0 %v3625
      %4343 = vmatmul.mubr.bf16.gmra.mxu0 %v3591
      %v4344 = vpop.f32.mrf.mxu0
      %v4345 = vadd.f32 %v233, %v4344
      %v4346 = vpop.f32.mrf.mxu0
      %v4347 = vpop.f32.mrf.mxu0
      %v4348 = vadd.f32 %v234, %v4347
      %v4349 = vpop.f32.mrf.mxu0
      %4350 = vmatprep.mubr.bf16.mxu0 %v3626
      %4351 = vmatmul.mubr.bf16.gmra.mxu0 %v3592
      %v4352 = vpop.f32.mrf.mxu0
      %v4353 = vadd.f32 %v235, %v4352
      %v4354 = vpop.f32.mrf.mxu0
      %v4355 = vpop.f32.mrf.mxu0
      %v4356 = vadd.f32 %v236, %v4355
      %v4357 = vpop.f32.mrf.mxu0
      %4358 = vmatprep.mubr.bf16.mxu0 %v3627
      %4359 = vmatmul.mubr.bf16.gmra.mxu0 %v3593
      %v4360 = vpop.f32.mrf.mxu0
      %v4361 = vadd.f32 %v237, %v4360
      %v4362 = vpop.f32.mrf.mxu0
      %v4363 = vpop.f32.mrf.mxu0
      %v4364 = vadd.f32 %v238, %v4363
      %v4365 = vpop.f32.mrf.mxu0
      %4366 = vmatprep.mubr.bf16.mxu0 %v3628
      %4367 = vmatmul.mubr.bf16.gmra.mxu0 %v3594
      %v4368 = vpop.f32.mrf.mxu0
      %v4369 = vadd.f32 %v239, %v4368
      %v4370 = vpop.f32.mrf.mxu0
      %v4371 = vpop.f32.mrf.mxu0
      %v4372 = vadd.f32 %v240, %v4371
      %v4373 = vpop.f32.mrf.mxu0
      %4374 = vmatprep.mubr.bf16.mxu0 %v3629
      %4375 = vmatmul.mubr.bf16.gmra.mxu0 %v3595
      %v4376 = vpop.f32.mrf.mxu0
      %v4377 = vadd.f32 %v241, %v4376
      %v4378 = vpop.f32.mrf.mxu0
      %v4379 = vpop.f32.mrf.mxu0
      %v4380 = vadd.f32 %v242, %v4379
      %v4381 = vpop.f32.mrf.mxu0
      %4382 = vmatprep.mubr.bf16.mxu0 %v3630
      %4383 = vmatmul.mubr.bf16.gmra.mxu0 %v3596
      %v4384 = vpop.f32.mrf.mxu0
      %v4385 = vadd.f32 %v243, %v4384
      %v4386 = vpop.f32.mrf.mxu0
      %v4387 = vpop.f32.mrf.mxu0
      %v4388 = vadd.f32 %v244, %v4387
      %v4389 = vpop.f32.mrf.mxu0
      %4390 = vmatprep.mubr.bf16.mxu0 %v3631
      %4391 = vmatmul.mubr.bf16.gmra.mxu0 %v3597
      %v4392 = vpop.f32.mrf.mxu0
      %v4393 = vadd.f32 %v245, %v4392
      %v4394 = vpop.f32.mrf.mxu0
      %v4395 = vpop.f32.mrf.mxu0
      %v4396 = vadd.f32 %v246, %v4395
      %v4397 = vpop.f32.mrf.mxu0
      %4398 = vmatprep.mubr.bf16.mxu0 %v3632
      %4399 = vmatmul.mubr.bf16.gmra.mxu0 %v3598
      %v4400 = vpop.f32.mrf.mxu0
      %v4401 = vadd.f32 %v247, %v4400
      %v4402 = vpop.f32.mrf.mxu0
      %v4403 = vpop.f32.mrf.mxu0
      %v4404 = vadd.f32 %v248, %v4403
      %v4405 = vpop.f32.mrf.mxu0
      %4406 = vmatprep.mubr.bf16.mxu0 %v3633
      %4407 = vmatmul.mubr.bf16.gmra.mxu0 %v3599
      %v4408 = vpop.f32.mrf.mxu0
      %v4409 = vadd.f32 %v249, %v4408
      %v4410 = vpop.f32.mrf.mxu0
      %v4411 = vpop.f32.mrf.mxu0
      %v4412 = vadd.f32 %v250, %v4411
      %v4413 = vpop.f32.mrf.mxu0
      %4414 = vmatprep.mubr.bf16.mxu0 %v3634
      %4415 = vmatmul.mubr.bf16.gmra.mxu0 %v3600
      %v4416 = vpop.f32.mrf.mxu0
      %v4417 = vadd.f32 %v251, %v4416
      %v4418 = vpop.f32.mrf.mxu0
      %v4419 = vpop.f32.mrf.mxu0
      %v4420 = vadd.f32 %v252, %v4419
      %v4421 = vpop.f32.mrf.mxu0
      %4422 = vmatprep.mubr.bf16.mxu0 %v3635
      %4423 = vmatmul.mubr.bf16.gmra.mxu0 %v3601
      %v4424 = vpop.f32.mrf.mxu0
      %v4425 = vadd.f32 %v253, %v4424
      %v4426 = vpop.f32.mrf.mxu0
      %v4427 = vpop.f32.mrf.mxu0
      %v4428 = vadd.f32 %v254, %v4427
      %v4429 = vpop.f32.mrf.mxu0
      %4430 = vmatprep.mubr.bf16.mxu0 %v3636
      %4431 = vmatmul.mubr.bf16.gmra.mxu0 %v3602
      %v4432 = vpop.f32.mrf.mxu0
      %v4433 = vadd.f32 %v255, %v4432
      %v4434 = vpop.f32.mrf.mxu0
      %v4435 = vpop.f32.mrf.mxu0
      %v4436 = vadd.f32 %v256, %v4435
      %v4437 = vpop.f32.mrf.mxu0
      %4438 = vmatprep.mubr.bf16.mxu0 %v3637
      %4439 = vmatmul.mubr.bf16.gmra.mxu0 %v3603
      %v4440 = vpop.f32.mrf.mxu0
      %v4441 = vadd.f32 %v257, %v4440
      %v4442 = vpop.f32.mrf.mxu0
      %v4443 = vpop.f32.mrf.mxu0
      %v4444 = vadd.f32 %v258, %v4443
      %v4445 = vpop.f32.mrf.mxu0
      %4446 = vmatprep.mubr.bf16.mxu0 %v3638
      %4447 = vmatmul.mubr.bf16.gmra.mxu0 %v3604
      %v4448 = vpop.f32.mrf.mxu0
      %v4449 = vadd.f32 %v259, %v4448
      %v4450 = vpop.f32.mrf.mxu0
      %v4451 = vpop.f32.mrf.mxu0
      %v4452 = vadd.f32 %v260, %v4451
      %v4453 = vpop.f32.mrf.mxu0
      %4454 = vmatprep.mubr.bf16.mxu0 %v3639
      %4455 = vmatmul.mubr.bf16.gmra.mxu0 %v3605
      %v4456 = vpop.f32.mrf.mxu0
      %v4457 = vadd.f32 %v261, %v4456
      %v4458 = vpop.f32.mrf.mxu0
      %v4459 = vpop.f32.mrf.mxu0
      %v4460 = vadd.f32 %v262, %v4459
      %v4461 = vpop.f32.mrf.mxu0
      %4462 = vmatprep.mubr.bf16.mxu0 %v3640
      %4463 = vmatmul.mubr.bf16.gmra.mxu0 %v3606
      %v4464 = vpop.f32.mrf.mxu0
      %v4465 = vadd.f32 %v263, %v4464
      %v4466 = vpop.f32.mrf.mxu0
      %v4467 = vpop.f32.mrf.mxu0
      %v4468 = vadd.f32 %v264, %v4467
      %v4469 = vpop.f32.mrf.mxu0
      %4470 = vmatprep.mubr.bf16.mxu0 %v3641
      %4471 = vmatmul.mubr.bf16.gmra.mxu0 %v3607
      %v4472 = vpop.f32.mrf.mxu0
      %v4473 = vadd.f32 %v265, %v4472
      %v4474 = vpop.f32.mrf.mxu0
      %v4475 = vpop.f32.mrf.mxu0
      %v4476 = vadd.f32 %v266, %v4475
      %v4477 = vpop.f32.mrf.mxu0
      %4478 = vmatprep.mubr.bf16.mxu0 %v3642
      %4479 = vmatmul.mubr.bf16.gmra.mxu0 %v3608
      %v4480 = vpop.f32.mrf.mxu0
      %v4481 = vadd.f32 %v267, %v4480
      %v4482 = vpop.f32.mrf.mxu0
      %v4483 = vpop.f32.mrf.mxu0
      %v4484 = vadd.f32 %v268, %v4483
      %v4485 = vpop.f32.mrf.mxu0
      %4486 = vmatprep.mubr.bf16.mxu0 %v3643
      %4487 = vmatmul.mubr.bf16.gmra.mxu0 %v3609
      %v4488 = vpop.f32.mrf.mxu0
      %v4489 = vadd.f32 %v269, %v4488
      %v4490 = vpop.f32.mrf.mxu0
      %v4491 = vpop.f32.mrf.mxu0
      %v4492 = vadd.f32 %v270, %v4491
      %v4493 = vpop.f32.mrf.mxu0
      %4494 = vmatprep.mubr.bf16.mxu0 %v3644
      %4495 = vmatmul.mubr.bf16.gmra.mxu0 %v3610
      %v4496 = vpop.f32.mrf.mxu0
      %v4497 = vadd.f32 %v271, %v4496
      %v4498 = vpop.f32.mrf.mxu0
      %v4499 = vpop.f32.mrf.mxu0
      %v4500 = vadd.f32 %v272, %v4499
      %v4501 = vpop.f32.mrf.mxu0
      %4502 = vmatprep.mubr.bf16.mxu0 %v3645
      %4503 = vmatmul.mubr.bf16.gmra.mxu0 %v3611
      %v4504 = vpop.f32.mrf.mxu0
      %v4505 = vadd.f32 %v273, %v4504
      %v4506 = vpop.f32.mrf.mxu0
      %v4507 = vpop.f32.mrf.mxu0
      %v4508 = vadd.f32 %v274, %v4507
      %v4509 = vpop.f32.mrf.mxu0
      %4510 = vmatprep.mubr.bf16.mxu0 %v3646
      %4511 = vmatmul.mubr.bf16.gmra.mxu0 %v3612
      %v4512 = vpop.f32.mrf.mxu0
      %v4513 = vadd.f32 %v275, %v4512
      %v4514 = vpop.f32.mrf.mxu0
      %v4515 = vpop.f32.mrf.mxu0
      %v4516 = vadd.f32 %v276, %v4515
      %v4517 = vpop.f32.mrf.mxu0
      %4518 = vmatprep.mubr.bf16.mxu0 %v3647
      %4519 = vmatmul.mubr.bf16.gmra.mxu0 %v3613
      %v4520 = vpop.f32.mrf.mxu0
      %v4521 = vadd.f32 %v277, %v4520
      %v4522 = vpop.f32.mrf.mxu0
      %v4523 = vpop.f32.mrf.mxu0
      %v4524 = vadd.f32 %v278, %v4523
      %v4525 = vpop.f32.mrf.mxu0
      %4526 = vmatprep.mubr.bf16.mxu0 %v3648
      %4527 = vmatmul.mubr.bf16.gmra.mxu0 %v3614
      %v4528 = vpop.f32.mrf.mxu0
      %v4529 = vadd.f32 %v279, %v4528
      %v4530 = vpop.f32.mrf.mxu0
      %v4531 = vpop.f32.mrf.mxu0
      %v4532 = vadd.f32 %v280, %v4531
      %v4533 = vpop.f32.mrf.mxu0
      %4534 = vdwg.mxu0
      %4535 = vmatprep.subr.bf16.mxu0 0
      %4536 = vmatpush1.bf16.msra.mxu0 %v4125
      %4537 = vmatprep.subr.bf16.mxu0 0
      %4538 = vmatpush1.bf16.msra.mxu0 %v4124
      %4539 = vmatprep.subr.bf16.mxu0 0
      %4540 = vmatpush1.bf16.msra.mxu0 %v4123
      %4541 = vmatprep.subr.bf16.mxu0 0
      %4542 = vmatpush1.bf16.msra.mxu0 %v4122
      %4543 = vmatprep.subr.bf16.mxu0 0
      %4544 = vmatpush1.bf16.msra.mxu0 %v4121
      %4545 = vmatprep.subr.bf16.mxu0 0
      %4546 = vmatpush1.bf16.msra.mxu0 %v4120
      %4547 = vmatprep.subr.bf16.mxu0 0
      %4548 = vmatpush1.bf16.msra.mxu0 %v4119
      %4549 = vmatprep.subr.bf16.mxu0 0
      %4550 = vmatpush1.bf16.msra.mxu0 %v4118
      %4551 = vmatprep.subr.bf16.mxu0 0
      %4552 = vmatpush2.bf16.msra.mxu0 %v4133
      %4553 = vmatprep.subr.bf16.mxu0 0
      %4554 = vmatpush2.bf16.msra.mxu0 %v4132
      %4555 = vmatprep.subr.bf16.mxu0 0
      %4556 = vmatpush2.bf16.msra.mxu0 %v4131
      %4557 = vmatprep.subr.bf16.mxu0 0
      %4558 = vmatpush2.bf16.msra.mxu0 %v4130
      %4559 = vmatprep.subr.bf16.mxu0 0
      %4560 = vmatpush2.bf16.msra.mxu0 %v4129
      %4561 = vmatprep.subr.bf16.mxu0 0
      %4562 = vmatpush2.bf16.msra.mxu0 %v4128
      %4563 = vmatprep.subr.bf16.mxu0 0
      %4564 = vmatpush2.bf16.msra.mxu0 %v4127
      %4565 = vmatprep.subr.bf16.mxu0 0
      %4566 = vmatpush2.bf16.msra.mxu0 %v4126
      %4567 = vmatprep.mubr.bf16.mxu0 %v3585
      %4568 = vmatmul.mubr.bf16.gmra.mxu0 %v3780
      %v4569 = vpop.f32.mrf.mxu0
      %v4570 = vadd.f32 %v4281, %v4569
      %v4571 = vpop.f32.mrf.mxu0
      %v4572 = vpop.f32.mrf.mxu0
      %v4573 = vadd.f32 %v4284, %v4572
      %v4574 = vpop.f32.mrf.mxu0
      %4575 = vmatprep.mubr.bf16.mxu0 %v3586
      %4576 = vmatmul.mubr.bf16.gmra.mxu0 %v3781
      %v4577 = vpop.f32.mrf.mxu0
      %v4578 = vadd.f32 %v4289, %v4577
      %v4579 = vpop.f32.mrf.mxu0
      %v4580 = vpop.f32.mrf.mxu0
      %v4581 = vadd.f32 %v4292, %v4580
      %v4582 = vpop.f32.mrf.mxu0
      %4583 = vmatprep.mubr.bf16.mxu0 %v3587
      %4584 = vmatmul.mubr.bf16.gmra.mxu0 %v3782
      %v4585 = vpop.f32.mrf.mxu0
      %v4586 = vadd.f32 %v4297, %v4585
      %v4587 = vpop.f32.mrf.mxu0
      %v4588 = vpop.f32.mrf.mxu0
      %v4589 = vadd.f32 %v4300, %v4588
      %v4590 = vpop.f32.mrf.mxu0
      %4591 = vmatprep.mubr.bf16.mxu0 %v3588
      %4592 = vmatmul.mubr.bf16.gmra.mxu0 %v3783
      %v4593 = vpop.f32.mrf.mxu0
      %v4594 = vadd.f32 %v4305, %v4593
      %v4595 = vpop.f32.mrf.mxu0
      %v4596 = vpop.f32.mrf.mxu0
      %v4597 = vadd.f32 %v4308, %v4596
      %v4598 = vpop.f32.mrf.mxu0
      %4599 = vmatprep.mubr.bf16.mxu0 %v3589
      %4600 = vmatmul.mubr.bf16.gmra.mxu0 %v3784
      %v4601 = vpop.f32.mrf.mxu0
      %v4602 = vadd.f32 %v4313, %v4601
      %v4603 = vpop.f32.mrf.mxu0
      %v4604 = vpop.f32.mrf.mxu0
      %v4605 = vadd.f32 %v4316, %v4604
      %v4606 = vpop.f32.mrf.mxu0
      %4607 = vmatprep.mubr.bf16.mxu0 %v3590
      %4608 = vmatmul.mubr.bf16.gmra.mxu0 %v3785
      %v4609 = vpop.f32.mrf.mxu0
      %v4610 = vadd.f32 %v4321, %v4609
      %v4611 = vpop.f32.mrf.mxu0
      %v4612 = vpop.f32.mrf.mxu0
      %v4613 = vadd.f32 %v4324, %v4612
      %v4614 = vpop.f32.mrf.mxu0
      %4615 = vmatprep.mubr.bf16.mxu0 %v3591
      %4616 = vmatmul.mubr.bf16.gmra.mxu0 %v3786
      %v4617 = vpop.f32.mrf.mxu0
      %v4618 = vadd.f32 %v4329, %v4617
      %v4619 = vpop.f32.mrf.mxu0
      %v4620 = vpop.f32.mrf.mxu0
      %v4621 = vadd.f32 %v4332, %v4620
      %v4622 = vpop.f32.mrf.mxu0
      %4623 = vmatprep.mubr.bf16.mxu0 %v3592
      %4624 = vmatmul.mubr.bf16.gmra.mxu0 %v3787
      %v4625 = vpop.f32.mrf.mxu0
      %v4626 = vadd.f32 %v4337, %v4625
      %v4627 = vpop.f32.mrf.mxu0
      %v4628 = vpop.f32.mrf.mxu0
      %v4629 = vadd.f32 %v4340, %v4628
      %v4630 = vpop.f32.mrf.mxu0
      %4631 = vmatprep.mubr.bf16.mxu0 %v3593
      %4632 = vmatmul.mubr.bf16.gmra.mxu0 %v3788
      %v4633 = vpop.f32.mrf.mxu0
      %v4634 = vadd.f32 %v4345, %v4633
      %v4635 = vpop.f32.mrf.mxu0
      %v4636 = vpop.f32.mrf.mxu0
      %v4637 = vadd.f32 %v4348, %v4636
      %v4638 = vpop.f32.mrf.mxu0
      %4639 = vmatprep.mubr.bf16.mxu0 %v3594
      %4640 = vmatmul.mubr.bf16.gmra.mxu0 %v3789
      %v4641 = vpop.f32.mrf.mxu0
      %v4642 = vadd.f32 %v4353, %v4641
      %v4643 = vpop.f32.mrf.mxu0
      %v4644 = vpop.f32.mrf.mxu0
      %v4645 = vadd.f32 %v4356, %v4644
      %v4646 = vpop.f32.mrf.mxu0
      %4647 = vmatprep.mubr.bf16.mxu0 %v3595
      %4648 = vmatmul.mubr.bf16.gmra.mxu0 %v3790
      %v4649 = vpop.f32.mrf.mxu0
      %v4650 = vadd.f32 %v4361, %v4649
      %v4651 = vpop.f32.mrf.mxu0
      %v4652 = vpop.f32.mrf.mxu0
      %v4653 = vadd.f32 %v4364, %v4652
      %v4654 = vpop.f32.mrf.mxu0
      %4655 = vmatprep.mubr.bf16.mxu0 %v3596
      %4656 = vmatmul.mubr.bf16.gmra.mxu0 %v3791
      %v4657 = vpop.f32.mrf.mxu0
      %v4658 = vadd.f32 %v4369, %v4657
      %v4659 = vpop.f32.mrf.mxu0
      %v4660 = vpop.f32.mrf.mxu0
      %v4661 = vadd.f32 %v4372, %v4660
      %v4662 = vpop.f32.mrf.mxu0
      %4663 = vmatprep.mubr.bf16.mxu0 %v3597
      %4664 = vmatmul.mubr.bf16.gmra.mxu0 %v3792
      %v4665 = vpop.f32.mrf.mxu0
      %v4666 = vadd.f32 %v4377, %v4665
      %v4667 = vpop.f32.mrf.mxu0
      %v4668 = vpop.f32.mrf.mxu0
      %v4669 = vadd.f32 %v4380, %v4668
      %v4670 = vpop.f32.mrf.mxu0
      %4671 = vmatprep.mubr.bf16.mxu0 %v3598
      %4672 = vmatmul.mubr.bf16.gmra.mxu0 %v3793
      %v4673 = vpop.f32.mrf.mxu0
      %v4674 = vadd.f32 %v4385, %v4673
      %v4675 = vpop.f32.mrf.mxu0
      %v4676 = vpop.f32.mrf.mxu0
      %v4677 = vadd.f32 %v4388, %v4676
      %v4678 = vpop.f32.mrf.mxu0
      %4679 = vmatprep.mubr.bf16.mxu0 %v3599
      %4680 = vmatmul.mubr.bf16.gmra.mxu0 %v3794
      %v4681 = vpop.f32.mrf.mxu0
      %v4682 = vadd.f32 %v4393, %v4681
      %v4683 = vpop.f32.mrf.mxu0
      %v4684 = vpop.f32.mrf.mxu0
      %v4685 = vadd.f32 %v4396, %v4684
      %v4686 = vpop.f32.mrf.mxu0
      %4687 = vmatprep.mubr.bf16.mxu0 %v3600
      %4688 = vmatmul.mubr.bf16.gmra.mxu0 %v3795
      %v4689 = vpop.f32.mrf.mxu0
      %v4690 = vadd.f32 %v4401, %v4689
      %v4691 = vpop.f32.mrf.mxu0
      %v4692 = vpop.f32.mrf.mxu0
      %v4693 = vadd.f32 %v4404, %v4692
      %v4694 = vpop.f32.mrf.mxu0
      %4695 = vmatprep.mubr.bf16.mxu0 %v3601
      %4696 = vmatmul.mubr.bf16.gmra.mxu0 %v3796
      %v4697 = vpop.f32.mrf.mxu0
      %v4698 = vadd.f32 %v4409, %v4697
      %v4699 = vpop.f32.mrf.mxu0
      %v4700 = vpop.f32.mrf.mxu0
      %v4701 = vadd.f32 %v4412, %v4700
      %v4702 = vpop.f32.mrf.mxu0
      %4703 = vmatprep.mubr.bf16.mxu0 %v3602
      %4704 = vmatmul.mubr.bf16.gmra.mxu0 %v3797
      %v4705 = vpop.f32.mrf.mxu0
      %v4706 = vadd.f32 %v4417, %v4705
      %v4707 = vpop.f32.mrf.mxu0
      %v4708 = vpop.f32.mrf.mxu0
      %v4709 = vadd.f32 %v4420, %v4708
      %v4710 = vpop.f32.mrf.mxu0
      %4711 = vmatprep.mubr.bf16.mxu0 %v3603
      %4712 = vmatmul.mubr.bf16.gmra.mxu0 %v3798
      %v4713 = vpop.f32.mrf.mxu0
      %v4714 = vadd.f32 %v4425, %v4713
      %v4715 = vpop.f32.mrf.mxu0
      %v4716 = vpop.f32.mrf.mxu0
      %v4717 = vadd.f32 %v4428, %v4716
      %v4718 = vpop.f32.mrf.mxu0
      %4719 = vmatprep.mubr.bf16.mxu0 %v3604
      %4720 = vmatmul.mubr.bf16.gmra.mxu0 %v3799
      %v4721 = vpop.f32.mrf.mxu0
      %v4722 = vadd.f32 %v4433, %v4721
      %v4723 = vpop.f32.mrf.mxu0
      %v4724 = vpop.f32.mrf.mxu0
      %v4725 = vadd.f32 %v4436, %v4724
      %v4726 = vpop.f32.mrf.mxu0
      %4727 = vmatprep.mubr.bf16.mxu0 %v3605
      %4728 = vmatmul.mubr.bf16.gmra.mxu0 %v3800
      %v4729 = vpop.f32.mrf.mxu0
      %v4730 = vadd.f32 %v4441, %v4729
      %v4731 = vpop.f32.mrf.mxu0
      %v4732 = vpop.f32.mrf.mxu0
      %v4733 = vadd.f32 %v4444, %v4732
      %v4734 = vpop.f32.mrf.mxu0
      %4735 = vmatprep.mubr.bf16.mxu0 %v3606
      %4736 = vmatmul.mubr.bf16.gmra.mxu0 %v3801
      %v4737 = vpop.f32.mrf.mxu0
      %v4738 = vadd.f32 %v4449, %v4737
      %v4739 = vpop.f32.mrf.mxu0
      %v4740 = vpop.f32.mrf.mxu0
      %v4741 = vadd.f32 %v4452, %v4740
      %v4742 = vpop.f32.mrf.mxu0
      %4743 = vmatprep.mubr.bf16.mxu0 %v3607
      %4744 = vmatmul.mubr.bf16.gmra.mxu0 %v3802
      %v4745 = vpop.f32.mrf.mxu0
      %v4746 = vadd.f32 %v4457, %v4745
      %v4747 = vpop.f32.mrf.mxu0
      %v4748 = vpop.f32.mrf.mxu0
      %v4749 = vadd.f32 %v4460, %v4748
      %v4750 = vpop.f32.mrf.mxu0
      %4751 = vmatprep.mubr.bf16.mxu0 %v3608
      %4752 = vmatmul.mubr.bf16.gmra.mxu0 %v3803
      %v4753 = vpop.f32.mrf.mxu0
      %v4754 = vadd.f32 %v4465, %v4753
      %v4755 = vpop.f32.mrf.mxu0
      %v4756 = vpop.f32.mrf.mxu0
      %v4757 = vadd.f32 %v4468, %v4756
      %v4758 = vpop.f32.mrf.mxu0
      %4759 = vmatprep.mubr.bf16.mxu0 %v3609
      %4760 = vmatmul.mubr.bf16.gmra.mxu0 %v3804
      %v4761 = vpop.f32.mrf.mxu0
      %v4762 = vadd.f32 %v4473, %v4761
      %v4763 = vpop.f32.mrf.mxu0
      %v4764 = vpop.f32.mrf.mxu0
      %v4765 = vadd.f32 %v4476, %v4764
      %v4766 = vpop.f32.mrf.mxu0
      %4767 = vmatprep.mubr.bf16.mxu0 %v3610
      %4768 = vmatmul.mubr.bf16.gmra.mxu0 %v3805
      %v4769 = vpop.f32.mrf.mxu0
      %v4770 = vadd.f32 %v4481, %v4769
      %v4771 = vpop.f32.mrf.mxu0
      %v4772 = vpop.f32.mrf.mxu0
      %v4773 = vadd.f32 %v4484, %v4772
      %v4774 = vpop.f32.mrf.mxu0
      %4775 = vmatprep.mubr.bf16.mxu0 %v3611
      %4776 = vmatmul.mubr.bf16.gmra.mxu0 %v3806
      %v4777 = vpop.f32.mrf.mxu0
      %v4778 = vadd.f32 %v4489, %v4777
      %v4779 = vpop.f32.mrf.mxu0
      %v4780 = vpop.f32.mrf.mxu0
      %v4781 = vadd.f32 %v4492, %v4780
      %v4782 = vpop.f32.mrf.mxu0
      %4783 = vmatprep.mubr.bf16.mxu0 %v3612
      %4784 = vmatmul.mubr.bf16.gmra.mxu0 %v3807
      %v4785 = vpop.f32.mrf.mxu0
      %v4786 = vadd.f32 %v4497, %v4785
      %v4787 = vpop.f32.mrf.mxu0
      %v4788 = vpop.f32.mrf.mxu0
      %v4789 = vadd.f32 %v4500, %v4788
      %v4790 = vpop.f32.mrf.mxu0
      %4791 = vmatprep.mubr.bf16.mxu0 %v3613
      %4792 = vmatmul.mubr.bf16.gmra.mxu0 %v3808
      %v4793 = vpop.f32.mrf.mxu0
      %v4794 = vadd.f32 %v4505, %v4793
      %v4795 = vpop.f32.mrf.mxu0
      %v4796 = vpop.f32.mrf.mxu0
      %v4797 = vadd.f32 %v4508, %v4796
      %v4798 = vpop.f32.mrf.mxu0
      %4799 = vmatprep.mubr.bf16.mxu0 %v3614
      %4800 = vmatmul.mubr.bf16.gmra.mxu0 %v3809
      %v4801 = vpop.f32.mrf.mxu0
      %v4802 = vadd.f32 %v4513, %v4801
      %v4803 = vpop.f32.mrf.mxu0
      %v4804 = vpop.f32.mrf.mxu0
      %v4805 = vadd.f32 %v4516, %v4804
      %v4806 = vpop.f32.mrf.mxu0
      %4807 = vmatprep.mubr.bf16.mxu0 %v3615
      %4808 = vmatmul.mubr.bf16.gmra.mxu0 %v3810
      %v4809 = vpop.f32.mrf.mxu0
      %v4810 = vadd.f32 %v4521, %v4809
      %v4811 = vpop.f32.mrf.mxu0
      %v4812 = vpop.f32.mrf.mxu0
      %v4813 = vadd.f32 %v4524, %v4812
      %v4814 = vpop.f32.mrf.mxu0
      %4815 = vmatprep.mubr.bf16.mxu0 %v3616
      %4816 = vmatmul.mubr.bf16.gmra.mxu0 %v3811
      %v4817 = vpop.f32.mrf.mxu0
      %v4818 = vadd.f32 %v4529, %v4817
      %v4819 = vpop.f32.mrf.mxu0
      %v4820 = vpop.f32.mrf.mxu0
      %v4821 = vadd.f32 %v4532, %v4820
      %v4822 = vpop.f32.mrf.mxu0
      %4823 = vdwg.mxu0
      %4824 = vmatprep.subr.bf16.mxu0 0
      %4825 = vmatpush1.bf16.msra.mxu0 %v4141
      %4826 = vmatprep.subr.bf16.mxu0 0
      %4827 = vmatpush1.bf16.msra.mxu0 %v4140
      %4828 = vmatprep.subr.bf16.mxu0 0
      %4829 = vmatpush1.bf16.msra.mxu0 %v4139
      %4830 = vmatprep.subr.bf16.mxu0 0
      %4831 = vmatpush1.bf16.msra.mxu0 %v4138
      %4832 = vmatprep.subr.bf16.mxu0 0
      %4833 = vmatpush1.bf16.msra.mxu0 %v4137
      %4834 = vmatprep.subr.bf16.mxu0 0
      %4835 = vmatpush1.bf16.msra.mxu0 %v4136
      %4836 = vmatprep.subr.bf16.mxu0 0
      %4837 = vmatpush1.bf16.msra.mxu0 %v4135
      %4838 = vmatprep.subr.bf16.mxu0 0
      %4839 = vmatpush1.bf16.msra.mxu0 %v4134
      %4840 = vmatprep.subr.bf16.mxu0 0
      %4841 = vmatpush2.bf16.msra.mxu0 %v4149
      %4842 = vmatprep.subr.bf16.mxu0 0
      %4843 = vmatpush2.bf16.msra.mxu0 %v4148
      %4844 = vmatprep.subr.bf16.mxu0 0
      %4845 = vmatpush2.bf16.msra.mxu0 %v4147
      %4846 = vmatprep.subr.bf16.mxu0 0
      %4847 = vmatpush2.bf16.msra.mxu0 %v4146
      %4848 = vmatprep.subr.bf16.mxu0 0
      %4849 = vmatpush2.bf16.msra.mxu0 %v4145
      %4850 = vmatprep.subr.bf16.mxu0 0
      %4851 = vmatpush2.bf16.msra.mxu0 %v4144
      %4852 = vmatprep.subr.bf16.mxu0 0
      %4853 = vmatpush2.bf16.msra.mxu0 %v4143
      %4854 = vmatprep.subr.bf16.mxu0 0
      %4855 = vmatpush2.bf16.msra.mxu0 %v4142
      %4856 = vmatprep.mubr.bf16.mxu0 %v3782
      %4857 = vmatmul.mubr.bf16.gmra.mxu0 %v3619
      %v4858 = vpop.f32.mrf.mxu0
      %v4859 = vadd.f32 %v4570, %v4858
      %v4860 = vpop.f32.mrf.mxu0
      %v4861 = vpop.f32.mrf.mxu0
      %v4862 = vadd.f32 %v4573, %v4861
      %v4863 = vpop.f32.mrf.mxu0
      %4864 = vmatprep.mubr.bf16.mxu0 %v3783
      %4865 = vmatmul.mubr.bf16.gmra.mxu0 %v3620
      %v4866 = vpop.f32.mrf.mxu0
      %v4867 = vadd.f32 %v4578, %v4866
      %v4868 = vpop.f32.mrf.mxu0
      %v4869 = vpop.f32.mrf.mxu0
      %v4870 = vadd.f32 %v4581, %v4869
      %v4871 = vpop.f32.mrf.mxu0
      %4872 = vmatprep.mubr.bf16.mxu0 %v3784
      %4873 = vmatmul.mubr.bf16.gmra.mxu0 %v3621
      %v4874 = vpop.f32.mrf.mxu0
      %v4875 = vadd.f32 %v4586, %v4874
      %v4876 = vpop.f32.mrf.mxu0
      %v4877 = vpop.f32.mrf.mxu0
      %v4878 = vadd.f32 %v4589, %v4877
      %v4879 = vpop.f32.mrf.mxu0
      %4880 = vmatprep.mubr.bf16.mxu0 %v3785
      %4881 = vmatmul.mubr.bf16.gmra.mxu0 %v3622
      %v4882 = vpop.f32.mrf.mxu0
      %v4883 = vadd.f32 %v4594, %v4882
      %v4884 = vpop.f32.mrf.mxu0
      %v4885 = vpop.f32.mrf.mxu0
      %v4886 = vadd.f32 %v4597, %v4885
      %v4887 = vpop.f32.mrf.mxu0
      %4888 = vmatprep.mubr.bf16.mxu0 %v3786
      %4889 = vmatmul.mubr.bf16.gmra.mxu0 %v3623
      %v4890 = vpop.f32.mrf.mxu0
      %v4891 = vadd.f32 %v4602, %v4890
      %v4892 = vpop.f32.mrf.mxu0
      %v4893 = vpop.f32.mrf.mxu0
      %v4894 = vadd.f32 %v4605, %v4893
      %v4895 = vpop.f32.mrf.mxu0
      %4896 = vmatprep.mubr.bf16.mxu0 %v3787
      %4897 = vmatmul.mubr.bf16.gmra.mxu0 %v3624
      %v4898 = vpop.f32.mrf.mxu0
      %v4899 = vadd.f32 %v4610, %v4898
      %v4900 = vpop.f32.mrf.mxu0
      %v4901 = vpop.f32.mrf.mxu0
      %v4902 = vadd.f32 %v4613, %v4901
      %v4903 = vpop.f32.mrf.mxu0
      %4904 = vmatprep.mubr.bf16.mxu0 %v3788
      %4905 = vmatmul.mubr.bf16.gmra.mxu0 %v3625
      %v4906 = vpop.f32.mrf.mxu0
      %v4907 = vadd.f32 %v4618, %v4906
      %v4908 = vpop.f32.mrf.mxu0
      %v4909 = vpop.f32.mrf.mxu0
      %v4910 = vadd.f32 %v4621, %v4909
      %v4911 = vpop.f32.mrf.mxu0
      %4912 = vmatprep.mubr.bf16.mxu0 %v3789
      %4913 = vmatmul.mubr.bf16.gmra.mxu0 %v3626
      %v4914 = vpop.f32.mrf.mxu0
      %v4915 = vadd.f32 %v4626, %v4914
      %v4916 = vpop.f32.mrf.mxu0
      %v4917 = vpop.f32.mrf.mxu0
      %v4918 = vadd.f32 %v4629, %v4917
      %v4919 = vpop.f32.mrf.mxu0
      %4920 = vmatprep.mubr.bf16.mxu0 %v3790
      %4921 = vmatmul.mubr.bf16.gmra.mxu0 %v3627
      %v4922 = vpop.f32.mrf.mxu0
      %v4923 = vadd.f32 %v4634, %v4922
      %v4924 = vpop.f32.mrf.mxu0
      %v4925 = vpop.f32.mrf.mxu0
      %v4926 = vadd.f32 %v4637, %v4925
      %v4927 = vpop.f32.mrf.mxu0
      %4928 = vmatprep.mubr.bf16.mxu0 %v3791
      %4929 = vmatmul.mubr.bf16.gmra.mxu0 %v3628
      %v4930 = vpop.f32.mrf.mxu0
      %v4931 = vadd.f32 %v4642, %v4930
      %v4932 = vpop.f32.mrf.mxu0
      %v4933 = vpop.f32.mrf.mxu0
      %v4934 = vadd.f32 %v4645, %v4933
      %v4935 = vpop.f32.mrf.mxu0
      %4936 = vmatprep.mubr.bf16.mxu0 %v3792
      %4937 = vmatmul.mubr.bf16.gmra.mxu0 %v3629
      %v4938 = vpop.f32.mrf.mxu0
      %v4939 = vadd.f32 %v4650, %v4938
      %v4940 = vpop.f32.mrf.mxu0
      %v4941 = vpop.f32.mrf.mxu0
      %v4942 = vadd.f32 %v4653, %v4941
      %v4943 = vpop.f32.mrf.mxu0
      %4944 = vmatprep.mubr.bf16.mxu0 %v3793
      %4945 = vmatmul.mubr.bf16.gmra.mxu0 %v3630
      %v4946 = vpop.f32.mrf.mxu0
      %v4947 = vadd.f32 %v4658, %v4946
      %v4948 = vpop.f32.mrf.mxu0
      %v4949 = vpop.f32.mrf.mxu0
      %v4950 = vadd.f32 %v4661, %v4949
      %v4951 = vpop.f32.mrf.mxu0
      %4952 = vmatprep.mubr.bf16.mxu0 %v3794
      %4953 = vmatmul.mubr.bf16.gmra.mxu0 %v3631
      %v4954 = vpop.f32.mrf.mxu0
      %v4955 = vadd.f32 %v4666, %v4954
      %v4956 = vpop.f32.mrf.mxu0
      %v4957 = vpop.f32.mrf.mxu0
      %v4958 = vadd.f32 %v4669, %v4957
      %v4959 = vpop.f32.mrf.mxu0
      %4960 = vmatprep.mubr.bf16.mxu0 %v3795
      %4961 = vmatmul.mubr.bf16.gmra.mxu0 %v3632
      %v4962 = vpop.f32.mrf.mxu0
      %v4963 = vadd.f32 %v4674, %v4962
      %v4964 = vpop.f32.mrf.mxu0
      %v4965 = vpop.f32.mrf.mxu0
      %v4966 = vadd.f32 %v4677, %v4965
      %v4967 = vpop.f32.mrf.mxu0
      %4968 = vmatprep.mubr.bf16.mxu0 %v3796
      %4969 = vmatmul.mubr.bf16.gmra.mxu0 %v3633
      %v4970 = vpop.f32.mrf.mxu0
      %v4971 = vadd.f32 %v4682, %v4970
      %v4972 = vpop.f32.mrf.mxu0
      %v4973 = vpop.f32.mrf.mxu0
      %v4974 = vadd.f32 %v4685, %v4973
      %v4975 = vpop.f32.mrf.mxu0
      %4976 = vmatprep.mubr.bf16.mxu0 %v3797
      %4977 = vmatmul.mubr.bf16.gmra.mxu0 %v3634
      %v4978 = vpop.f32.mrf.mxu0
      %v4979 = vadd.f32 %v4690, %v4978
      %v4980 = vpop.f32.mrf.mxu0
      %v4981 = vpop.f32.mrf.mxu0
      %v4982 = vadd.f32 %v4693, %v4981
      %v4983 = vpop.f32.mrf.mxu0
      %4984 = vmatprep.mubr.bf16.mxu0 %v3798
      %4985 = vmatmul.mubr.bf16.gmra.mxu0 %v3635
      %v4986 = vpop.f32.mrf.mxu0
      %v4987 = vadd.f32 %v4698, %v4986
      %v4988 = vpop.f32.mrf.mxu0
      %v4989 = vpop.f32.mrf.mxu0
      %v4990 = vadd.f32 %v4701, %v4989
      %v4991 = vpop.f32.mrf.mxu0
      %4992 = vmatprep.mubr.bf16.mxu0 %v3799
      %4993 = vmatmul.mubr.bf16.gmra.mxu0 %v3636
      %v4994 = vpop.f32.mrf.mxu0
      %v4995 = vadd.f32 %v4706, %v4994
      %v4996 = vpop.f32.mrf.mxu0
      %v4997 = vpop.f32.mrf.mxu0
      %v4998 = vadd.f32 %v4709, %v4997
      %v4999 = vpop.f32.mrf.mxu0
      %5000 = vmatprep.mubr.bf16.mxu0 %v3800
      %5001 = vmatmul.mubr.bf16.gmra.mxu0 %v3637
      %v5002 = vpop.f32.mrf.mxu0
      %v5003 = vadd.f32 %v4714, %v5002
      %v5004 = vpop.f32.mrf.mxu0
      %v5005 = vpop.f32.mrf.mxu0
      %v5006 = vadd.f32 %v4717, %v5005
      %v5007 = vpop.f32.mrf.mxu0
      %5008 = vmatprep.mubr.bf16.mxu0 %v3801
      %5009 = vmatmul.mubr.bf16.gmra.mxu0 %v3638
      %v5010 = vpop.f32.mrf.mxu0
      %v5011 = vadd.f32 %v4722, %v5010
      %v5012 = vpop.f32.mrf.mxu0
      %v5013 = vpop.f32.mrf.mxu0
      %v5014 = vadd.f32 %v4725, %v5013
      %v5015 = vpop.f32.mrf.mxu0
      %5016 = vmatprep.mubr.bf16.mxu0 %v3802
      %5017 = vmatmul.mubr.bf16.gmra.mxu0 %v3639
      %v5018 = vpop.f32.mrf.mxu0
      %v5019 = vadd.f32 %v4730, %v5018
      %v5020 = vpop.f32.mrf.mxu0
      %v5021 = vpop.f32.mrf.mxu0
      %v5022 = vadd.f32 %v4733, %v5021
      %v5023 = vpop.f32.mrf.mxu0
      %5024 = vmatprep.mubr.bf16.mxu0 %v3803
      %5025 = vmatmul.mubr.bf16.gmra.mxu0 %v3640
      %v5026 = vpop.f32.mrf.mxu0
      %v5027 = vadd.f32 %v4738, %v5026
      %v5028 = vpop.f32.mrf.mxu0
      %v5029 = vpop.f32.mrf.mxu0
      %v5030 = vadd.f32 %v4741, %v5029
      %v5031 = vpop.f32.mrf.mxu0
      %5032 = vmatprep.mubr.bf16.mxu0 %v3804
      %5033 = vmatmul.mubr.bf16.gmra.mxu0 %v3641
      %v5034 = vpop.f32.mrf.mxu0
      %v5035 = vadd.f32 %v4746, %v5034
      %v5036 = vpop.f32.mrf.mxu0
      %v5037 = vpop.f32.mrf.mxu0
      %v5038 = vadd.f32 %v4749, %v5037
      %v5039 = vpop.f32.mrf.mxu0
      %5040 = vmatprep.mubr.bf16.mxu0 %v3805
      %5041 = vmatmul.mubr.bf16.gmra.mxu0 %v3642
      %v5042 = vpop.f32.mrf.mxu0
      %v5043 = vadd.f32 %v4754, %v5042
      %v5044 = vpop.f32.mrf.mxu0
      %v5045 = vpop.f32.mrf.mxu0
      %v5046 = vadd.f32 %v4757, %v5045
      %v5047 = vpop.f32.mrf.mxu0
      %5048 = vmatprep.mubr.bf16.mxu0 %v3806
      %5049 = vmatmul.mubr.bf16.gmra.mxu0 %v3643
      %v5050 = vpop.f32.mrf.mxu0
      %v5051 = vadd.f32 %v4762, %v5050
      %v5052 = vpop.f32.mrf.mxu0
      %v5053 = vpop.f32.mrf.mxu0
      %v5054 = vadd.f32 %v4765, %v5053
      %v5055 = vpop.f32.mrf.mxu0
      %5056 = vmatprep.mubr.bf16.mxu0 %v3807
      %5057 = vmatmul.mubr.bf16.gmra.mxu0 %v3644
      %v5058 = vpop.f32.mrf.mxu0
      %v5059 = vadd.f32 %v4770, %v5058
      %v5060 = vpop.f32.mrf.mxu0
      %v5061 = vpop.f32.mrf.mxu0
      %v5062 = vadd.f32 %v4773, %v5061
      %v5063 = vpop.f32.mrf.mxu0
      %5064 = vmatprep.mubr.bf16.mxu0 %v3808
      %5065 = vmatmul.mubr.bf16.gmra.mxu0 %v3645
      %v5066 = vpop.f32.mrf.mxu0
      %v5067 = vadd.f32 %v4778, %v5066
      %v5068 = vpop.f32.mrf.mxu0
      %v5069 = vpop.f32.mrf.mxu0
      %v5070 = vadd.f32 %v4781, %v5069
      %v5071 = vpop.f32.mrf.mxu0
      %5072 = vmatprep.mubr.bf16.mxu0 %v3809
      %5073 = vmatmul.mubr.bf16.gmra.mxu0 %v3646
      %v5074 = vpop.f32.mrf.mxu0
      %v5075 = vadd.f32 %v4786, %v5074
      %v5076 = vpop.f32.mrf.mxu0
      %v5077 = vpop.f32.mrf.mxu0
      %v5078 = vadd.f32 %v4789, %v5077
      %v5079 = vpop.f32.mrf.mxu0
      %5080 = vmatprep.mubr.bf16.mxu0 %v3810
      %5081 = vmatmul.mubr.bf16.gmra.mxu0 %v3647
      %v5082 = vpop.f32.mrf.mxu0
      %v5083 = vadd.f32 %v4794, %v5082
      %v5084 = vpop.f32.mrf.mxu0
      %v5085 = vpop.f32.mrf.mxu0
      %v5086 = vadd.f32 %v4797, %v5085
      %v5087 = vpop.f32.mrf.mxu0
      %5088 = vmatprep.mubr.bf16.mxu0 %v3811
      %5089 = vmatmul.mubr.bf16.gmra.mxu0 %v3648
      %v5090 = vpop.f32.mrf.mxu0
      %v5091 = vadd.f32 %v4802, %v5090
      %v5092 = vpop.f32.mrf.mxu0
      %v5093 = vpop.f32.mrf.mxu0
      %v5094 = vadd.f32 %v4805, %v5093
      %v5095 = vpop.f32.mrf.mxu0
      %5096 = vmatprep.mubr.bf16.mxu0 %v3812
      %5097 = vmatmul.mubr.bf16.gmra.mxu0 %v3649
      %v5098 = vpop.f32.mrf.mxu0
      %v5099 = vadd.f32 %v4810, %v5098
      %v5100 = vpop.f32.mrf.mxu0
      %v5101 = vpop.f32.mrf.mxu0
      %v5102 = vadd.f32 %v4813, %v5101
      %v5103 = vpop.f32.mrf.mxu0
      %5104 = vmatprep.mubr.bf16.mxu0 %v3813
      %5105 = vmatmul.mubr.bf16.gmra.mxu0 %v3650
      %v5106 = vpop.f32.mrf.mxu0
      %v5107 = vadd.f32 %v4818, %v5106
      %v5108 = vpop.f32.mrf.mxu0
      %v5109 = vpop.f32.mrf.mxu0
      %v5110 = vadd.f32 %v4821, %v5109
      %v5111 = vpop.f32.mrf.mxu0
      %5112 = vdwg.mxu0
      %5113 = vmatprep.subr.bf16.mxu0 0
      %5114 = vmatpush1.bf16.msra.mxu0 %v4157
      %5115 = vmatprep.subr.bf16.mxu0 0
      %5116 = vmatpush1.bf16.msra.mxu0 %v4156
      %5117 = vmatprep.subr.bf16.mxu0 0
      %5118 = vmatpush1.bf16.msra.mxu0 %v4155
      %5119 = vmatprep.subr.bf16.mxu0 0
      %5120 = vmatpush1.bf16.msra.mxu0 %v4154
      %5121 = vmatprep.subr.bf16.mxu0 0
      %5122 = vmatpush1.bf16.msra.mxu0 %v4153
      %5123 = vmatprep.subr.bf16.mxu0 0
      %5124 = vmatpush1.bf16.msra.mxu0 %v4152
      %5125 = vmatprep.subr.bf16.mxu0 0
      %5126 = vmatpush1.bf16.msra.mxu0 %v4151
      %5127 = vmatprep.subr.bf16.mxu0 0
      %5128 = vmatpush1.bf16.msra.mxu0 %v4150
      %5129 = vmatprep.subr.bf16.mxu0 0
      %5130 = vmatpush2.bf16.msra.mxu0 %v4165
      %5131 = vmatprep.subr.bf16.mxu0 0
      %5132 = vmatpush2.bf16.msra.mxu0 %v4164
      %5133 = vmatprep.subr.bf16.mxu0 0
      %5134 = vmatpush2.bf16.msra.mxu0 %v4163
      %5135 = vmatprep.subr.bf16.mxu0 0
      %5136 = vmatpush2.bf16.msra.mxu0 %v4162
      %5137 = vmatprep.subr.bf16.mxu0 0
      %5138 = vmatpush2.bf16.msra.mxu0 %v4161
      %5139 = vmatprep.subr.bf16.mxu0 0
      %5140 = vmatpush2.bf16.msra.mxu0 %v4160
      %5141 = vmatprep.subr.bf16.mxu0 0
      %5142 = vmatpush2.bf16.msra.mxu0 %v4159
      %5143 = vmatprep.subr.bf16.mxu0 0
      %5144 = vmatpush2.bf16.msra.mxu0 %v4158
      %5145 = vmatprep.mubr.bf16.mxu0 %v3621
      %5146 = vmatmul.mubr.bf16.gmra.mxu0 %v3587
      %v5147 = vpop.f32.mrf.mxu0
      %v5148 = vadd.f32 %v4859, %v5147
      %v5149 = vpop.f32.mrf.mxu0
      %v5150 = vpop.f32.mrf.mxu0
      %v5151 = vadd.f32 %v4862, %v5150
      %v5152 = vpop.f32.mrf.mxu0
      %5153 = vmatprep.mubr.bf16.mxu0 %v3622
      %5154 = vmatmul.mubr.bf16.gmra.mxu0 %v3588
      %v5155 = vpop.f32.mrf.mxu0
      %v5156 = vadd.f32 %v4867, %v5155
      %v5157 = vpop.f32.mrf.mxu0
      %v5158 = vpop.f32.mrf.mxu0
      %v5159 = vadd.f32 %v4870, %v5158
      %v5160 = vpop.f32.mrf.mxu0
      %5161 = vmatprep.mubr.bf16.mxu0 %v3623
      %5162 = vmatmul.mubr.bf16.gmra.mxu0 %v3589
      %v5163 = vpop.f32.mrf.mxu0
      %v5164 = vadd.f32 %v4875, %v5163
      %v5165 = vpop.f32.mrf.mxu0
      %v5166 = vpop.f32.mrf.mxu0
      %v5167 = vadd.f32 %v4878, %v5166
      %v5168 = vpop.f32.mrf.mxu0
      %5169 = vmatprep.mubr.bf16.mxu0 %v3624
      %5170 = vmatmul.mubr.bf16.gmra.mxu0 %v3590
      %v5171 = vpop.f32.mrf.mxu0
      %v5172 = vadd.f32 %v4883, %v5171
      %v5173 = vpop.f32.mrf.mxu0
      %v5174 = vpop.f32.mrf.mxu0
      %v5175 = vadd.f32 %v4886, %v5174
      %v5176 = vpop.f32.mrf.mxu0
      %5177 = vmatprep.mubr.bf16.mxu0 %v3625
      %5178 = vmatmul.mubr.bf16.gmra.mxu0 %v3591
      %v5179 = vpop.f32.mrf.mxu0
      %v5180 = vadd.f32 %v4891, %v5179
      %v5181 = vpop.f32.mrf.mxu0
      %v5182 = vpop.f32.mrf.mxu0
      %v5183 = vadd.f32 %v4894, %v5182
      %v5184 = vpop.f32.mrf.mxu0
      %5185 = vmatprep.mubr.bf16.mxu0 %v3626
      %5186 = vmatmul.mubr.bf16.gmra.mxu0 %v3592
      %v5187 = vpop.f32.mrf.mxu0
      %v5188 = vadd.f32 %v4899, %v5187
      %v5189 = vpop.f32.mrf.mxu0
      %v5190 = vpop.f32.mrf.mxu0
      %v5191 = vadd.f32 %v4902, %v5190
      %v5192 = vpop.f32.mrf.mxu0
      %5193 = vmatprep.mubr.bf16.mxu0 %v3627
      %5194 = vmatmul.mubr.bf16.gmra.mxu0 %v3593
      %v5195 = vpop.f32.mrf.mxu0
      %v5196 = vadd.f32 %v4907, %v5195
      %v5197 = vpop.f32.mrf.mxu0
      %v5198 = vpop.f32.mrf.mxu0
      %v5199 = vadd.f32 %v4910, %v5198
      %v5200 = vpop.f32.mrf.mxu0
      %5201 = vmatprep.mubr.bf16.mxu0 %v3628
      %5202 = vmatmul.mubr.bf16.gmra.mxu0 %v3594
      %v5203 = vpop.f32.mrf.mxu0
      %v5204 = vadd.f32 %v4915, %v5203
      %v5205 = vpop.f32.mrf.mxu0
      %v5206 = vpop.f32.mrf.mxu0
      %v5207 = vadd.f32 %v4918, %v5206
      %v5208 = vpop.f32.mrf.mxu0
      %5209 = vmatprep.mubr.bf16.mxu0 %v3629
      %5210 = vmatmul.mubr.bf16.gmra.mxu0 %v3595
      %v5211 = vpop.f32.mrf.mxu0
      %v5212 = vadd.f32 %v4923, %v5211
      %v5213 = vpop.f32.mrf.mxu0
      %v5214 = vpop.f32.mrf.mxu0
      %v5215 = vadd.f32 %v4926, %v5214
      %v5216 = vpop.f32.mrf.mxu0
      %5217 = vmatprep.mubr.bf16.mxu0 %v3630
      %5218 = vmatmul.mubr.bf16.gmra.mxu0 %v3596
      %v5219 = vpop.f32.mrf.mxu0
      %v5220 = vadd.f32 %v4931, %v5219
      %v5221 = vpop.f32.mrf.mxu0
      %v5222 = vpop.f32.mrf.mxu0
      %v5223 = vadd.f32 %v4934, %v5222
      %v5224 = vpop.f32.mrf.mxu0
      %5225 = vmatprep.mubr.bf16.mxu0 %v3631
      %5226 = vmatmul.mubr.bf16.gmra.mxu0 %v3597
      %v5227 = vpop.f32.mrf.mxu0
      %v5228 = vadd.f32 %v4939, %v5227
      %v5229 = vpop.f32.mrf.mxu0
      %v5230 = vpop.f32.mrf.mxu0
      %v5231 = vadd.f32 %v4942, %v5230
      %v5232 = vpop.f32.mrf.mxu0
      %5233 = vmatprep.mubr.bf16.mxu0 %v3632
      %5234 = vmatmul.mubr.bf16.gmra.mxu0 %v3598
      %v5235 = vpop.f32.mrf.mxu0
      %v5236 = vadd.f32 %v4947, %v5235
      %v5237 = vpop.f32.mrf.mxu0
      %v5238 = vpop.f32.mrf.mxu0
      %v5239 = vadd.f32 %v4950, %v5238
      %v5240 = vpop.f32.mrf.mxu0
      %5241 = vmatprep.mubr.bf16.mxu0 %v3633
      %5242 = vmatmul.mubr.bf16.gmra.mxu0 %v3599
      %v5243 = vpop.f32.mrf.mxu0
      %v5244 = vadd.f32 %v4955, %v5243
      %v5245 = vpop.f32.mrf.mxu0
      %v5246 = vpop.f32.mrf.mxu0
      %v5247 = vadd.f32 %v4958, %v5246
      %v5248 = vpop.f32.mrf.mxu0
      %5249 = vmatprep.mubr.bf16.mxu0 %v3634
      %5250 = vmatmul.mubr.bf16.gmra.mxu0 %v3600
      %v5251 = vpop.f32.mrf.mxu0
      %v5252 = vadd.f32 %v4963, %v5251
      %v5253 = vpop.f32.mrf.mxu0
      %v5254 = vpop.f32.mrf.mxu0
      %v5255 = vadd.f32 %v4966, %v5254
      %v5256 = vpop.f32.mrf.mxu0
      %5257 = vmatprep.mubr.bf16.mxu0 %v3635
      %5258 = vmatmul.mubr.bf16.gmra.mxu0 %v3601
      %v5259 = vpop.f32.mrf.mxu0
      %v5260 = vadd.f32 %v4971, %v5259
      %v5261 = vpop.f32.mrf.mxu0
      %v5262 = vpop.f32.mrf.mxu0
      %v5263 = vadd.f32 %v4974, %v5262
      %v5264 = vpop.f32.mrf.mxu0
      %5265 = vmatprep.mubr.bf16.mxu0 %v3636
      %5266 = vmatmul.mubr.bf16.gmra.mxu0 %v3602
      %v5267 = vpop.f32.mrf.mxu0
      %v5268 = vadd.f32 %v4979, %v5267
      %v5269 = vpop.f32.mrf.mxu0
      %v5270 = vpop.f32.mrf.mxu0
      %v5271 = vadd.f32 %v4982, %v5270
      %v5272 = vpop.f32.mrf.mxu0
      %5273 = vmatprep.mubr.bf16.mxu0 %v3637
      %5274 = vmatmul.mubr.bf16.gmra.mxu0 %v3603
      %v5275 = vpop.f32.mrf.mxu0
      %v5276 = vadd.f32 %v4987, %v5275
      %v5277 = vpop.f32.mrf.mxu0
      %v5278 = vpop.f32.mrf.mxu0
      %v5279 = vadd.f32 %v4990, %v5278
      %v5280 = vpop.f32.mrf.mxu0
      %5281 = vmatprep.mubr.bf16.mxu0 %v3638
      %5282 = vmatmul.mubr.bf16.gmra.mxu0 %v3604
      %v5283 = vpop.f32.mrf.mxu0
      %v5284 = vadd.f32 %v4995, %v5283
      %v5285 = vpop.f32.mrf.mxu0
      %v5286 = vpop.f32.mrf.mxu0
      %v5287 = vadd.f32 %v4998, %v5286
      %v5288 = vpop.f32.mrf.mxu0
      %5289 = vmatprep.mubr.bf16.mxu0 %v3639
      %5290 = vmatmul.mubr.bf16.gmra.mxu0 %v3605
      %v5291 = vpop.f32.mrf.mxu0
      %v5292 = vadd.f32 %v5003, %v5291
      %v5293 = vpop.f32.mrf.mxu0
      %v5294 = vpop.f32.mrf.mxu0
      %v5295 = vadd.f32 %v5006, %v5294
      %v5296 = vpop.f32.mrf.mxu0
      %5297 = vmatprep.mubr.bf16.mxu0 %v3640
      %5298 = vmatmul.mubr.bf16.gmra.mxu0 %v3606
      %v5299 = vpop.f32.mrf.mxu0
      %v5300 = vadd.f32 %v5011, %v5299
      %v5301 = vpop.f32.mrf.mxu0
      %v5302 = vpop.f32.mrf.mxu0
      %v5303 = vadd.f32 %v5014, %v5302
      %v5304 = vpop.f32.mrf.mxu0
      %5305 = vmatprep.mubr.bf16.mxu0 %v3641
      %5306 = vmatmul.mubr.bf16.gmra.mxu0 %v3607
      %v5307 = vpop.f32.mrf.mxu0
      %v5308 = vadd.f32 %v5019, %v5307
      %v5309 = vpop.f32.mrf.mxu0
      %v5310 = vpop.f32.mrf.mxu0
      %v5311 = vadd.f32 %v5022, %v5310
      %v5312 = vpop.f32.mrf.mxu0
      %5313 = vmatprep.mubr.bf16.mxu0 %v3642
      %5314 = vmatmul.mubr.bf16.gmra.mxu0 %v3608
      %v5315 = vpop.f32.mrf.mxu0
      %v5316 = vadd.f32 %v5027, %v5315
      %v5317 = vpop.f32.mrf.mxu0
      %v5318 = vpop.f32.mrf.mxu0
      %v5319 = vadd.f32 %v5030, %v5318
      %v5320 = vpop.f32.mrf.mxu0
      %5321 = vmatprep.mubr.bf16.mxu0 %v3643
      %5322 = vmatmul.mubr.bf16.gmra.mxu0 %v3609
      %v5323 = vpop.f32.mrf.mxu0
      %v5324 = vadd.f32 %v5035, %v5323
      %v5325 = vpop.f32.mrf.mxu0
      %v5326 = vpop.f32.mrf.mxu0
      %v5327 = vadd.f32 %v5038, %v5326
      %v5328 = vpop.f32.mrf.mxu0
      %5329 = vmatprep.mubr.bf16.mxu0 %v3644
      %5330 = vmatmul.mubr.bf16.gmra.mxu0 %v3610
      %v5331 = vpop.f32.mrf.mxu0
      %v5332 = vadd.f32 %v5043, %v5331
      %v5333 = vpop.f32.mrf.mxu0
      %v5334 = vpop.f32.mrf.mxu0
      %v5335 = vadd.f32 %v5046, %v5334
      %v5336 = vpop.f32.mrf.mxu0
      %5337 = vmatprep.mubr.bf16.mxu0 %v3645
      %5338 = vmatmul.mubr.bf16.gmra.mxu0 %v3611
      %v5339 = vpop.f32.mrf.mxu0
      %v5340 = vadd.f32 %v5051, %v5339
      %v5341 = vpop.f32.mrf.mxu0
      %v5342 = vpop.f32.mrf.mxu0
      %v5343 = vadd.f32 %v5054, %v5342
      %v5344 = vpop.f32.mrf.mxu0
      %5345 = vmatprep.mubr.bf16.mxu0 %v3646
      %5346 = vmatmul.mubr.bf16.gmra.mxu0 %v3612
      %v5347 = vpop.f32.mrf.mxu0
      %v5348 = vadd.f32 %v5059, %v5347
      %v5349 = vpop.f32.mrf.mxu0
      %v5350 = vpop.f32.mrf.mxu0
      %v5351 = vadd.f32 %v5062, %v5350
      %v5352 = vpop.f32.mrf.mxu0
      %5353 = vmatprep.mubr.bf16.mxu0 %v3647
      %5354 = vmatmul.mubr.bf16.gmra.mxu0 %v3613
      %v5355 = vpop.f32.mrf.mxu0
      %v5356 = vadd.f32 %v5067, %v5355
      %v5357 = vpop.f32.mrf.mxu0
      %v5358 = vpop.f32.mrf.mxu0
      %v5359 = vadd.f32 %v5070, %v5358
      %v5360 = vpop.f32.mrf.mxu0
      %5361 = vmatprep.mubr.bf16.mxu0 %v3648
      %5362 = vmatmul.mubr.bf16.gmra.mxu0 %v3614
      %v5363 = vpop.f32.mrf.mxu0
      %v5364 = vadd.f32 %v5075, %v5363
      %v5365 = vpop.f32.mrf.mxu0
      %v5366 = vpop.f32.mrf.mxu0
      %v5367 = vadd.f32 %v5078, %v5366
      %v5368 = vpop.f32.mrf.mxu0
      %5369 = vmatprep.mubr.bf16.mxu0 %v3649
      %5370 = vmatmul.mubr.bf16.gmra.mxu0 %v3615
      %v5371 = vpop.f32.mrf.mxu0
      %v5372 = vadd.f32 %v5083, %v5371
      %v5373 = vpop.f32.mrf.mxu0
      %v5374 = vpop.f32.mrf.mxu0
      %v5375 = vadd.f32 %v5086, %v5374
      %v5376 = vpop.f32.mrf.mxu0
      %5377 = vmatprep.mubr.bf16.mxu0 %v3650
      %5378 = vmatmul.mubr.bf16.gmra.mxu0 %v3616
      %v5379 = vpop.f32.mrf.mxu0
      %v5380 = vadd.f32 %v5091, %v5379
      %v5381 = vpop.f32.mrf.mxu0
      %v5382 = vpop.f32.mrf.mxu0
      %v5383 = vadd.f32 %v5094, %v5382
      %v5384 = vpop.f32.mrf.mxu0
      %5385 = vmatprep.mubr.bf16.mxu0 %v3618
      %5386 = vmatmul.mubr.bf16.gmra.mxu0 %v3617
      %v5387 = vpop.f32.mrf.mxu0
      %v5388 = vadd.f32 %v5099, %v5387
      %v5389 = vpop.f32.mrf.mxu0
      %v5390 = vpop.f32.mrf.mxu0
      %v5391 = vadd.f32 %v5102, %v5390
      %v5392 = vpop.f32.mrf.mxu0
      %5393 = vmatprep.mubr.bf16.mxu0 %v3618
      %5394 = vmatmul.mubr.bf16.gmra.mxu0 %v3584
      %v5395 = vpop.f32.mrf.mxu0
      %v5396 = vadd.f32 %v5107, %v5395
      %v5397 = vpop.f32.mrf.mxu0
      %v5398 = vpop.f32.mrf.mxu0
      %v5399 = vadd.f32 %v5110, %v5398
      %v5400 = vpop.f32.mrf.mxu0
      %5401 = vdwg.mxu0
      %5402 = vmatprep.subr.bf16.mxu0 0
      %5403 = vmatpush1.bf16.msra.mxu0 %v4173
      %5404 = vmatprep.subr.bf16.mxu0 0
      %5405 = vmatpush1.bf16.msra.mxu0 %v4172
      %5406 = vmatprep.subr.bf16.mxu0 0
      %5407 = vmatpush1.bf16.msra.mxu0 %v4171
      %5408 = vmatprep.subr.bf16.mxu0 0
      %5409 = vmatpush1.bf16.msra.mxu0 %v4170
      %5410 = vmatprep.subr.bf16.mxu0 0
      %5411 = vmatpush1.bf16.msra.mxu0 %v4169
      %5412 = vmatprep.subr.bf16.mxu0 0
      %5413 = vmatpush1.bf16.msra.mxu0 %v4168
      %5414 = vmatprep.subr.bf16.mxu0 0
      %5415 = vmatpush1.bf16.msra.mxu0 %v4167
      %5416 = vmatprep.subr.bf16.mxu0 0
      %5417 = vmatpush1.bf16.msra.mxu0 %v4166
      %5418 = vmatprep.subr.bf16.mxu0 0
      %5419 = vmatpush2.bf16.msra.mxu0 0
      %5420 = vmatprep.subr.bf16.mxu0 0
      %5421 = vmatpush2.bf16.msra.mxu0 0
      %5422 = vmatprep.subr.bf16.mxu0 0
      %5423 = vmatpush2.bf16.msra.mxu0 0
      %5424 = vmatprep.subr.bf16.mxu0 0
      %5425 = vmatpush2.bf16.msra.mxu0 0
      %5426 = vmatprep.subr.bf16.mxu0 0
      %5427 = vmatpush2.bf16.msra.mxu0 0
      %5428 = vmatprep.subr.bf16.mxu0 0
      %5429 = vmatpush2.bf16.msra.mxu0 0
      %5430 = vmatprep.subr.bf16.mxu0 0
      %5431 = vmatpush2.bf16.msra.mxu0 0
      %5432 = vmatprep.subr.bf16.mxu0 0
      %5433 = vmatpush2.bf16.msra.mxu0 0
      %5434 = vmatprep.mubr.bf16.mxu0 0
      %5435 = vmatmul.mubr.bf16.gmra.mxu0 %v3784
      %v5436 = vpop.f32.mrf.mxu0
      %v5437 = vadd.f32 %v5148, %v5436
      %v5438 = vpop.f32.mrf.mxu0
      %v5439 = vpop.f32.mrf.mxu0
      %v5440 = vadd.f32 %v5151, %v5439
      %v5441 = vpop.f32.mrf.mxu0
      %5442 = vmatprep.mubr.bf16.mxu0 0
      %5443 = vmatmul.mubr.bf16.gmra.mxu0 %v3785
      %v5444 = vpop.f32.mrf.mxu0
      %v5445 = vadd.f32 %v5156, %v5444
      %v5446 = vpop.f32.mrf.mxu0
      %v5447 = vpop.f32.mrf.mxu0
      %v5448 = vadd.f32 %v5159, %v5447
      %v5449 = vpop.f32.mrf.mxu0
      %5450 = vmatprep.mubr.bf16.mxu0 0
      %5451 = vmatmul.mubr.bf16.gmra.mxu0 %v3786
      %v5452 = vpop.f32.mrf.mxu0
      %v5453 = vadd.f32 %v5164, %v5452
      %v5454 = vpop.f32.mrf.mxu0
      %v5455 = vpop.f32.mrf.mxu0
      %v5456 = vadd.f32 %v5167, %v5455
      %v5457 = vpop.f32.mrf.mxu0
      %5458 = vmatprep.mubr.bf16.mxu0 0
      %5459 = vmatmul.mubr.bf16.gmra.mxu0 %v3787
      %v5460 = vpop.f32.mrf.mxu0
      %v5461 = vadd.f32 %v5172, %v5460
      %v5462 = vpop.f32.mrf.mxu0
      %v5463 = vpop.f32.mrf.mxu0
      %v5464 = vadd.f32 %v5175, %v5463
      %v5465 = vpop.f32.mrf.mxu0
      %5466 = vmatprep.mubr.bf16.mxu0 0
      %5467 = vmatmul.mubr.bf16.gmra.mxu0 %v3788
      %v5468 = vpop.f32.mrf.mxu0
      %v5469 = vadd.f32 %v5180, %v5468
      %v5470 = vpop.f32.mrf.mxu0
      %v5471 = vpop.f32.mrf.mxu0
      %v5472 = vadd.f32 %v5183, %v5471
      %v5473 = vpop.f32.mrf.mxu0
      %5474 = vmatprep.mubr.bf16.mxu0 0
      %5475 = vmatmul.mubr.bf16.gmra.mxu0 %v3789
      %v5476 = vpop.f32.mrf.mxu0
      %v5477 = vadd.f32 %v5188, %v5476
      %v5478 = vpop.f32.mrf.mxu0
      %v5479 = vpop.f32.mrf.mxu0
      %v5480 = vadd.f32 %v5191, %v5479
      %v5481 = vpop.f32.mrf.mxu0
      %5482 = vmatprep.mubr.bf16.mxu0 0
      %5483 = vmatmul.mubr.bf16.gmra.mxu0 %v3790
      %v5484 = vpop.f32.mrf.mxu0
      %v5485 = vadd.f32 %v5196, %v5484
      %v5486 = vpop.f32.mrf.mxu0
      %v5487 = vpop.f32.mrf.mxu0
      %v5488 = vadd.f32 %v5199, %v5487
      %v5489 = vpop.f32.mrf.mxu0
      %5490 = vmatprep.mubr.bf16.mxu0 0
      %5491 = vmatmul.mubr.bf16.gmra.mxu0 %v3791
      %v5492 = vpop.f32.mrf.mxu0
      %v5493 = vadd.f32 %v5204, %v5492
      %v5494 = vpop.f32.mrf.mxu0
      %v5495 = vpop.f32.mrf.mxu0
      %v5496 = vadd.f32 %v5207, %v5495
      %v5497 = vpop.f32.mrf.mxu0
      %5498 = vmatprep.mubr.bf16.mxu0 0
      %5499 = vmatmul.mubr.bf16.gmra.mxu0 %v3792
      %v5500 = vpop.f32.mrf.mxu0
      %v5501 = vadd.f32 %v5212, %v5500
      %v5502 = vpop.f32.mrf.mxu0
      %v5503 = vpop.f32.mrf.mxu0
      %v5504 = vadd.f32 %v5215, %v5503
      %v5505 = vpop.f32.mrf.mxu0
      %5506 = vmatprep.mubr.bf16.mxu0 0
      %5507 = vmatmul.mubr.bf16.gmra.mxu0 %v3793
      %v5508 = vpop.f32.mrf.mxu0
      %v5509 = vadd.f32 %v5220, %v5508
      %v5510 = vpop.f32.mrf.mxu0
      %v5511 = vpop.f32.mrf.mxu0
      %v5512 = vadd.f32 %v5223, %v5511
      %v5513 = vpop.f32.mrf.mxu0
      %5514 = vmatprep.mubr.bf16.mxu0 0
      %5515 = vmatmul.mubr.bf16.gmra.mxu0 %v3794
      %v5516 = vpop.f32.mrf.mxu0
      %v5517 = vadd.f32 %v5228, %v5516
      %v5518 = vpop.f32.mrf.mxu0
      %v5519 = vpop.f32.mrf.mxu0
      %v5520 = vadd.f32 %v5231, %v5519
      %v5521 = vpop.f32.mrf.mxu0
      %5522 = vmatprep.mubr.bf16.mxu0 0
      %5523 = vmatmul.mubr.bf16.gmra.mxu0 %v3795
      %v5524 = vpop.f32.mrf.mxu0
      %v5525 = vadd.f32 %v5236, %v5524
      %v5526 = vpop.f32.mrf.mxu0
      %v5527 = vpop.f32.mrf.mxu0
      %v5528 = vadd.f32 %v5239, %v5527
      %v5529 = vpop.f32.mrf.mxu0
      %5530 = vmatprep.mubr.bf16.mxu0 0
      %5531 = vmatmul.mubr.bf16.gmra.mxu0 %v3796
      %v5532 = vpop.f32.mrf.mxu0
      %v5533 = vadd.f32 %v5244, %v5532
      %v5534 = vpop.f32.mrf.mxu0
      %v5535 = vpop.f32.mrf.mxu0
      %v5536 = vadd.f32 %v5247, %v5535
      %v5537 = vpop.f32.mrf.mxu0
      %5538 = vmatprep.mubr.bf16.mxu0 0
      %5539 = vmatmul.mubr.bf16.gmra.mxu0 %v3797
      %v5540 = vpop.f32.mrf.mxu0
      %v5541 = vadd.f32 %v5252, %v5540
      %v5542 = vpop.f32.mrf.mxu0
      %v5543 = vpop.f32.mrf.mxu0
      %v5544 = vadd.f32 %v5255, %v5543
      %v5545 = vpop.f32.mrf.mxu0
      %5546 = vmatprep.mubr.bf16.mxu0 0
      %5547 = vmatmul.mubr.bf16.gmra.mxu0 %v3798
      %v5548 = vpop.f32.mrf.mxu0
      %v5549 = vadd.f32 %v5260, %v5548
      %v5550 = vpop.f32.mrf.mxu0
      %v5551 = vpop.f32.mrf.mxu0
      %v5552 = vadd.f32 %v5263, %v5551
      %v5553 = vpop.f32.mrf.mxu0
      %5554 = vmatprep.mubr.bf16.mxu0 0
      %5555 = vmatmul.mubr.bf16.gmra.mxu0 %v3799
      %v5556 = vpop.f32.mrf.mxu0
      %v5557 = vadd.f32 %v5268, %v5556
      %v5558 = vpop.f32.mrf.mxu0
      %v5559 = vpop.f32.mrf.mxu0
      %v5560 = vadd.f32 %v5271, %v5559
      %v5561 = vpop.f32.mrf.mxu0
      %5562 = vmatprep.mubr.bf16.mxu0 0
      %5563 = vmatmul.mubr.bf16.gmra.mxu0 %v3800
      %v5564 = vpop.f32.mrf.mxu0
      %v5565 = vadd.f32 %v5276, %v5564
      %v5566 = vpop.f32.mrf.mxu0
      %v5567 = vpop.f32.mrf.mxu0
      %v5568 = vadd.f32 %v5279, %v5567
      %v5569 = vpop.f32.mrf.mxu0
      %5570 = vmatprep.mubr.bf16.mxu0 0
      %5571 = vmatmul.mubr.bf16.gmra.mxu0 %v3801
      %v5572 = vpop.f32.mrf.mxu0
      %v5573 = vadd.f32 %v5284, %v5572
      %v5574 = vpop.f32.mrf.mxu0
      %v5575 = vpop.f32.mrf.mxu0
      %v5576 = vadd.f32 %v5287, %v5575
      %v5577 = vpop.f32.mrf.mxu0
      %5578 = vmatprep.mubr.bf16.mxu0 0
      %5579 = vmatmul.mubr.bf16.gmra.mxu0 %v3802
      %v5580 = vpop.f32.mrf.mxu0
      %v5581 = vadd.f32 %v5292, %v5580
      %v5582 = vpop.f32.mrf.mxu0
      %v5583 = vpop.f32.mrf.mxu0
      %v5584 = vadd.f32 %v5295, %v5583
      %v5585 = vpop.f32.mrf.mxu0
      %5586 = vmatprep.mubr.bf16.mxu0 0
      %5587 = vmatmul.mubr.bf16.gmra.mxu0 %v3803
      %v5588 = vpop.f32.mrf.mxu0
      %v5589 = vadd.f32 %v5300, %v5588
      %v5590 = vpop.f32.mrf.mxu0
      %v5591 = vpop.f32.mrf.mxu0
      %v5592 = vadd.f32 %v5303, %v5591
      %v5593 = vpop.f32.mrf.mxu0
      %5594 = vmatprep.mubr.bf16.mxu0 0
      %5595 = vmatmul.mubr.bf16.gmra.mxu0 %v3804
      %v5596 = vpop.f32.mrf.mxu0
      %v5597 = vadd.f32 %v5308, %v5596
      %v5598 = vpop.f32.mrf.mxu0
      %v5599 = vpop.f32.mrf.mxu0
      %v5600 = vadd.f32 %v5311, %v5599
      %v5601 = vpop.f32.mrf.mxu0
      %5602 = vmatprep.mubr.bf16.mxu0 0
      %5603 = vmatmul.mubr.bf16.gmra.mxu0 %v3805
      %v5604 = vpop.f32.mrf.mxu0
      %v5605 = vadd.f32 %v5316, %v5604
      %v5606 = vpop.f32.mrf.mxu0
      %v5607 = vpop.f32.mrf.mxu0
      %v5608 = vadd.f32 %v5319, %v5607
      %v5609 = vpop.f32.mrf.mxu0
      %5610 = vmatprep.mubr.bf16.mxu0 0
      %5611 = vmatmul.mubr.bf16.gmra.mxu0 %v3806
      %v5612 = vpop.f32.mrf.mxu0
      %v5613 = vadd.f32 %v5324, %v5612
      %v5614 = vpop.f32.mrf.mxu0
      %v5615 = vpop.f32.mrf.mxu0
      %v5616 = vadd.f32 %v5327, %v5615
      %v5617 = vpop.f32.mrf.mxu0
      %5618 = vmatprep.mubr.bf16.mxu0 0
      %5619 = vmatmul.mubr.bf16.gmra.mxu0 %v3807
      %v5620 = vpop.f32.mrf.mxu0
      %v5621 = vadd.f32 %v5332, %v5620
      %v5622 = vpop.f32.mrf.mxu0
      %v5623 = vpop.f32.mrf.mxu0
      %v5624 = vadd.f32 %v5335, %v5623
      %v5625 = vpop.f32.mrf.mxu0
      %5626 = vmatprep.mubr.bf16.mxu0 0
      %5627 = vmatmul.mubr.bf16.gmra.mxu0 %v3808
      %v5628 = vpop.f32.mrf.mxu0
      %v5629 = vadd.f32 %v5340, %v5628
      %v5630 = vpop.f32.mrf.mxu0
      %v5631 = vpop.f32.mrf.mxu0
      %v5632 = vadd.f32 %v5343, %v5631
      %v5633 = vpop.f32.mrf.mxu0
      %5634 = vmatprep.mubr.bf16.mxu0 0
      %5635 = vmatmul.mubr.bf16.gmra.mxu0 %v3809
      %v5636 = vpop.f32.mrf.mxu0
      %v5637 = vadd.f32 %v5348, %v5636
      %v5638 = vpop.f32.mrf.mxu0
      %v5639 = vpop.f32.mrf.mxu0
      %v5640 = vadd.f32 %v5351, %v5639
      %v5641 = vpop.f32.mrf.mxu0
      %5642 = vmatprep.mubr.bf16.mxu0 0
      %5643 = vmatmul.mubr.bf16.gmra.mxu0 %v3810
      %v5644 = vpop.f32.mrf.mxu0
      %v5645 = vadd.f32 %v5356, %v5644
      %v5646 = vpop.f32.mrf.mxu0
      %v5647 = vpop.f32.mrf.mxu0
      %v5648 = vadd.f32 %v5359, %v5647
      %v5649 = vpop.f32.mrf.mxu0
      %5650 = vmatprep.mubr.bf16.mxu0 0
      %5651 = vmatmul.mubr.bf16.gmra.mxu0 %v3811
      %v5652 = vpop.f32.mrf.mxu0
      %v5653 = vadd.f32 %v5364, %v5652
      %v5654 = vpop.f32.mrf.mxu0
      %v5655 = vpop.f32.mrf.mxu0
      %v5656 = vadd.f32 %v5367, %v5655
      %v5657 = vpop.f32.mrf.mxu0
      %5658 = vmatprep.mubr.bf16.mxu0 0
      %5659 = vmatmul.mubr.bf16.gmra.mxu0 %v3812
      %v5660 = vpop.f32.mrf.mxu0
      %v5661 = vadd.f32 %v5372, %v5660
      %v5662 = vpop.f32.mrf.mxu0
      %v5663 = vpop.f32.mrf.mxu0
      %v5664 = vadd.f32 %v5375, %v5663
      %v5665 = vpop.f32.mrf.mxu0
      %5666 = vmatprep.mubr.bf16.mxu0 0
      %5667 = vmatmul.mubr.bf16.gmra.mxu0 %v3813
      %v5668 = vpop.f32.mrf.mxu0
      %v5669 = vadd.f32 %v5380, %v5668
      %v5670 = vpop.f32.mrf.mxu0
      %v5671 = vpop.f32.mrf.mxu0
      %v5672 = vadd.f32 %v5383, %v5671
      %v5673 = vpop.f32.mrf.mxu0
      %5674 = vmatprep.mubr.bf16.mxu0 0
      %5675 = vmatmul.mubr.bf16.gmra.mxu0 %v3780
      %v5676 = vpop.f32.mrf.mxu0
      %v5677 = vadd.f32 %v5388, %v5676
      %v5678 = vpop.f32.mrf.mxu0
      %v5679 = vpop.f32.mrf.mxu0
      %v5680 = vadd.f32 %v5391, %v5679
      %v5681 = vpop.f32.mrf.mxu0
      %5682 = vmatprep.mubr.bf16.mxu0 0
      %5683 = vmatmul.mubr.bf16.gmra.mxu0 %v3780
      %v5684 = vpop.f32.mrf.mxu0
      %v5685 = vadd.f32 %v5396, %v5684
      %v5686 = vpop.f32.mrf.mxu0
      %v5687 = vpop.f32.mrf.mxu0
      %v5688 = vadd.f32 %v5399, %v5687
      %v5689 = vpop.f32.mrf.mxu0
      %5690 = vdwg.mxu0
      %v5691 = vld [vmem:[%s206] sm:$0x1]
      %v5692 = vmul.f32 %v5437, %v298
      %v5693 = vmul.f32 %v5440, %v299
      %v5694 = vmul.f32 %v5445, %v300
      %v5695 = vmul.f32 %v5448, %v301
      %v5696 = vmul.f32 %v5453, %v298
      %v5697 = vmul.f32 %v5456, %v299
      %v5698 = vmul.f32 %v5461, %v300
      %v5699 = vmul.f32 %v5464, %v301
      %v5700 = vmul.f32 %v5469, %v298
      %v5701 = vmul.f32 %v5472, %v299
      %v5702 = vmul.f32 %v5477, %v300
      %v5703 = vmul.f32 %v5480, %v301
      %v5704 = vmul.f32 %v5485, %v298
      %v5705 = vmul.f32 %v5488, %v299
      %v5706 = vmul.f32 %v5493, %v300
      %v5707 = vmul.f32 %v5496, %v301
      %v5708 = vmul.f32 %v5501, %v298
      %v5709 = vmul.f32 %v5504, %v299
      %v5710 = vmul.f32 %v5509, %v300
      %v5711 = vmul.f32 %v5512, %v301
      %v5712 = vmul.f32 %v5517, %v298
      %v5713 = vmul.f32 %v5520, %v299
      %v5714 = vmul.f32 %v5525, %v300
      %v5715 = vmul.f32 %v5528, %v301
      %v5716 = vmul.f32 %v5533, %v298
      %v5717 = vmul.f32 %v5536, %v299
      %v5718 = vmul.f32 %v5541, %v300
      %v5719 = vmul.f32 %v5544, %v301
      %v5720 = vmul.f32 %v5549, %v298
      %v5721 = vmul.f32 %v5552, %v299
      %v5722 = vmul.f32 %v5557, %v300
      %v5723 = vmul.f32 %v5560, %v301
      %v5724 = vmul.f32 %v5565, %v298
      %v5725 = vmul.f32 %v5568, %v299
      %v5726 = vmul.f32 %v5573, %v300
      %v5727 = vmul.f32 %v5576, %v301
      %v5728 = vmul.f32 %v5581, %v298
      %v5729 = vmul.f32 %v5584, %v299
      %v5730 = vmul.f32 %v5589, %v300
      %v5731 = vmul.f32 %v5592, %v301
      %v5732 = vmul.f32 %v5597, %v298
      %v5733 = vmul.f32 %v5600, %v299
      %v5734 = vmul.f32 %v5605, %v300
      %v5735 = vmul.f32 %v5608, %v301
      %v5736 = vmul.f32 %v5613, %v298
      %v5737 = vmul.f32 %v5616, %v299
      %v5738 = vmul.f32 %v5621, %v300
      %v5739 = vmul.f32 %v5624, %v301
      %v5740 = vmul.f32 %v5629, %v298
      %v5741 = vmul.f32 %v5632, %v299
      %v5742 = vmul.f32 %v5637, %v300
      %v5743 = vmul.f32 %v5640, %v301
      %v5744 = vmul.f32 %v5645, %v298
      %v5745 = vmul.f32 %v5648, %v299
      %v5746 = vmul.f32 %v5653, %v300
      %v5747 = vmul.f32 %v5656, %v301
      %v5748 = vmul.f32 %v5661, %v298
      %v5749 = vmul.f32 %v5664, %v299
      %v5750 = vmul.f32 %v5669, %v300
      %v5751 = vmul.f32 %v5672, %v301
      %v5752 = vmul.f32 %v5677, %v298
      %v5753 = vmul.f32 %v5680, %v299
      %v5754 = vmul.f32 %v5685, %v300
      %v5755 = vmul.f32 %v5688, %v301
      %v5756 = vadd.f32 %v5692, %v5693
      %v5757 = vadd.f32 %v5756, %v5694
      %v5758 = vadd.f32 %v5757, %v5695
      %v5759 = vadd.f32 %v5758, %v5696
      %v5760 = vadd.f32 %v5759, %v5697
      %v5761 = vadd.f32 %v5760, %v5698
      %v5762 = vadd.f32 %v5761, %v5699
      %v5763 = vadd.f32 %v5762, %v5700
      %v5764 = vadd.f32 %v5763, %v5701
      %v5765 = vadd.f32 %v5764, %v5702
      %v5766 = vadd.f32 %v5765, %v5703
      %v5767 = vadd.f32 %v5766, %v5704
      %v5768 = vadd.f32 %v5767, %v5705
      %v5769 = vadd.f32 %v5768, %v5706
      %v5770 = vadd.f32 %v5769, %v5707
      %v5771 = vadd.f32 %v5770, %v5708
      %v5772 = vadd.f32 %v5771, %v5709
      %v5773 = vadd.f32 %v5772, %v5710
      %v5774 = vadd.f32 %v5773, %v5711
      %v5775 = vadd.f32 %v5774, %v5712
      %v5776 = vadd.f32 %v5775, %v5713
      %v5777 = vadd.f32 %v5776, %v5714
      %v5778 = vadd.f32 %v5777, %v5715
      %v5779 = vadd.f32 %v5778, %v5716
      %v5780 = vadd.f32 %v5779, %v5717
      %v5781 = vadd.f32 %v5780, %v5718
      %v5782 = vadd.f32 %v5781, %v5719
      %v5783 = vadd.f32 %v5782, %v5720
      %v5784 = vadd.f32 %v5783, %v5721
      %v5785 = vadd.f32 %v5784, %v5722
      %v5786 = vadd.f32 %v5785, %v5723
      %v5787 = vadd.f32 %v5786, %v5724
      %v5788 = vadd.f32 %v5787, %v5725
      %v5789 = vadd.f32 %v5788, %v5726
      %v5790 = vadd.f32 %v5789, %v5727
      %v5791 = vadd.f32 %v5790, %v5728
      %v5792 = vadd.f32 %v5791, %v5729
      %v5793 = vadd.f32 %v5792, %v5730
      %v5794 = vadd.f32 %v5793, %v5731
      %v5795 = vadd.f32 %v5794, %v5732
      %v5796 = vadd.f32 %v5795, %v5733
      %v5797 = vadd.f32 %v5796, %v5734
      %v5798 = vadd.f32 %v5797, %v5735
      %v5799 = vadd.f32 %v5798, %v5736
      %v5800 = vadd.f32 %v5799, %v5737
      %v5801 = vadd.f32 %v5800, %v5738
      %v5802 = vadd.f32 %v5801, %v5739
      %v5803 = vadd.f32 %v5802, %v5740
      %v5804 = vadd.f32 %v5803, %v5741
      %v5805 = vadd.f32 %v5804, %v5742
      %v5806 = vadd.f32 %v5805, %v5743
      %v5807 = vadd.f32 %v5806, %v5744
      %v5808 = vadd.f32 %v5807, %v5745
      %v5809 = vadd.f32 %v5808, %v5746
      %v5810 = vadd.f32 %v5809, %v5747
      %v5811 = vadd.f32 %v5810, %v5748
      %v5812 = vadd.f32 %v5811, %v5749
      %v5813 = vadd.f32 %v5812, %v5750
      %v5814 = vadd.f32 %v5813, %v5751
      %v5815 = vadd.f32 %v5814, %v5752
      %v5816 = vadd.f32 %v5815, %v5753
      %v5817 = vadd.f32 %v5816, %v5754
      %v5818 = vadd.f32 %v5817, %v5755
      %v5819 = vrot.slane %v5818, 4
      %v5820 = vadd.f32 %v5818, %v5819
      %v5821 = vrot.slane %v5820, 2
      %v5822 = vadd.f32 %v5820, %v5821
      %v5823 = vrot.slane %v5822, 1
      %v5824 = vadd.f32 %v5822, %v5823
      %v5825 = vmul.f32 %v5824, 0.00390625
      %v5826 = vsub.f32 %v5437, %v5825
      %v5827 = vsub.f32 %v5440, %v5825
      %v5828 = vsub.f32 %v5445, %v5825
      %v5829 = vsub.f32 %v5448, %v5825
      %v5830 = vsub.f32 %v5453, %v5825
      %v5831 = vsub.f32 %v5456, %v5825
      %v5832 = vsub.f32 %v5461, %v5825
      %v5833 = vsub.f32 %v5464, %v5825
      %v5834 = vsub.f32 %v5469, %v5825
      %v5835 = vsub.f32 %v5472, %v5825
      %v5836 = vsub.f32 %v5477, %v5825
      %v5837 = vsub.f32 %v5480, %v5825
      %v5838 = vsub.f32 %v5485, %v5825
      %v5839 = vsub.f32 %v5488, %v5825
      %v5840 = vsub.f32 %v5493, %v5825
      %v5841 = vsub.f32 %v5496, %v5825
      %v5842 = vsub.f32 %v5501, %v5825
      %v5843 = vsub.f32 %v5504, %v5825
      %v5844 = vsub.f32 %v5509, %v5825
      %v5845 = vsub.f32 %v5512, %v5825
      %v5846 = vsub.f32 %v5517, %v5825
      %v5847 = vsub.f32 %v5520, %v5825
      %v5848 = vsub.f32 %v5525, %v5825
      %v5849 = vsub.f32 %v5528, %v5825
      %v5850 = vsub.f32 %v5533, %v5825
      %v5851 = vsub.f32 %v5536, %v5825
      %v5852 = vsub.f32 %v5541, %v5825
      %v5853 = vsub.f32 %v5544, %v5825
      %v5854 = vsub.f32 %v5549, %v5825
      %v5855 = vsub.f32 %v5552, %v5825
      %v5856 = vsub.f32 %v5557, %v5825
      %v5857 = vsub.f32 %v5560, %v5825
      %v5858 = vsub.f32 %v5565, %v5825
      %v5859 = vsub.f32 %v5568, %v5825
      %v5860 = vsub.f32 %v5573, %v5825
      %v5861 = vsub.f32 %v5576, %v5825
      %v5862 = vsub.f32 %v5581, %v5825
      %v5863 = vsub.f32 %v5584, %v5825
      %v5864 = vsub.f32 %v5589, %v5825
      %v5865 = vsub.f32 %v5592, %v5825
      %v5866 = vsub.f32 %v5597, %v5825
      %v5867 = vsub.f32 %v5600, %v5825
      %v5868 = vsub.f32 %v5605, %v5825
      %v5869 = vsub.f32 %v5608, %v5825
      %v5870 = vsub.f32 %v5613, %v5825
      %v5871 = vsub.f32 %v5616, %v5825
      %v5872 = vsub.f32 %v5621, %v5825
      %v5873 = vsub.f32 %v5624, %v5825
      %v5874 = vsub.f32 %v5629, %v5825
      %v5875 = vsub.f32 %v5632, %v5825
      %v5876 = vsub.f32 %v5637, %v5825
      %v5877 = vsub.f32 %v5640, %v5825
      %v5878 = vsub.f32 %v5645, %v5825
      %v5879 = vsub.f32 %v5648, %v5825
      %v5880 = vsub.f32 %v5653, %v5825
      %v5881 = vsub.f32 %v5656, %v5825
      %v5882 = vsub.f32 %v5661, %v5825
      %v5883 = vsub.f32 %v5664, %v5825
      %v5884 = vsub.f32 %v5669, %v5825
      %v5885 = vsub.f32 %v5672, %v5825
      %v5886 = vsub.f32 %v5677, %v5825
      %v5887 = vsub.f32 %v5680, %v5825
      %v5888 = vsub.f32 %v5685, %v5825
      %v5889 = vsub.f32 %v5688, %v5825
      %v5890 = vmul.f32 %v5826, %v298
      %v5891 = vmul.f32 %v5827, %v299
      %v5892 = vmul.f32 %v5828, %v300
      %v5893 = vmul.f32 %v5829, %v301
      %v5894 = vmul.f32 %v5830, %v298
      %v5895 = vmul.f32 %v5831, %v299
      %v5896 = vmul.f32 %v5832, %v300
      %v5897 = vmul.f32 %v5833, %v301
      %v5898 = vmul.f32 %v5834, %v298
      %v5899 = vmul.f32 %v5835, %v299
      %v5900 = vmul.f32 %v5836, %v300
      %v5901 = vmul.f32 %v5837, %v301
      %v5902 = vmul.f32 %v5838, %v298
      %v5903 = vmul.f32 %v5839, %v299
      %v5904 = vmul.f32 %v5840, %v300
      %v5905 = vmul.f32 %v5841, %v301
      %v5906 = vmul.f32 %v5842, %v298
      %v5907 = vmul.f32 %v5843, %v299
      %v5908 = vmul.f32 %v5844, %v300
      %v5909 = vmul.f32 %v5845, %v301
      %v5910 = vmul.f32 %v5846, %v298
      %v5911 = vmul.f32 %v5847, %v299
      %v5912 = vmul.f32 %v5848, %v300
      %v5913 = vmul.f32 %v5849, %v301
      %v5914 = vmul.f32 %v5850, %v298
      %v5915 = vmul.f32 %v5851, %v299
      %v5916 = vmul.f32 %v5852, %v300
      %v5917 = vmul.f32 %v5853, %v301
      %v5918 = vmul.f32 %v5854, %v298
      %v5919 = vmul.f32 %v5855, %v299
      %v5920 = vmul.f32 %v5856, %v300
      %v5921 = vmul.f32 %v5857, %v301
      %v5922 = vmul.f32 %v5858, %v298
      %v5923 = vmul.f32 %v5859, %v299
      %v5924 = vmul.f32 %v5860, %v300
      %v5925 = vmul.f32 %v5861, %v301
      %v5926 = vmul.f32 %v5862, %v298
      %v5927 = vmul.f32 %v5863, %v299
      %v5928 = vmul.f32 %v5864, %v300
      %v5929 = vmul.f32 %v5865, %v301
      %v5930 = vmul.f32 %v5866, %v298
      %v5931 = vmul.f32 %v5867, %v299
      %v5932 = vmul.f32 %v5868, %v300
      %v5933 = vmul.f32 %v5869, %v301
      %v5934 = vmul.f32 %v5870, %v298
      %v5935 = vmul.f32 %v5871, %v299
      %v5936 = vmul.f32 %v5872, %v300
      %v5937 = vmul.f32 %v5873, %v301
      %v5938 = vmul.f32 %v5874, %v298
      %v5939 = vmul.f32 %v5875, %v299
      %v5940 = vmul.f32 %v5876, %v300
      %v5941 = vmul.f32 %v5877, %v301
      %v5942 = vmul.f32 %v5878, %v298
      %v5943 = vmul.f32 %v5879, %v299
      %v5944 = vmul.f32 %v5880, %v300
      %v5945 = vmul.f32 %v5881, %v301
      %v5946 = vmul.f32 %v5882, %v298
      %v5947 = vmul.f32 %v5883, %v299
      %v5948 = vmul.f32 %v5884, %v300
      %v5949 = vmul.f32 %v5885, %v301
      %v5950 = vmul.f32 %v5886, %v298
      %v5951 = vmul.f32 %v5887, %v299
      %v5952 = vmul.f32 %v5888, %v300
      %v5953 = vmul.f32 %v5889, %v301
      %v5954 = vmul.f32 %v5890, %v5890
      %v5955 = vmul.f32 %v5891, %v5891
      %v5956 = vmul.f32 %v5892, %v5892
      %v5957 = vmul.f32 %v5893, %v5893
      %v5958 = vmul.f32 %v5894, %v5894
      %v5959 = vmul.f32 %v5895, %v5895
      %v5960 = vmul.f32 %v5896, %v5896
      %v5961 = vmul.f32 %v5897, %v5897
      %v5962 = vmul.f32 %v5898, %v5898
      %v5963 = vmul.f32 %v5899, %v5899
      %v5964 = vmul.f32 %v5900, %v5900
      %v5965 = vmul.f32 %v5901, %v5901
      %v5966 = vmul.f32 %v5902, %v5902
      %v5967 = vmul.f32 %v5903, %v5903
      %v5968 = vmul.f32 %v5904, %v5904
      %v5969 = vmul.f32 %v5905, %v5905
      %v5970 = vmul.f32 %v5906, %v5906
      %v5971 = vmul.f32 %v5907, %v5907
      %v5972 = vmul.f32 %v5908, %v5908
      %v5973 = vmul.f32 %v5909, %v5909
      %v5974 = vmul.f32 %v5910, %v5910
      %v5975 = vmul.f32 %v5911, %v5911
      %v5976 = vmul.f32 %v5912, %v5912
      %v5977 = vmul.f32 %v5913, %v5913
      %v5978 = vmul.f32 %v5914, %v5914
      %v5979 = vmul.f32 %v5915, %v5915
      %v5980 = vmul.f32 %v5916, %v5916
      %v5981 = vmul.f32 %v5917, %v5917
      %v5982 = vmul.f32 %v5918, %v5918
      %v5983 = vmul.f32 %v5919, %v5919
      %v5984 = vmul.f32 %v5920, %v5920
      %v5985 = vmul.f32 %v5921, %v5921
      %v5986 = vmul.f32 %v5922, %v5922
      %v5987 = vmul.f32 %v5923, %v5923
      %v5988 = vmul.f32 %v5924, %v5924
      %v5989 = vmul.f32 %v5925, %v5925
      %v5990 = vmul.f32 %v5926, %v5926
      %v5991 = vmul.f32 %v5927, %v5927
      %v5992 = vmul.f32 %v5928, %v5928
      %v5993 = vmul.f32 %v5929, %v5929
      %v5994 = vmul.f32 %v5930, %v5930
      %v5995 = vmul.f32 %v5931, %v5931
      %v5996 = vmul.f32 %v5932, %v5932
      %v5997 = vmul.f32 %v5933, %v5933
      %v5998 = vmul.f32 %v5934, %v5934
      %v5999 = vmul.f32 %v5935, %v5935
      %v6000 = vmul.f32 %v5936, %v5936
      %v6001 = vmul.f32 %v5937, %v5937
      %v6002 = vmul.f32 %v5938, %v5938
      %v6003 = vmul.f32 %v5939, %v5939
      %v6004 = vmul.f32 %v5940, %v5940
      %v6005 = vmul.f32 %v5941, %v5941
      %v6006 = vmul.f32 %v5942, %v5942
      %v6007 = vmul.f32 %v5943, %v5943
      %v6008 = vmul.f32 %v5944, %v5944
      %v6009 = vmul.f32 %v5945, %v5945
      %v6010 = vmul.f32 %v5946, %v5946
      %v6011 = vmul.f32 %v5947, %v5947
      %v6012 = vmul.f32 %v5948, %v5948
      %v6013 = vmul.f32 %v5949, %v5949
      %v6014 = vmul.f32 %v5950, %v5950
      %v6015 = vmul.f32 %v5951, %v5951
      %v6016 = vmul.f32 %v5952, %v5952
      %v6017 = vmul.f32 %v5953, %v5953
      %v6018 = vadd.f32 %v5954, %v5955
      %v6019 = vadd.f32 %v6018, %v5956
      %v6020 = vadd.f32 %v6019, %v5957
      %v6021 = vadd.f32 %v6020, %v5958
      %v6022 = vadd.f32 %v6021, %v5959
      %v6023 = vadd.f32 %v6022, %v5960
      %v6024 = vadd.f32 %v6023, %v5961
      %v6025 = vadd.f32 %v6024, %v5962
      %v6026 = vadd.f32 %v6025, %v5963
      %v6027 = vadd.f32 %v6026, %v5964
      %v6028 = vadd.f32 %v6027, %v5965
      %v6029 = vadd.f32 %v6028, %v5966
      %v6030 = vadd.f32 %v6029, %v5967
      %v6031 = vadd.f32 %v6030, %v5968
      %v6032 = vadd.f32 %v6031, %v5969
      %v6033 = vadd.f32 %v6032, %v5970
      %v6034 = vadd.f32 %v6033, %v5971
      %v6035 = vadd.f32 %v6034, %v5972
      %v6036 = vadd.f32 %v6035, %v5973
      %v6037 = vadd.f32 %v6036, %v5974
      %v6038 = vadd.f32 %v6037, %v5975
      %v6039 = vadd.f32 %v6038, %v5976
      %v6040 = vadd.f32 %v6039, %v5977
      %v6041 = vadd.f32 %v6040, %v5978
      %v6042 = vadd.f32 %v6041, %v5979
      %v6043 = vadd.f32 %v6042, %v5980
      %v6044 = vadd.f32 %v6043, %v5981
      %v6045 = vadd.f32 %v6044, %v5982
      %v6046 = vadd.f32 %v6045, %v5983
      %v6047 = vadd.f32 %v6046, %v5984
      %v6048 = vadd.f32 %v6047, %v5985
      %v6049 = vadd.f32 %v6048, %v5986
      %v6050 = vadd.f32 %v6049, %v5987
      %v6051 = vadd.f32 %v6050, %v5988
      %v6052 = vadd.f32 %v6051, %v5989
      %v6053 = vadd.f32 %v6052, %v5990
      %v6054 = vadd.f32 %v6053, %v5991
      %v6055 = vadd.f32 %v6054, %v5992
      %v6056 = vadd.f32 %v6055, %v5993
      %v6057 = vadd.f32 %v6056, %v5994
      %v6058 = vadd.f32 %v6057, %v5995
      %v6059 = vadd.f32 %v6058, %v5996
      %v6060 = vadd.f32 %v6059, %v5997
      %v6061 = vadd.f32 %v6060, %v5998
      %v6062 = vadd.f32 %v6061, %v5999
      %v6063 = vadd.f32 %v6062, %v6000
      %v6064 = vadd.f32 %v6063, %v6001
      %v6065 = vadd.f32 %v6064, %v6002
      %v6066 = vadd.f32 %v6065, %v6003
      %v6067 = vadd.f32 %v6066, %v6004
      %v6068 = vadd.f32 %v6067, %v6005
      %v6069 = vadd.f32 %v6068, %v6006
      %v6070 = vadd.f32 %v6069, %v6007
      %v6071 = vadd.f32 %v6070, %v6008
      %v6072 = vadd.f32 %v6071, %v6009
      %v6073 = vadd.f32 %v6072, %v6010
      %v6074 = vadd.f32 %v6073, %v6011
      %v6075 = vadd.f32 %v6074, %v6012
      %v6076 = vadd.f32 %v6075, %v6013
      %v6077 = vadd.f32 %v6076, %v6014
      %v6078 = vadd.f32 %v6077, %v6015
      %v6079 = vadd.f32 %v6078, %v6016
      %v6080 = vadd.f32 %v6079, %v6017
      %v6081 = vrot.slane %v6080, 4
      %v6082 = vadd.f32 %v6080, %v6081
      %v6083 = vrot.slane %v6082, 2
      %v6084 = vadd.f32 %v6082, %v6083
      %v6085 = vrot.slane %v6084, 1
      %v6086 = vadd.f32 %v6084, %v6085
      %v6087 = vmul.f32 %v6086, 0.00390625
      %v6088 = vadd.f32 %v6087, 1e-05
      %v6089 = vrsqrt.pop %v6088
      %v6090 = vmul.f32 %v5826, %v6089
      %v6091 = vmul.f32 %v5827, %v6089
      %v6092 = vmul.f32 %v5828, %v6089
      %v6093 = vmul.f32 %v5829, %v6089
      %v6094 = vmul.f32 %v5830, %v6089
      %v6095 = vmul.f32 %v5831, %v6089
      %v6096 = vmul.f32 %v5832, %v6089
      %v6097 = vmul.f32 %v5833, %v6089
      %v6098 = vmul.f32 %v5834, %v6089
      %v6099 = vmul.f32 %v5835, %v6089
      %v6100 = vmul.f32 %v5836, %v6089
      %v6101 = vmul.f32 %v5837, %v6089
      %v6102 = vmul.f32 %v5838, %v6089
      %v6103 = vmul.f32 %v5839, %v6089
      %v6104 = vmul.f32 %v5840, %v6089
      %v6105 = vmul.f32 %v5841, %v6089
      %v6106 = vmul.f32 %v5842, %v6089
      %v6107 = vmul.f32 %v5843, %v6089
      %v6108 = vmul.f32 %v5844, %v6089
      %v6109 = vmul.f32 %v5845, %v6089
      %v6110 = vmul.f32 %v5846, %v6089
      %v6111 = vmul.f32 %v5847, %v6089
      %v6112 = vmul.f32 %v5848, %v6089
      %v6113 = vmul.f32 %v5849, %v6089
      %v6114 = vmul.f32 %v5850, %v6089
      %v6115 = vmul.f32 %v5851, %v6089
      %v6116 = vmul.f32 %v5852, %v6089
      %v6117 = vmul.f32 %v5853, %v6089
      %v6118 = vmul.f32 %v5854, %v6089
      %v6119 = vmul.f32 %v5855, %v6089
      %v6120 = vmul.f32 %v5856, %v6089
      %v6121 = vmul.f32 %v5857, %v6089
      %v6122 = vmul.f32 %v5858, %v6089
      %v6123 = vmul.f32 %v5859, %v6089
      %v6124 = vmul.f32 %v5860, %v6089
      %v6125 = vmul.f32 %v5861, %v6089
      %v6126 = vmul.f32 %v5862, %v6089
      %v6127 = vmul.f32 %v5863, %v6089
      %v6128 = vmul.f32 %v5864, %v6089
      %v6129 = vmul.f32 %v5865, %v6089
      %v6130 = vmul.f32 %v5866, %v6089
      %v6131 = vmul.f32 %v5867, %v6089
      %v6132 = vmul.f32 %v5868, %v6089
      %v6133 = vmul.f32 %v5869, %v6089
      %v6134 = vmul.f32 %v5870, %v6089
      %v6135 = vmul.f32 %v5871, %v6089
      %v6136 = vmul.f32 %v5872, %v6089
      %v6137 = vmul.f32 %v5873, %v6089
      %v6138 = vmul.f32 %v5874, %v6089
      %v6139 = vmul.f32 %v5875, %v6089
      %v6140 = vmul.f32 %v5876, %v6089
      %v6141 = vmul.f32 %v5877, %v6089
      %v6142 = vmul.f32 %v5878, %v6089
      %v6143 = vmul.f32 %v5879, %v6089
      %v6144 = vmul.f32 %v5880, %v6089
      %v6145 = vmul.f32 %v5881, %v6089
      %v6146 = vmul.f32 %v5882, %v6089
      %v6147 = vmul.f32 %v5883, %v6089
      %v6148 = vmul.f32 %v5884, %v6089
      %v6149 = vmul.f32 %v5885, %v6089
      %v6150 = vmul.f32 %v5886, %v6089
      %v6151 = vmul.f32 %v5887, %v6089
      %v6152 = vmul.f32 %v5888, %v6089
      %v6153 = vmul.f32 %v5889, %v6089
      %v6155 = vlaneseq
      %v6156 = vshrl.u32 %v6155, 7
      %v6157 = vsub.s32 0, %v6156
      %v6158 = vrot.slane %v5691, %v6157
      %v6160 = vmul.f32 %v6090, %v6158
      %v6161 = vmul.f32 %v6091, %v6158
      %v6162 = vmul.f32 %v6092, %v6158
      %v6163 = vmul.f32 %v6093, %v6158
      %v6164 = vmul.f32 %v6094, %v6158
      %v6165 = vmul.f32 %v6095, %v6158
      %v6166 = vmul.f32 %v6096, %v6158
      %v6167 = vmul.f32 %v6097, %v6158
      %v6168 = vmul.f32 %v6098, %v6158
      %v6169 = vmul.f32 %v6099, %v6158
      %v6170 = vmul.f32 %v6100, %v6158
      %v6171 = vmul.f32 %v6101, %v6158
      %v6172 = vmul.f32 %v6102, %v6158
      %v6173 = vmul.f32 %v6103, %v6158
      %v6174 = vmul.f32 %v6104, %v6158
      %v6175 = vmul.f32 %v6105, %v6158
      %v6176 = vmul.f32 %v6106, %v6158
      %v6177 = vmul.f32 %v6107, %v6158
      %v6178 = vmul.f32 %v6108, %v6158
      %v6179 = vmul.f32 %v6109, %v6158
      %v6180 = vmul.f32 %v6110, %v6158
      %v6181 = vmul.f32 %v6111, %v6158
      %v6182 = vmul.f32 %v6112, %v6158
      %v6183 = vmul.f32 %v6113, %v6158
      %v6184 = vmul.f32 %v6114, %v6158
      %v6185 = vmul.f32 %v6115, %v6158
      %v6186 = vmul.f32 %v6116, %v6158
      %v6187 = vmul.f32 %v6117, %v6158
      %v6188 = vmul.f32 %v6118, %v6158
      %v6189 = vmul.f32 %v6119, %v6158
      %v6190 = vmul.f32 %v6120, %v6158
      %v6191 = vmul.f32 %v6121, %v6158
      %v6192 = vmul.f32 %v6122, %v6158
      %v6193 = vmul.f32 %v6123, %v6158
      %v6194 = vmul.f32 %v6124, %v6158
      %v6195 = vmul.f32 %v6125, %v6158
      %v6196 = vmul.f32 %v6126, %v6158
      %v6197 = vmul.f32 %v6127, %v6158
      %v6198 = vmul.f32 %v6128, %v6158
      %v6199 = vmul.f32 %v6129, %v6158
      %v6200 = vmul.f32 %v6130, %v6158
      %v6201 = vmul.f32 %v6131, %v6158
      %v6202 = vmul.f32 %v6132, %v6158
      %v6203 = vmul.f32 %v6133, %v6158
      %v6204 = vmul.f32 %v6134, %v6158
      %v6205 = vmul.f32 %v6135, %v6158
      %v6206 = vmul.f32 %v6136, %v6158
      %v6207 = vmul.f32 %v6137, %v6158
      %v6208 = vmul.f32 %v6138, %v6158
      %v6209 = vmul.f32 %v6139, %v6158
      %v6210 = vmul.f32 %v6140, %v6158
      %v6211 = vmul.f32 %v6141, %v6158
      %v6212 = vmul.f32 %v6142, %v6158
      %v6213 = vmul.f32 %v6143, %v6158
      %v6214 = vmul.f32 %v6144, %v6158
      %v6215 = vmul.f32 %v6145, %v6158
      %v6216 = vmul.f32 %v6146, %v6158
      %v6217 = vmul.f32 %v6147, %v6158
      %v6218 = vmul.f32 %v6148, %v6158
      %v6219 = vmul.f32 %v6149, %v6158
      %v6220 = vmul.f32 %v6150, %v6158
      %v6221 = vmul.f32 %v6151, %v6158
      %v6222 = vmul.f32 %v6152, %v6158
      %v6223 = vmul.f32 %v6153, %v6158
      %v6224 = vmax.f32 %v6160, 0.0
      %v6225 = vmax.f32 %v6161, 0.0
      %v6226 = vmax.f32 %v6162, 0.0
      %v6227 = vmax.f32 %v6163, 0.0
      %v6228 = vmax.f32 %v6164, 0.0
      %v6229 = vmax.f32 %v6165, 0.0
      %v6230 = vmax.f32 %v6166, 0.0
      %v6231 = vmax.f32 %v6167, 0.0
      %v6232 = vmax.f32 %v6168, 0.0
      %v6233 = vmax.f32 %v6169, 0.0
      %v6234 = vmax.f32 %v6170, 0.0
      %v6235 = vmax.f32 %v6171, 0.0
      %v6236 = vmax.f32 %v6172, 0.0
      %v6237 = vmax.f32 %v6173, 0.0
      %v6238 = vmax.f32 %v6174, 0.0
      %v6239 = vmax.f32 %v6175, 0.0
      %v6240 = vmax.f32 %v6176, 0.0
      %v6241 = vmax.f32 %v6177, 0.0
      %v6242 = vmax.f32 %v6178, 0.0
      %v6243 = vmax.f32 %v6179, 0.0
      %v6244 = vmax.f32 %v6180, 0.0
      %v6245 = vmax.f32 %v6181, 0.0
      %v6246 = vmax.f32 %v6182, 0.0
      %v6247 = vmax.f32 %v6183, 0.0
      %v6248 = vmax.f32 %v6184, 0.0
      %v6249 = vmax.f32 %v6185, 0.0
      %v6250 = vmax.f32 %v6186, 0.0
      %v6251 = vmax.f32 %v6187, 0.0
      %v6252 = vmax.f32 %v6188, 0.0
      %v6253 = vmax.f32 %v6189, 0.0
      %v6254 = vmax.f32 %v6190, 0.0
      %v6255 = vmax.f32 %v6191, 0.0
      %v6256 = vmax.f32 %v6192, 0.0
      %v6257 = vmax.f32 %v6193, 0.0
      %v6258 = vmax.f32 %v6194, 0.0
      %v6259 = vmax.f32 %v6195, 0.0
      %v6260 = vmax.f32 %v6196, 0.0
      %v6261 = vmax.f32 %v6197, 0.0
      %v6262 = vmax.f32 %v6198, 0.0
      %v6263 = vmax.f32 %v6199, 0.0
      %v6264 = vmax.f32 %v6200, 0.0
      %v6265 = vmax.f32 %v6201, 0.0
      %v6266 = vmax.f32 %v6202, 0.0
      %v6267 = vmax.f32 %v6203, 0.0
      %v6268 = vmax.f32 %v6204, 0.0
      %v6269 = vmax.f32 %v6205, 0.0
      %v6270 = vmax.f32 %v6206, 0.0
      %v6271 = vmax.f32 %v6207, 0.0
      %v6272 = vmax.f32 %v6208, 0.0
      %v6273 = vmax.f32 %v6209, 0.0
      %v6274 = vmax.f32 %v6210, 0.0
      %v6275 = vmax.f32 %v6211, 0.0
      %v6276 = vmax.f32 %v6212, 0.0
      %v6277 = vmax.f32 %v6213, 0.0
      %v6278 = vmax.f32 %v6214, 0.0
      %v6279 = vmax.f32 %v6215, 0.0
      %v6280 = vmax.f32 %v6216, 0.0
      %v6281 = vmax.f32 %v6217, 0.0
      %v6282 = vmax.f32 %v6218, 0.0
      %v6283 = vmax.f32 %v6219, 0.0
      %v6284 = vmax.f32 %v6220, 0.0
      %v6285 = vmax.f32 %v6221, 0.0
      %v6286 = vmax.f32 %v6222, 0.0
      %v6287 = vmax.f32 %v6223, 0.0
      %6288 = vst [vmem:[%s211] sm:$0xff] %v6224
      %6289 = vst [vmem:[%s211 + $0x8] sm:$0xff] %v6225
      %6290 = vst [vmem:[%s211 + $0x10] sm:$0xff] %v6226
      %6291 = vst [vmem:[%s211 + $0x18] sm:$0xff] %v6227
      %6292 = vst [vmem:[%s211 + $0x20] sm:$0xff] %v6228
      %6293 = vst [vmem:[%s211 + $0x28] sm:$0xff] %v6229
      %6294 = vst [vmem:[%s211 + $0x30] sm:$0xff] %v6230
      %6295 = vst [vmem:[%s211 + $0x38] sm:$0xff] %v6231
      %6296 = vst [vmem:[%s211 + $0x40] sm:$0xff] %v6232
      %6297 = vst [vmem:[%s211 + $0x48] sm:$0xff] %v6233
      %6298 = vst [vmem:[%s211 + $0x50] sm:$0xff] %v6234
      %6299 = vst [vmem:[%s211 + $0x58] sm:$0xff] %v6235
      %6300 = vst [vmem:[%s211 + $0x60] sm:$0xff] %v6236
      %6301 = vst [vmem:[%s211 + $0x68] sm:$0xff] %v6237
      %6302 = vst [vmem:[%s211 + $0x70] sm:$0xff] %v6238
      %6303 = vst [vmem:[%s211 + $0x78] sm:$0xff] %v6239
      %6304 = vst [vmem:[%s211 + $0x80] sm:$0xff] %v6240
      %6305 = vst [vmem:[%s211 + $0x88] sm:$0xff] %v6241
      %6306 = vst [vmem:[%s211 + $0x90] sm:$0xff] %v6242
      %6307 = vst [vmem:[%s211 + $0x98] sm:$0xff] %v6243
      %6308 = vst [vmem:[%s211 + $0xa0] sm:$0xff] %v6244
      %6309 = vst [vmem:[%s211 + $0xa8] sm:$0xff] %v6245
      %6310 = vst [vmem:[%s211 + $0xb0] sm:$0xff] %v6246
      %6311 = vst [vmem:[%s211 + $0xb8] sm:$0xff] %v6247
      %6312 = vst [vmem:[%s211 + $0xc0] sm:$0xff] %v6248
      %6313 = vst [vmem:[%s211 + $0xc8] sm:$0xff] %v6249
      %6314 = vst [vmem:[%s211 + $0xd0] sm:$0xff] %v6250
      %6315 = vst [vmem:[%s211 + $0xd8] sm:$0xff] %v6251
      %6316 = vst [vmem:[%s211 + $0xe0] sm:$0xff] %v6252
      %6317 = vst [vmem:[%s211 + $0xe8] sm:$0xff] %v6253
      %6318 = vst [vmem:[%s211 + $0xf0] sm:$0xff] %v6254
      %6319 = vst [vmem:[%s211 + $0xf8] sm:$0xff] %v6255
      %6320 = vst [vmem:[%s211 + $0x100] sm:$0xff] %v6256
      %6321 = vst [vmem:[%s211 + $0x108] sm:$0xff] %v6257
      %6322 = vst [vmem:[%s211 + $0x110] sm:$0xff] %v6258
      %6323 = vst [vmem:[%s211 + $0x118] sm:$0xff] %v6259
      %6324 = vst [vmem:[%s211 + $0x120] sm:$0xff] %v6260
      %6325 = vst [vmem:[%s211 + $0x128] sm:$0xff] %v6261
      %6326 = vst [vmem:[%s211 + $0x130] sm:$0xff] %v6262
      %6327 = vst [vmem:[%s211 + $0x138] sm:$0xff] %v6263
      %6328 = vst [vmem:[%s211 + $0x140] sm:$0xff] %v6264
      %6329 = vst [vmem:[%s211 + $0x148] sm:$0xff] %v6265
      %6330 = vst [vmem:[%s211 + $0x150] sm:$0xff] %v6266
      %6331 = vst [vmem:[%s211 + $0x158] sm:$0xff] %v6267
      %6332 = vst [vmem:[%s211 + $0x160] sm:$0xff] %v6268
      %6333 = vst [vmem:[%s211 + $0x168] sm:$0xff] %v6269
      %6334 = vst [vmem:[%s211 + $0x170] sm:$0xff] %v6270
      %6335 = vst [vmem:[%s211 + $0x178] sm:$0xff] %v6271
      %6336 = vst [vmem:[%s211 + $0x180] sm:$0xff] %v6272
      %6337 = vst [vmem:[%s211 + $0x188] sm:$0xff] %v6273
      %6338 = vst [vmem:[%s211 + $0x190] sm:$0xff] %v6274
      %6339 = vst [vmem:[%s211 + $0x198] sm:$0xff] %v6275
      %6340 = vst [vmem:[%s211 + $0x1a0] sm:$0xff] %v6276
      %6341 = vst [vmem:[%s211 + $0x1a8] sm:$0xff] %v6277
      %6342 = vst [vmem:[%s211 + $0x1b0] sm:$0xff] %v6278
      %6343 = vst [vmem:[%s211 + $0x1b8] sm:$0xff] %v6279
      %6344 = vst [vmem:[%s211 + $0x1c0] sm:$0xff] %v6280
      %6345 = vst [vmem:[%s211 + $0x1c8] sm:$0xff] %v6281
      %6346 = vst [vmem:[%s211 + $0x1d0] sm:$0xff] %v6282
      %6347 = vst [vmem:[%s211 + $0x1d8] sm:$0xff] %v6283
      %6348 = vst [vmem:[%s211 + $0x1e0] sm:$0xff] %v6284
      %6349 = vst [vmem:[%s211 + $0x1e8] sm:$0xff] %v6285
      %6350 = vst [vmem:[%s211 + $0x1f0] sm:$0xff] %v6286
      %6351 = vst [vmem:[%s211 + $0x1f8] sm:$0xff] %v6287
      %p6352 = scmp.lt.s32.totalorder %s15, 1
      %s6353 = scalar_select %p6352, %s15, 1
      %s6354 = smul.addr %s6353, 64
      %s6355 = smul.addr %s6354, 8
      %s6356 = scalar_lea.vmem %s4, %s6355
      // Predicated region
      $region37: #{cresbloc_forward.1} parent=35 // pred_check
        %p6357 = pneg %p127
      $region38: #{cresbloc_forward.1} parent=35 // pred_check_branch
        %6359 = sbr.rel (%p6357) target = $region40
      $region39: #{cresbloc_forward.1} parent=35 // pred_region
        _
      $region40: #{cresbloc_forward.1} parent=35 // pred_fallthru
        _
    $region36: #{cresbloc_forward.1} parent=5 // pred_fallthru
      _
    %p6360 = scmp.le.s32.totalorder 2, %s10
    // Predicated region
    $region41: #{cresbloc_forward.1} parent=5 // pred_check
      %p6361 = pneg %p6360
    $region42: #{cresbloc_forward.1} parent=5 // pred_check_branch
      %6363 = sbr.rel (%p6361) target = $region44
    $region43: #{cresbloc_forward.1} parent=5 // pred_region
      %s6364 = ssub.s32 %s10, 2
      // Predicated region
      $region45: #{cresbloc_forward.1} parent=43 // pred_check
        %p6365 = pneg %p133
      $region46: #{cresbloc_forward.1} parent=43 // pred_check_branch
        %6367 = sbr.rel (%p6365) target = $region48
      $region47: #{cresbloc_forward.1} parent=43 // pred_region
        %p6368 = scmp.lt.s32.totalorder %s16, 1
        %s6369 = scalar_select %p6368, %s16, 1
        %s6370 = smul.addr %s6369, 64
        %s6371 = smul.addr %s6370, 8
        %s6372 = scalar_lea.vmem %s4, %s6371
      $region48: #{cresbloc_forward.1} parent=43 // pred_fallthru
        _
    $region44: #{cresbloc_forward.1} parent=5 // pred_fallthru
      _
  $region6: #{cresbloc_forward.1} parent=0 // loop_footer
    %s14 = sadd.s32 1, %s10
  $region7: #{cresbloc_forward.1} parent=0 // loop_footer_branch
    %9 = sbr.rel target = $region3
  $region8: #{cresbloc_forward.1} parent=0 // loop_exit
    _

</llo_original>
